<compile_context>
chip_gen: v7x
topology: tpu7x:2x2x1
jax: 0.10.0
libtpu: 0.0.40
codegen_flags: <defaults>
</compile_context>

<pallas_src>
import jax
import jax.numpy as jnp
from jax.experimental import pallas as pl
from jax.experimental.pallas import tpu as pltpu

LOG2PI = 1.8378770664093453  # ln(2*pi)


def _softplus(x):
    # numerically stable softplus
    return jnp.maximum(x, 0.0) + jnp.log1p(jnp.exp(-jnp.abs(x)))


def vae_kernel(x_ref, adj_ref, eps_ref,
               w1_ref, b1_ref, wh_ref, bh_ref,
               wd1_ref, bd1_ref, wd2_ref, bd2_ref,
               re_ref, kl_ref):
    Bb, N, F = x_ref.shape
    M = eps_ref.shape[-1]

    X = x_ref[...]        # (Bb, N, F)
    A = adj_ref[...]      # (Bb, N, N)  raw adjacency (also the Bernoulli target)
    eps = eps_ref[...]    # (Bb, M)

    # ---------------- encoder: GCN layer + mean pool ----------------
    # (Bb*N, F) @ (F, Hd): one dense MXU matmul for the whole batch.
    XW = jnp.dot(X.reshape(Bb * N, F), w1_ref[...],
                 preferred_element_type=jnp.float32)
    XW = XW.reshape(Bb, N, -1)                                        # (Bb, N, Hd)
    # (A + I) @ XW == A @ XW + XW  -> no identity input, no (Bb,N,N) add.
    AXW = jnp.einsum('bnk,bkh->bnh', A, XW,
                     preferred_element_type=jnp.float32)
    H = jnp.maximum(AXW + XW + b1_ref[...], 0.0)                      # (Bb, N, Hd)
    g = jnp.mean(H, axis=1)                                           # (Bb, Hd)

    # fused (mu | log_std) head: one (Bb, Hd) @ (Hd, 2M) matmul
    heads = jnp.dot(g, wh_ref[...], preferred_element_type=jnp.float32) + bh_ref[...]
    mu = heads[:, :M]                                                 # (Bb, M)
    log_std = heads[:, M:]                                            # (Bb, M)
    std = jnp.exp(log_std)

    # ---------------- rsample + KL (per graph) ----------------
    z = mu + std * eps                                                # (Bb, M)
    # KL = q.log_prob(z) - prior.log_prob(z)
    #    = sum(-0.5*eps^2 - log_std) - sum(-0.5*z^2)   (0.5*ln(2pi) cancels)
    kl = jnp.sum(0.5 * (z * z - eps * eps) - log_std, axis=-1)        # (Bb,)

    # ---------------- decoder + Bernoulli log-prob ----------------
    hd = jnp.maximum(
        jnp.dot(z, wd1_ref[...], preferred_element_type=jnp.float32) + bd1_ref[...], 0.0)
    logits = jnp.dot(hd, wd2_ref[...],
                     preferred_element_type=jnp.float32) + bd2_ref[...]  # (Bb, N*N)

    # Bernoulli(logits).log_prob(a) = a*logits - softplus(logits), summed over
    # all N*N entries.  Reuse the already-resident adjacency (flatten in-kernel
    # instead of shipping a duplicate flattened copy over HBM).
    a_flat = A.reshape(Bb, N * N)
    lp = a_flat * logits - _softplus(logits)
    re = jnp.sum(lp, axis=-1)                                            # (Bb,)

    # lane-dense stores: one (1, 1, Bb) block per grid step
    re_ref[...] = re.reshape(1, 1, Bb)
    kl_ref[...] = kl.reshape(1, 1, Bb)


def naive_vae_neg_elbo(X, Adj, node_masks, eps, params, *, num_blocks=None):
    """Returns -ELBO, matching NaiveVAE.forward semantics.

    node_masks is accepted but unused, exactly as in the PyTorch elbo()."""
    del node_masks
    B, N, F = X.shape
    eps = eps.reshape(B, -1)
    M = eps.shape[-1]

    # Two parallel grid steps so both v7x TensorCores get work; ~free on
    # single-TC v5e/v6e (only one extra ~0.35us step).
    if num_blocks is None:
        num_blocks = 2 if (B % 2 == 0 and B >= 2) else 1
    assert B % num_blocks == 0
    Bb = B // num_blocks

    (w1, b1, wmu, bmu, wls, bls, wd1, bd1, wd2, bd2) = params
    w_heads = jnp.concatenate([wmu, wls], axis=-1)      # (Hd, 2M) fused heads
    b_heads = jnp.concatenate([bmu, bls], axis=-1)      # (1, 2M)

    kparams = (w1, b1, w_heads, b_heads, wd1, bd1, wd2, bd2)

    in_specs = [
        pl.BlockSpec((Bb, N, F), lambda b: (b, 0, 0)),   # X
        pl.BlockSpec((Bb, N, N), lambda b: (b, 0, 0)),   # Adj (encoder + target)
        pl.BlockSpec((Bb, M), lambda b: (b, 0)),         # eps
    ] + [pl.BlockSpec(p.shape, lambda b, _nd=p.ndim: (0,) * _nd) for p in kparams]

    out_specs = [pl.BlockSpec((1, 1, Bb), lambda b: (b, 0, 0)),
                 pl.BlockSpec((1, 1, Bb), lambda b: (b, 0, 0))]
    out_shape = [jax.ShapeDtypeStruct((num_blocks, 1, Bb), jnp.float32),
                 jax.ShapeDtypeStruct((num_blocks, 1, Bb), jnp.float32)]

    re_b, kl_b = pl.pallas_call(
        vae_kernel,
        grid=(num_blocks,),
        in_specs=in_specs,
        out_specs=out_specs,
        out_shape=out_shape,
        compiler_params=pltpu.CompilerParams(
            dimension_semantics=("parallel",)),
    )(X, Adj, eps, *kparams)

    re_b = re_b.reshape(B)   # (B,)
    kl_b = kl_b.reshape(B)   # (B,)

    # RE = mean of top int(B*0.05) reconstruction log-probs (torch: sort desc).
    k = int(B * 0.05)        # B must be >= 20 for this to be non-empty (as in torch)
    top_re, _ = jax.lax.top_k(re_b, k)
    RE = jnp.mean(top_re)

    elbo = jnp.mean(RE - kl_b)
    return -elbo


if __name__ == "__main__":
    B, N, F, Hd, M = 32, 16, 8, 32, 8

    key = jax.random.PRNGKey(0)
    k_x, k_adj, k_eps, *wkeys = jax.random.split(key, 3 + 5)

    X = jax.random.normal(k_x, (B, N, F), jnp.float32)

    # symmetric 0/1 adjacency with zero diagonal
    upper = (jax.random.uniform(k_adj, (B, N, N)) > 0.7).astype(jnp.float32)
    upper = jnp.triu(upper, k=1)
    Adj = upper + jnp.swapaxes(upper, 1, 2)

    node_masks = jnp.ones((B, N, N), jnp.float32)  # unused in elbo (as in PyTorch)

    # reparameterization noise (deterministic stand-in for q.rsample())
    eps = jax.random.normal(k_eps, (B, M), jnp.float32)

    def init(k, shape):
        return (jax.random.normal(k, shape, jnp.float32) * 0.1).astype(jnp.float32)

    params = (
        init(wkeys[0], (F, Hd)),      jnp.zeros((1, Hd), jnp.float32),     # encoder GCN
        init(wkeys[1], (Hd, M)),      jnp.zeros((1, M), jnp.float32),      # mu head
        init(wkeys[2], (Hd, M)),      jnp.zeros((1, M), jnp.float32),      # log_std head
        init(wkeys[3], (M, Hd)),      jnp.zeros((1, Hd), jnp.float32),     # decoder layer 1
        init(wkeys[4], (Hd, N * N)),  jnp.zeros((1, N * N), jnp.float32),  # decoder logits
    )

    loss = jax.jit(naive_vae_neg_elbo)(X, Adj, node_masks, eps, params)
    jax.block_until_ready(loss)
    assert loss.shape == () and bool(jnp.isfinite(loss))
    print("KERNEL_OK")
</pallas_src>

<mosaic_0001>
module attributes {stable_mosaic.version = 11 : i64} {
  func.func @vae_kernel(%arg0: i32, %arg1: memref<16x16x8xf32, #tpu.memory_space<vmem>>, %arg2: memref<16x16x16xf32, #tpu.memory_space<vmem>>, %arg3: memref<16x8xf32, #tpu.memory_space<vmem>>, %arg4: memref<8x32xf32, #tpu.memory_space<vmem>>, %arg5: memref<1x32xf32, #tpu.memory_space<vmem>>, %arg6: memref<32x16xf32, #tpu.memory_space<vmem>>, %arg7: memref<1x16xf32, #tpu.memory_space<vmem>>, %arg8: memref<8x32xf32, #tpu.memory_space<vmem>>, %arg9: memref<1x32xf32, #tpu.memory_space<vmem>>, %arg10: memref<32x256xf32, #tpu.memory_space<vmem>>, %arg11: memref<1x256xf32, #tpu.memory_space<vmem>>, %arg12: memref<1x1x16xf32, #tpu.memory_space<vmem>>, %arg13: memref<1x1x16xf32, #tpu.memory_space<vmem>>) attributes {dimension_semantics = [#tpu.dimension_semantics<parallel>], iteration_bounds = array<i64: 2>, scalar_prefetch = 0 : i64, scratch_operands = 0 : i64, tpu.core_type = #tpu.core_type<tc>, window_params = [{transform_indices = @transform_0, window_bounds = array<i64: 16, 16, 8>}, {transform_indices = @transform_1, window_bounds = array<i64: 16, 16, 16>}, {transform_indices = @transform_2, window_bounds = array<i64: 16, 8>}, {pipeline_mode = #tpu.pipeline_mode<synchronous>, transform_indices = @transform_3, window_bounds = array<i64: 8, 32>}, {pipeline_mode = #tpu.pipeline_mode<synchronous>, transform_indices = @transform_4, window_bounds = array<i64: 1, 32>}, {pipeline_mode = #tpu.pipeline_mode<synchronous>, transform_indices = @transform_5, window_bounds = array<i64: 32, 16>}, {pipeline_mode = #tpu.pipeline_mode<synchronous>, transform_indices = @transform_6, window_bounds = array<i64: 1, 16>}, {pipeline_mode = #tpu.pipeline_mode<synchronous>, transform_indices = @transform_7, window_bounds = array<i64: 8, 32>}, {pipeline_mode = #tpu.pipeline_mode<synchronous>, transform_indices = @transform_8, window_bounds = array<i64: 1, 32>}, {pipeline_mode = #tpu.pipeline_mode<synchronous>, transform_indices = @transform_9, window_bounds = array<i64: 32, 256>}, {pipeline_mode = #tpu.pipeline_mode<synchronous>, transform_indices = @transform_10, window_bounds = array<i64: 1, 256>}, {transform_indices = @transform_11, window_bounds = array<i64: 1, 1, 16>}, {transform_indices = @transform_12, window_bounds = array<i64: 1, 1, 16>}]} {
    %c0 = arith.constant 0 : index
    %c0_0 = arith.constant 0 : index
    %c0_1 = arith.constant 0 : index
    %0 = vector.load %arg1[%c0, %c0_0, %c0_1] : memref<16x16x8xf32, #tpu.memory_space<vmem>>, vector<16x16x8xf32>
    %c0_2 = arith.constant 0 : index
    %c0_3 = arith.constant 0 : index
    %c0_4 = arith.constant 0 : index
    %1 = vector.load %arg2[%c0_2, %c0_3, %c0_4] : memref<16x16x16xf32, #tpu.memory_space<vmem>>, vector<16x16x16xf32>
    %c0_5 = arith.constant 0 : index
    %c0_6 = arith.constant 0 : index
    %2 = vector.load %arg3[%c0_5, %c0_6] : memref<16x8xf32, #tpu.memory_space<vmem>>, vector<16x8xf32>
    %3 = vector.shape_cast %0 : vector<16x16x8xf32> to vector<256x8xf32>
    %c0_7 = arith.constant 0 : index
    %c0_8 = arith.constant 0 : index
    %4 = vector.load %arg4[%c0_7, %c0_8] : memref<8x32xf32, #tpu.memory_space<vmem>>, vector<8x32xf32>
    %cst = arith.constant dense<0.000000e+00> : vector<256x32xf32>
    %5 = tpu.matmul %3, %4, %cst {dimension_numbers = #tpu.dot_dimension_numbers<[1], [0], [0], [1], [0, 0, 1, 1], [], []>} : vector<256x8xf32>, vector<8x32xf32>, vector<256x32xf32> -> vector<256x32xf32>
    %6 = vector.shape_cast %5 : vector<256x32xf32> to vector<16x16x32xf32>
    "tpu.trace_start"() <{level = 10 : i32, message = "bnk,bkh->bnh"}> : () -> ()
    %cst_9 = arith.constant dense<0.000000e+00> : vector<16x16x32xf32>
    %7 = tpu.matmul %1, %6, %cst_9 {dimension_numbers = #tpu.dot_dimension_numbers<[2], [1], [1], [2], [0, 0, 0, 1, 1, 2], [0], [0]>} : vector<16x16x16xf32>, vector<16x16x32xf32>, vector<16x16x32xf32> -> vector<16x16x32xf32>
    "tpu.trace_stop"() : () -> ()
    %8 = arith.addf %7, %6 : vector<16x16x32xf32>
    %c0_10 = arith.constant 0 : index
    %c0_11 = arith.constant 0 : index
    %9 = vector.load %arg5[%c0_10, %c0_11] : memref<1x32xf32, #tpu.memory_space<vmem>>, vector<1x32xf32>
    %10 = vector.shape_cast %9 : vector<1x32xf32> to vector<1x1x32xf32>
    %11 = vector.broadcast %10 : vector<1x1x32xf32> to vector<16x16x32xf32>
    %12 = arith.addf %8, %11 : vector<16x16x32xf32>
    %cst_12 = arith.constant 0.000000e+00 : f32
    %13 = vector.broadcast %cst_12 : f32 to vector<16x16x32xf32>
    %14 = arith.maximumf %12, %13 : vector<16x16x32xf32>
    %cst_13 = arith.constant dense<0.000000e+00> : vector<16x32xf32>
    %15 = vector.multi_reduction <add>, %14, %cst_13 [1] : vector<16x16x32xf32> to vector<16x32xf32>
    %cst_14 = arith.constant 1.600000e+01 : f32
    %16 = vector.broadcast %cst_14 : f32 to vector<16x32xf32>
    %17 = arith.divf %15, %16 : vector<16x32xf32>
    %c0_15 = arith.constant 0 : index
    %c0_16 = arith.constant 0 : index
    %18 = vector.load %arg6[%c0_15, %c0_16] : memref<32x16xf32, #tpu.memory_space<vmem>>, vector<32x16xf32>
    %cst_17 = arith.constant dense<0.000000e+00> : vector<16x16xf32>
    %19 = tpu.matmul %17, %18, %cst_17 {dimension_numbers = #tpu.dot_dimension_numbers<[1], [0], [0], [1], [0, 0, 1, 1], [], []>} : vector<16x32xf32>, vector<32x16xf32>, vector<16x16xf32> -> vector<16x16xf32>
    %c0_18 = arith.constant 0 : index
    %c0_19 = arith.constant 0 : index
    %20 = vector.load %arg7[%c0_18, %c0_19] : memref<1x16xf32, #tpu.memory_space<vmem>>, vector<1x16xf32>
    %21 = vector.broadcast %20 : vector<1x16xf32> to vector<16x16xf32>
    %22 = arith.addf %19, %21 : vector<16x16xf32>
    %23 = vector.extract_strided_slice %22 {offsets = [0, 0], sizes = [16, 8], strides = [1, 1]} : vector<16x16xf32> to vector<16x8xf32>
    %24 = vector.extract_strided_slice %22 {offsets = [0, 8], sizes = [16, 8], strides = [1, 1]} : vector<16x16xf32> to vector<16x8xf32>
    %25 = math.exp %24 : vector<16x8xf32>
    %26 = arith.mulf %25, %2 : vector<16x8xf32>
    %27 = arith.addf %23, %26 : vector<16x8xf32>
    %28 = arith.mulf %27, %27 : vector<16x8xf32>
    %29 = arith.mulf %2, %2 : vector<16x8xf32>
    %30 = arith.subf %28, %29 : vector<16x8xf32>
    %cst_20 = arith.constant 5.000000e-01 : f32
    %31 = vector.broadcast %cst_20 : f32 to vector<16x8xf32>
    %32 = arith.mulf %31, %30 : vector<16x8xf32>
    %33 = arith.subf %32, %24 : vector<16x8xf32>
    %cst_21 = arith.constant dense<0.000000e+00> : vector<16xf32>
    %34 = vector.multi_reduction <add>, %33, %cst_21 [1] : vector<16x8xf32> to vector<16xf32>
    %c0_22 = arith.constant 0 : index
    %c0_23 = arith.constant 0 : index
    %35 = vector.load %arg8[%c0_22, %c0_23] : memref<8x32xf32, #tpu.memory_space<vmem>>, vector<8x32xf32>
    %cst_24 = arith.constant dense<0.000000e+00> : vector<16x32xf32>
    %36 = tpu.matmul %27, %35, %cst_24 {dimension_numbers = #tpu.dot_dimension_numbers<[1], [0], [0], [1], [0, 0, 1, 1], [], []>} : vector<16x8xf32>, vector<8x32xf32>, vector<16x32xf32> -> vector<16x32xf32>
    %c0_25 = arith.constant 0 : index
    %c0_26 = arith.constant 0 : index
    %37 = vector.load %arg9[%c0_25, %c0_26] : memref<1x32xf32, #tpu.memory_space<vmem>>, vector<1x32xf32>
    %38 = vector.broadcast %37 : vector<1x32xf32> to vector<16x32xf32>
    %39 = arith.addf %36, %38 : vector<16x32xf32>
    %cst_27 = arith.constant 0.000000e+00 : f32
    %40 = vector.broadcast %cst_27 : f32 to vector<16x32xf32>
    %41 = arith.maximumf %39, %40 : vector<16x32xf32>
    %c0_28 = arith.constant 0 : index
    %c0_29 = arith.constant 0 : index
    %42 = vector.load %arg10[%c0_28, %c0_29] : memref<32x256xf32, #tpu.memory_space<vmem>>, vector<32x256xf32>
    %cst_30 = arith.constant dense<0.000000e+00> : vector<16x256xf32>
    %43 = tpu.matmul %41, %42, %cst_30 {dimension_numbers = #tpu.dot_dimension_numbers<[1], [0], [0], [1], [0, 0, 1, 1], [], []>} : vector<16x32xf32>, vector<32x256xf32>, vector<16x256xf32> -> vector<16x256xf32>
    %c0_31 = arith.constant 0 : index
    %c0_32 = arith.constant 0 : index
    %44 = vector.load %arg11[%c0_31, %c0_32] : memref<1x256xf32, #tpu.memory_space<vmem>>, vector<1x256xf32>
    %45 = vector.broadcast %44 : vector<1x256xf32> to vector<16x256xf32>
    %46 = arith.addf %43, %45 : vector<16x256xf32>
    %47 = vector.shape_cast %1 : vector<16x16x16xf32> to vector<16x256xf32>
    %48 = arith.mulf %47, %46 : vector<16x256xf32>
    %cst_33 = arith.constant 0.000000e+00 : f32
    %49 = vector.broadcast %cst_33 : f32 to vector<16x256xf32>
    %50 = arith.maximumf %46, %49 : vector<16x256xf32>
    %51 = math.absf %46 : vector<16x256xf32>
    %cst_34 = arith.constant 0.000000e+00 : f32
    %52 = vector.broadcast %cst_34 : f32 to vector<16x256xf32>
    %53 = arith.subf %52, %51 : vector<16x256xf32>
    %54 = math.exp %53 : vector<16x256xf32>
    %55 = math.log1p %54 : vector<16x256xf32>
    %56 = arith.addf %50, %55 : vector<16x256xf32>
    %57 = arith.subf %48, %56 : vector<16x256xf32>
    %cst_35 = arith.constant dense<0.000000e+00> : vector<16xf32>
    %58 = vector.multi_reduction <add>, %57, %cst_35 [1] : vector<16x256xf32> to vector<16xf32>
    %59 = vector.shape_cast %58 : vector<16xf32> to vector<1x1x16xf32>
    %c0_36 = arith.constant 0 : index
    %c0_37 = arith.constant 0 : index
    %c0_38 = arith.constant 0 : index
    %60 = vector.load %arg12[%c0_36, %c0_37, %c0_38] : memref<1x1x16xf32, #tpu.memory_space<vmem>>, vector<1x1x16xf32>
    tpu.vector_store %arg12[%c0_36, %c0_37, %c0_38], %59 {strides = array<i32>} : memref<1x1x16xf32, #tpu.memory_space<vmem>>, vector<1x1x16xf32>,
    %61 = vector.shape_cast %34 : vector<16xf32> to vector<1x1x16xf32>
    %c0_39 = arith.constant 0 : index
    %c0_40 = arith.constant 0 : index
    %c0_41 = arith.constant 0 : index
    %62 = vector.load %arg13[%c0_39, %c0_40, %c0_41] : memref<1x1x16xf32, #tpu.memory_space<vmem>>, vector<1x1x16xf32>
    tpu.vector_store %arg13[%c0_39, %c0_40, %c0_41], %61 {strides = array<i32>} : memref<1x1x16xf32, #tpu.memory_space<vmem>>, vector<1x1x16xf32>,
    return
  }
  func.func @transform_0(%arg0: i32) -> (i32, i32, i32) {
    %c0_i32 = arith.constant 0 : i32
    %c0_i32_0 = arith.constant 0 : i32
    %c0_i32_1 = arith.constant 0 : i32
    return %arg0, %c0_i32, %c0_i32_0 : i32, i32, i32
  }
  func.func @transform_1(%arg0: i32) -> (i32, i32, i32) {
    %c0_i32 = arith.constant 0 : i32
    %c0_i32_0 = arith.constant 0 : i32
    %c0_i32_1 = arith.constant 0 : i32
    return %arg0, %c0_i32, %c0_i32_0 : i32, i32, i32
  }
  func.func @transform_2(%arg0: i32) -> (i32, i32) {
    %c0_i32 = arith.constant 0 : i32
    %c0_i32_0 = arith.constant 0 : i32
    return %arg0, %c0_i32 : i32, i32
  }
  func.func @transform_3(%arg0: i32) -> (i32, i32) {
    %c0_i32 = arith.constant 0 : i32
    %c0_i32_0 = arith.constant 0 : i32
    %c0_i32_1 = arith.constant 0 : i32
    return %c0_i32, %c0_i32_0 : i32, i32
  }
  func.func @transform_4(%arg0: i32) -> (i32, i32) {
    %c0_i32 = arith.constant 0 : i32
    %c0_i32_0 = arith.constant 0 : i32
    %c0_i32_1 = arith.constant 0 : i32
    return %c0_i32, %c0_i32_0 : i32, i32
  }
  func.func @transform_5(%arg0: i32) -> (i32, i32) {
    %c0_i32 = arith.constant 0 : i32
    %c0_i32_0 = arith.constant 0 : i32
    %c0_i32_1 = arith.constant 0 : i32
    return %c0_i32, %c0_i32_0 : i32, i32
  }
  func.func @transform_6(%arg0: i32) -> (i32, i32) {
    %c0_i32 = arith.constant 0 : i32
    %c0_i32_0 = arith.constant 0 : i32
    %c0_i32_1 = arith.constant 0 : i32
    return %c0_i32, %c0_i32_0 : i32, i32
  }
  func.func @transform_7(%arg0: i32) -> (i32, i32) {
    %c0_i32 = arith.constant 0 : i32
    %c0_i32_0 = arith.constant 0 : i32
    %c0_i32_1 = arith.constant 0 : i32
    return %c0_i32, %c0_i32_0 : i32, i32
  }
  func.func @transform_8(%arg0: i32) -> (i32, i32) {
    %c0_i32 = arith.constant 0 : i32
    %c0_i32_0 = arith.constant 0 : i32
    %c0_i32_1 = arith.constant 0 : i32
    return %c0_i32, %c0_i32_0 : i32, i32
  }
  func.func @transform_9(%arg0: i32) -> (i32, i32) {
    %c0_i32 = arith.constant 0 : i32
    %c0_i32_0 = arith.constant 0 : i32
    %c0_i32_1 = arith.constant 0 : i32
    return %c0_i32, %c0_i32_0 : i32, i32
  }
  func.func @transform_10(%arg0: i32) -> (i32, i32) {
    %c0_i32 = arith.constant 0 : i32
    %c0_i32_0 = arith.constant 0 : i32
    %c0_i32_1 = arith.constant 0 : i32
    return %c0_i32, %c0_i32_0 : i32, i32
  }
  func.func @transform_11(%arg0: i32) -> (i32, i32, i32) {
    %c0_i32 = arith.constant 0 : i32
    %c0_i32_0 = arith.constant 0 : i32
    %c0_i32_1 = arith.constant 0 : i32
    return %arg0, %c0_i32, %c0_i32_0 : i32, i32, i32
  }
  func.func @transform_12(%arg0: i32) -> (i32, i32, i32) {
    %c0_i32 = arith.constant 0 : i32
    %c0_i32_0 = arith.constant 0 : i32
    %c0_i32_1 = arith.constant 0 : i32
    return %arg0, %c0_i32, %c0_i32_0 : i32, i32, i32
  }
}

</mosaic_0001>

<llo_original>
// kernel: naive_vae_neg_elbo.1
$region0: #{naive_vae_neg_elbo.1}
  #allocation0 [shape = 'u32[]', space=smem, size = 0x4, offset = 0x4, fixed_abs, tag = 'smem constant byte address 0x4 - core index']
  #allocation1 [shape = 'u32[144,128]{1,0:T(1,128)}', space=vmem, size = 0x12000, scoped, tag = 'internal scratch']
  %s0 = inlined_call_operand.vmem [shape: f32[32,16,8], index: 0, kind: input, shape index: {}]
  %s1 = inlined_call_operand.vmem [shape: f32[32,16,16], index: 1, kind: input, shape index: {}]
  %s2 = inlined_call_operand.vmem [shape: f32[32,8], index: 2, kind: input, shape index: {}]
  %s3 = inlined_call_operand.vmem [shape: f32[8,32], index: 3, kind: input, shape index: {}]
  %s4 = inlined_call_operand.vmem [shape: f32[1,32], index: 4, kind: input, shape index: {}]
  %s5 = inlined_call_operand.vmem [shape: f32[32,16], index: 5, kind: input, shape index: {}]
  %s6 = inlined_call_operand.vmem [shape: f32[1,16], index: 6, kind: input, shape index: {}]
  %s7 = inlined_call_operand.vmem [shape: f32[8,32], index: 7, kind: input, shape index: {}]
  %s8 = inlined_call_operand.vmem [shape: f32[1,32], index: 8, kind: input, shape index: {}]
  %s9 = inlined_call_operand.vmem [shape: f32[32,256], index: 9, kind: input, shape index: {}]
  %s10 = inlined_call_operand.vmem [shape: f32[1,256], index: 10, kind: input, shape index: {}]
  %s11 = inlined_call_operand.vmem [shape: f32[2,1,16], index: 11, kind: output, shape index: {0}]
  %s12 = inlined_call_operand.vmem [shape: f32[2,1,16], index: 12, kind: output, shape index: {1}]
  %13 = xla_tuple %s11, %s12
  %s14 = sld [smem:[#allocation0]]
  $region85: #{naive_vae_neg_elbo.1} parent=0
    _
  %s16 = ssub.s32 1, %s14
  %s17 = scalar_select 0, %s16, %s14
  loop: start=0, step=1, limit=4
  $region2: #{naive_vae_neg_elbo.1} parent=0 // loop_pre_header
    _
  $region3: #{naive_vae_neg_elbo.1} parent=0 // loop_header
    %s19 = sphi 0, %s23
    %p20 = scmp.ge.s32.totalorder %s19, 4
    %s29 = sphi 0, %s31
    %s32 = sphi 0, %s29
    %s33 = sphi 0, %s32
    %s49 = sphi 0, %s33
    %s55 = sphi 0, %s57
    %s58 = sphi 0, %s55
    %s59 = sphi 0, %s58
    %s75 = sphi 0, %s59
    %s81 = sphi 0, %s83
    %s84 = sphi 0, %s81
    %s85 = sphi 0, %s84
    %s101 = sphi 0, %s85
    %s105 = sphi 0, %s105
    %s107 = sphi 0, %s105
    %s108 = sphi 0, %s107
    %s122 = sphi 0, %s108
    %s126 = sphi 0, %s126
    %s128 = sphi 0, %s126
    %s129 = sphi 0, %s128
    %s143 = sphi 0, %s129
    %s147 = sphi 0, %s147
    %s149 = sphi 0, %s147
    %s150 = sphi 0, %s149
    %s164 = sphi 0, %s150
    %s168 = sphi 0, %s168
    %s170 = sphi 0, %s168
    %s171 = sphi 0, %s170
    %s185 = sphi 0, %s171
    %s189 = sphi 0, %s189
    %s191 = sphi 0, %s189
    %s192 = sphi 0, %s191
    %s206 = sphi 0, %s192
    %s210 = sphi 0, %s210
    %s212 = sphi 0, %s210
    %s213 = sphi 0, %s212
    %s227 = sphi 0, %s213
    %s231 = sphi 0, %s231
    %s233 = sphi 0, %s231
    %s234 = sphi 0, %s233
    %s248 = sphi 0, %s234
    %s252 = sphi 0, %s252
    %s254 = sphi 0, %s252
    %s255 = sphi 0, %s254
    %s269 = sphi 0, %s255
    %s275 = sphi 0, %s277
    %s278 = sphi 0, %s275
    %s279 = sphi 0, %s278
    %s295 = sphi 0, %s279
    %s301 = sphi 0, %s303
    %s304 = sphi 0, %s301
    %s305 = sphi 0, %s304
    %s321 = sphi 0, %s305
  $region4: #{naive_vae_neg_elbo.1} parent=0 // loop_header_branch
    %22 = sbr.rel (%p20) target = $region8
  $region5: #{naive_vae_neg_elbo.1} parent=0 // loop_body
    %s24 = ssub.s32 %s19, 1
    %s25 = ssub.s32 %s19, 2
    %s26 = sadd.s32 %s19, 1
    %s27 = ssub.s32 %s19, %s26
    %p28 = scmp.eq.s32.totalorder %s27, 0
    %s30 = sadd.s32 %s29, 1
    %s31 = scalar_select %p28, %s29, %s30
    %p34 = pneg %p28
    %p35 = scmp.eq.s32.totalorder %s19, 1
    %p36 = por %p34, %p35
    %p37 = scmp.ne.s32.totalorder %s29, %s32
    %p38 = scmp.eq.s32.totalorder %s19, 0
    %p39 = por %p37, %p38
    %p40 = scmp.ne.s32.totalorder %s29, %s32
    %p41 = scmp.eq.s32.totalorder %s24, 1
    %p42 = por %p40, %p41
    %p43 = scmp.ne.s32.totalorder %s32, %s33
    %p44 = scmp.eq.s32.totalorder %s24, 0
    %p45 = por %p43, %p44
    %p46 = scmp.ne.s32.totalorder %s32, %s33
    %p47 = scmp.eq.s32.totalorder %s25, 1
    %p48 = por %p46, %p47
    %p50 = scmp.ne.s32.totalorder %s33, %s49
    %p51 = scmp.eq.s32.totalorder %s25, 0
    %p52 = por %p50, %p51
    %s53 = ssub.s32 %s19, %s26
    %p54 = scmp.eq.s32.totalorder %s53, 0
    %s56 = sadd.s32 %s55, 1
    %s57 = scalar_select %p54, %s55, %s56
    %p60 = pneg %p54
    %p61 = scmp.eq.s32.totalorder %s19, 1
    %p62 = por %p60, %p61
    %p63 = scmp.ne.s32.totalorder %s55, %s58
    %p64 = scmp.eq.s32.totalorder %s19, 0
    %p65 = por %p63, %p64
    %p66 = scmp.ne.s32.totalorder %s55, %s58
    %p67 = scmp.eq.s32.totalorder %s24, 1
    %p68 = por %p66, %p67
    %p69 = scmp.ne.s32.totalorder %s58, %s59
    %p70 = scmp.eq.s32.totalorder %s24, 0
    %p71 = por %p69, %p70
    %p72 = scmp.ne.s32.totalorder %s58, %s59
    %p73 = scmp.eq.s32.totalorder %s25, 1
    %p74 = por %p72, %p73
    %p76 = scmp.ne.s32.totalorder %s59, %s75
    %p77 = scmp.eq.s32.totalorder %s25, 0
    %p78 = por %p76, %p77
    %s79 = ssub.s32 %s19, %s26
    %p80 = scmp.eq.s32.totalorder %s79, 0
    %s82 = sadd.s32 %s81, 1
    %s83 = scalar_select %p80, %s81, %s82
    %p86 = pneg %p80
    %p87 = scmp.eq.s32.totalorder %s19, 1
    %p88 = por %p86, %p87
    %p89 = scmp.ne.s32.totalorder %s81, %s84
    %p90 = scmp.eq.s32.totalorder %s19, 0
    %p91 = por %p89, %p90
    %p92 = scmp.ne.s32.totalorder %s81, %s84
    %p93 = scmp.eq.s32.totalorder %s24, 1
    %p94 = por %p92, %p93
    %p95 = scmp.ne.s32.totalorder %s84, %s85
    %p96 = scmp.eq.s32.totalorder %s24, 0
    %p97 = por %p95, %p96
    %p98 = scmp.ne.s32.totalorder %s84, %s85
    %p99 = scmp.eq.s32.totalorder %s25, 1
    %p100 = por %p98, %p99
    %p102 = scmp.ne.s32.totalorder %s85, %s101
    %p103 = scmp.eq.s32.totalorder %s25, 0
    %p104 = por %p102, %p103
    %s106 = sadd.s32 %s105, 1
    %p109 = scmp.eq.s32.totalorder %s19, 1
    %p110 = scmp.ne.s32.totalorder %s105, %s107
    %p111 = scmp.eq.s32.totalorder %s19, 0
    %p112 = por %p110, %p111
    %p113 = scmp.ne.s32.totalorder %s105, %s107
    %p114 = scmp.eq.s32.totalorder %s24, 1
    %p115 = por %p113, %p114
    %p116 = scmp.ne.s32.totalorder %s107, %s108
    %p117 = scmp.eq.s32.totalorder %s24, 0
    %p118 = por %p116, %p117
    %p119 = scmp.ne.s32.totalorder %s107, %s108
    %p120 = scmp.eq.s32.totalorder %s25, 1
    %p121 = por %p119, %p120
    %p123 = scmp.ne.s32.totalorder %s108, %s122
    %p124 = scmp.eq.s32.totalorder %s25, 0
    %p125 = por %p123, %p124
    %s127 = sadd.s32 %s126, 1
    %p130 = scmp.eq.s32.totalorder %s19, 1
    %p131 = scmp.ne.s32.totalorder %s126, %s128
    %p132 = scmp.eq.s32.totalorder %s19, 0
    %p133 = por %p131, %p132
    %p134 = scmp.ne.s32.totalorder %s126, %s128
    %p135 = scmp.eq.s32.totalorder %s24, 1
    %p136 = por %p134, %p135
    %p137 = scmp.ne.s32.totalorder %s128, %s129
    %p138 = scmp.eq.s32.totalorder %s24, 0
    %p139 = por %p137, %p138
    %p140 = scmp.ne.s32.totalorder %s128, %s129
    %p141 = scmp.eq.s32.totalorder %s25, 1
    %p142 = por %p140, %p141
    %p144 = scmp.ne.s32.totalorder %s129, %s143
    %p145 = scmp.eq.s32.totalorder %s25, 0
    %p146 = por %p144, %p145
    %s148 = sadd.s32 %s147, 1
    %p151 = scmp.eq.s32.totalorder %s19, 1
    %p152 = scmp.ne.s32.totalorder %s147, %s149
    %p153 = scmp.eq.s32.totalorder %s19, 0
    %p154 = por %p152, %p153
    %p155 = scmp.ne.s32.totalorder %s147, %s149
    %p156 = scmp.eq.s32.totalorder %s24, 1
    %p157 = por %p155, %p156
    %p158 = scmp.ne.s32.totalorder %s149, %s150
    %p159 = scmp.eq.s32.totalorder %s24, 0
    %p160 = por %p158, %p159
    %p161 = scmp.ne.s32.totalorder %s149, %s150
    %p162 = scmp.eq.s32.totalorder %s25, 1
    %p163 = por %p161, %p162
    %p165 = scmp.ne.s32.totalorder %s150, %s164
    %p166 = scmp.eq.s32.totalorder %s25, 0
    %p167 = por %p165, %p166
    %s169 = sadd.s32 %s168, 1
    %p172 = scmp.eq.s32.totalorder %s19, 1
    %p173 = scmp.ne.s32.totalorder %s168, %s170
    %p174 = scmp.eq.s32.totalorder %s19, 0
    %p175 = por %p173, %p174
    %p176 = scmp.ne.s32.totalorder %s168, %s170
    %p177 = scmp.eq.s32.totalorder %s24, 1
    %p178 = por %p176, %p177
    %p179 = scmp.ne.s32.totalorder %s170, %s171
    %p180 = scmp.eq.s32.totalorder %s24, 0
    %p181 = por %p179, %p180
    %p182 = scmp.ne.s32.totalorder %s170, %s171
    %p183 = scmp.eq.s32.totalorder %s25, 1
    %p184 = por %p182, %p183
    %p186 = scmp.ne.s32.totalorder %s171, %s185
    %p187 = scmp.eq.s32.totalorder %s25, 0
    %p188 = por %p186, %p187
    %s190 = sadd.s32 %s189, 1
    %p193 = scmp.eq.s32.totalorder %s19, 1
    %p194 = scmp.ne.s32.totalorder %s189, %s191
    %p195 = scmp.eq.s32.totalorder %s19, 0
    %p196 = por %p194, %p195
    %p197 = scmp.ne.s32.totalorder %s189, %s191
    %p198 = scmp.eq.s32.totalorder %s24, 1
    %p199 = por %p197, %p198
    %p200 = scmp.ne.s32.totalorder %s191, %s192
    %p201 = scmp.eq.s32.totalorder %s24, 0
    %p202 = por %p200, %p201
    %p203 = scmp.ne.s32.totalorder %s191, %s192
    %p204 = scmp.eq.s32.totalorder %s25, 1
    %p205 = por %p203, %p204
    %p207 = scmp.ne.s32.totalorder %s192, %s206
    %p208 = scmp.eq.s32.totalorder %s25, 0
    %p209 = por %p207, %p208
    %s211 = sadd.s32 %s210, 1
    %p214 = scmp.eq.s32.totalorder %s19, 1
    %p215 = scmp.ne.s32.totalorder %s210, %s212
    %p216 = scmp.eq.s32.totalorder %s19, 0
    %p217 = por %p215, %p216
    %p218 = scmp.ne.s32.totalorder %s210, %s212
    %p219 = scmp.eq.s32.totalorder %s24, 1
    %p220 = por %p218, %p219
    %p221 = scmp.ne.s32.totalorder %s212, %s213
    %p222 = scmp.eq.s32.totalorder %s24, 0
    %p223 = por %p221, %p222
    %p224 = scmp.ne.s32.totalorder %s212, %s213
    %p225 = scmp.eq.s32.totalorder %s25, 1
    %p226 = por %p224, %p225
    %p228 = scmp.ne.s32.totalorder %s213, %s227
    %p229 = scmp.eq.s32.totalorder %s25, 0
    %p230 = por %p228, %p229
    %s232 = sadd.s32 %s231, 1
    %p235 = scmp.eq.s32.totalorder %s19, 1
    %p236 = scmp.ne.s32.totalorder %s231, %s233
    %p237 = scmp.eq.s32.totalorder %s19, 0
    %p238 = por %p236, %p237
    %p239 = scmp.ne.s32.totalorder %s231, %s233
    %p240 = scmp.eq.s32.totalorder %s24, 1
    %p241 = por %p239, %p240
    %p242 = scmp.ne.s32.totalorder %s233, %s234
    %p243 = scmp.eq.s32.totalorder %s24, 0
    %p244 = por %p242, %p243
    %p245 = scmp.ne.s32.totalorder %s233, %s234
    %p246 = scmp.eq.s32.totalorder %s25, 1
    %p247 = por %p245, %p246
    %p249 = scmp.ne.s32.totalorder %s234, %s248
    %p250 = scmp.eq.s32.totalorder %s25, 0
    %p251 = por %p249, %p250
    %s253 = sadd.s32 %s252, 1
    %p256 = scmp.eq.s32.totalorder %s19, 1
    %p257 = scmp.ne.s32.totalorder %s252, %s254
    %p258 = scmp.eq.s32.totalorder %s19, 0
    %p259 = por %p257, %p258
    %p260 = scmp.ne.s32.totalorder %s252, %s254
    %p261 = scmp.eq.s32.totalorder %s24, 1
    %p262 = por %p260, %p261
    %p263 = scmp.ne.s32.totalorder %s254, %s255
    %p264 = scmp.eq.s32.totalorder %s24, 0
    %p265 = por %p263, %p264
    %p266 = scmp.ne.s32.totalorder %s254, %s255
    %p267 = scmp.eq.s32.totalorder %s25, 1
    %p268 = por %p266, %p267
    %p270 = scmp.ne.s32.totalorder %s255, %s269
    %p271 = scmp.eq.s32.totalorder %s25, 0
    %p272 = por %p270, %p271
    %s273 = ssub.s32 %s19, %s26
    %p274 = scmp.eq.s32.totalorder %s273, 0
    %s276 = sadd.s32 %s275, 1
    %s277 = scalar_select %p274, %s275, %s276
    %p280 = pneg %p274
    %p281 = scmp.eq.s32.totalorder %s19, 1
    %p282 = por %p280, %p281
    %p283 = scmp.ne.s32.totalorder %s275, %s278
    %p284 = scmp.eq.s32.totalorder %s19, 0
    %p285 = por %p283, %p284
    %p286 = scmp.ne.s32.totalorder %s275, %s278
    %p287 = scmp.eq.s32.totalorder %s24, 1
    %p288 = por %p286, %p287
    %p289 = scmp.ne.s32.totalorder %s278, %s279
    %p290 = scmp.eq.s32.totalorder %s24, 0
    %p291 = por %p289, %p290
    %p292 = scmp.ne.s32.totalorder %s278, %s279
    %p293 = scmp.eq.s32.totalorder %s25, 1
    %p294 = por %p292, %p293
    %p296 = scmp.ne.s32.totalorder %s279, %s295
    %p297 = scmp.eq.s32.totalorder %s25, 0
    %p298 = por %p296, %p297
    %s299 = ssub.s32 %s19, %s26
    %p300 = scmp.eq.s32.totalorder %s299, 0
    %s302 = sadd.s32 %s301, 1
    %s303 = scalar_select %p300, %s301, %s302
    %p306 = pneg %p300
    %p307 = scmp.eq.s32.totalorder %s19, 1
    %p308 = por %p306, %p307
    %p309 = scmp.ne.s32.totalorder %s301, %s304
    %p310 = scmp.eq.s32.totalorder %s19, 0
    %p311 = por %p309, %p310
    %p312 = scmp.ne.s32.totalorder %s301, %s304
    %p313 = scmp.eq.s32.totalorder %s24, 1
    %p314 = por %p312, %p313
    %p315 = scmp.ne.s32.totalorder %s304, %s305
    %p316 = scmp.eq.s32.totalorder %s24, 0
    %p317 = por %p315, %p316
    %p318 = scmp.ne.s32.totalorder %s304, %s305
    %p319 = scmp.eq.s32.totalorder %s25, 1
    %p320 = por %p318, %p319
    %p322 = scmp.ne.s32.totalorder %s305, %s321
    %p323 = scmp.eq.s32.totalorder %s25, 0
    %p324 = por %p322, %p323
    %p325 = scmp.le.s32.totalorder 1, %s19
    %p326 = scmp.lt.s32.totalorder %s19, 3
    %p327 = pnand %p325, %p326
    %p328 = pneg %p327
    // Predicated region
    $region9: #{naive_vae_neg_elbo.1} parent=5 // pred_check
      _
    $region10: #{naive_vae_neg_elbo.1} parent=5 // pred_check_branch
      %330 = sbr.rel (%p327) target = $region12
    $region11: #{naive_vae_neg_elbo.1} parent=5 // pred_region
      %s331 = ssub.s32 %s19, 1
      // Predicated region
      $region13: #{naive_vae_neg_elbo.1} parent=11 // pred_check
        %p332 = pneg %p118
      $region14: #{naive_vae_neg_elbo.1} parent=11 // pred_check_branch
        %334 = sbr.rel (%p332) target = $region16
      $region15: #{naive_vae_neg_elbo.1} parent=11 // pred_region
        _
      $region16: #{naive_vae_neg_elbo.1} parent=11 // pred_fallthru
        _
      // Predicated region
      $region17: #{naive_vae_neg_elbo.1} parent=11 // pred_check
        %p335 = pneg %p139
      $region18: #{naive_vae_neg_elbo.1} parent=11 // pred_check_branch
        %337 = sbr.rel (%p335) target = $region20
      $region19: #{naive_vae_neg_elbo.1} parent=11 // pred_region
        _
      $region20: #{naive_vae_neg_elbo.1} parent=11 // pred_fallthru
        _
      // Predicated region
      $region21: #{naive_vae_neg_elbo.1} parent=11 // pred_check
        %p338 = pneg %p160
      $region22: #{naive_vae_neg_elbo.1} parent=11 // pred_check_branch
        %340 = sbr.rel (%p338) target = $region24
      $region23: #{naive_vae_neg_elbo.1} parent=11 // pred_region
        _
      $region24: #{naive_vae_neg_elbo.1} parent=11 // pred_fallthru
        _
      // Predicated region
      $region25: #{naive_vae_neg_elbo.1} parent=11 // pred_check
        %p341 = pneg %p181
      $region26: #{naive_vae_neg_elbo.1} parent=11 // pred_check_branch
        %343 = sbr.rel (%p341) target = $region28
      $region27: #{naive_vae_neg_elbo.1} parent=11 // pred_region
        _
      $region28: #{naive_vae_neg_elbo.1} parent=11 // pred_fallthru
        _
      // Predicated region
      $region29: #{naive_vae_neg_elbo.1} parent=11 // pred_check
        %p344 = pneg %p202
      $region30: #{naive_vae_neg_elbo.1} parent=11 // pred_check_branch
        %346 = sbr.rel (%p344) target = $region32
      $region31: #{naive_vae_neg_elbo.1} parent=11 // pred_region
        _
      $region32: #{naive_vae_neg_elbo.1} parent=11 // pred_fallthru
        _
      // Predicated region
      $region33: #{naive_vae_neg_elbo.1} parent=11 // pred_check
        %p347 = pneg %p223
      $region34: #{naive_vae_neg_elbo.1} parent=11 // pred_check_branch
        %349 = sbr.rel (%p347) target = $region36
      $region35: #{naive_vae_neg_elbo.1} parent=11 // pred_region
        _
      $region36: #{naive_vae_neg_elbo.1} parent=11 // pred_fallthru
        _
      // Predicated region
      $region37: #{naive_vae_neg_elbo.1} parent=11 // pred_check
        %p350 = pneg %p244
      $region38: #{naive_vae_neg_elbo.1} parent=11 // pred_check_branch
        %352 = sbr.rel (%p350) target = $region40
      $region39: #{naive_vae_neg_elbo.1} parent=11 // pred_region
        _
      $region40: #{naive_vae_neg_elbo.1} parent=11 // pred_fallthru
        _
      // Predicated region
      $region41: #{naive_vae_neg_elbo.1} parent=11 // pred_check
        %p353 = pneg %p265
      $region42: #{naive_vae_neg_elbo.1} parent=11 // pred_check_branch
        %355 = sbr.rel (%p353) target = $region44
      $region43: #{naive_vae_neg_elbo.1} parent=11 // pred_region
        _
      $region44: #{naive_vae_neg_elbo.1} parent=11 // pred_fallthru
        _
    $region12: #{naive_vae_neg_elbo.1} parent=5 // pred_fallthru
      _
    %p356 = scmp.lt.s32.totalorder %s19, 2
    // Predicated region
    $region45: #{naive_vae_neg_elbo.1} parent=5 // pred_check
      %p357 = pneg %p356
    $region46: #{naive_vae_neg_elbo.1} parent=5 // pred_check_branch
      %359 = sbr.rel (%p357) target = $region48
    $region47: #{naive_vae_neg_elbo.1} parent=5 // pred_region
      // Predicated region
      $region49: #{naive_vae_neg_elbo.1} parent=47 // pred_check
        %p360 = pneg %p39
      $region50: #{naive_vae_neg_elbo.1} parent=47 // pred_check_branch
        %362 = sbr.rel (%p360) target = $region52
      $region51: #{naive_vae_neg_elbo.1} parent=47 // pred_region
        %s363 = smul.u32 16, %s19
        %p364 = scmp.lt.s32.totalorder %s363, 31
        %s365 = scalar_select %p364, %s363, 31
        %s366 = smul.addr %s365, 2
        %s367 = smul.addr %s366, 8
        %s368 = scalar_lea.vmem %s0, %s367
        %s369 = smul.u32 16, %s19
      $region52: #{naive_vae_neg_elbo.1} parent=47 // pred_fallthru
        _
      // Predicated region
      $region53: #{naive_vae_neg_elbo.1} parent=47 // pred_check
        %p370 = pneg %p65
      $region54: #{naive_vae_neg_elbo.1} parent=47 // pred_check_branch
        %372 = sbr.rel (%p370) target = $region56
      $region55: #{naive_vae_neg_elbo.1} parent=47 // pred_region
        %s373 = smul.u32 16, %s19
        %p374 = scmp.lt.s32.totalorder %s373, 31
        %s375 = scalar_select %p374, %s373, 31
        %s376 = smul.addr %s375, 2
        %s377 = smul.addr %s376, 8
        %s378 = scalar_lea.vmem %s1, %s377
        %s379 = smul.u32 16, %s19
      $region56: #{naive_vae_neg_elbo.1} parent=47 // pred_fallthru
        _
      // Predicated region
      $region57: #{naive_vae_neg_elbo.1} parent=47 // pred_check
        %p380 = pneg %p91
      $region58: #{naive_vae_neg_elbo.1} parent=47 // pred_check_branch
        %382 = sbr.rel (%p380) target = $region60
      $region59: #{naive_vae_neg_elbo.1} parent=47 // pred_region
        %s383 = smul.u32 2, %s19
        %p384 = scmp.lt.s32.totalorder %s383, 3
        %s385 = scalar_select %p384, %s383, 3
        %s386 = smul.addr %s385, 8
        %s387 = scalar_lea.vmem %s2, %s386
        %s388 = smul.u32 2, %s19
      $region60: #{naive_vae_neg_elbo.1} parent=47 // pred_fallthru
        _
    $region48: #{naive_vae_neg_elbo.1} parent=5 // pred_fallthru
      _
    %p389 = scmp.le.s32.totalorder 1, %s19
    %p390 = scmp.lt.s32.totalorder %s19, 3
    %p391 = pnand %p389, %p390
    %p392 = pneg %p391
    // Predicated region
    $region61: #{naive_vae_neg_elbo.1} parent=5 // pred_check
      _
    $region62: #{naive_vae_neg_elbo.1} parent=5 // pred_check_branch
      %394 = sbr.rel (%p391) target = $region64
    $region63: #{naive_vae_neg_elbo.1} parent=5 // pred_region
      %s395 = ssub.s32 %s19, 1
      %s396 = smul.u32 16, %s24
      %p397 = scmp.lt.s32.totalorder %s396, 31
      %s398 = scalar_select %p397, %s396, 31
      %s399 = smul.addr %s398, 2
      %s400 = smul.addr %s399, 8
      %s401 = scalar_lea.vmem %s0, %s400
      %p402 = pneg %p45
      %p403 = pneg %p42
      %s404 = smul.u32 16, %s24
      %p405 = scmp.lt.s32.totalorder %s404, 31
      %s406 = scalar_select %p405, %s404, 31
      %s407 = smul.addr %s406, 2
      %s408 = smul.addr %s407, 8
      %s409 = scalar_lea.vmem %s1, %s408
      %p410 = pneg %p71
      %p411 = pneg %p68
      %s412 = smul.u32 2, %s24
      %p413 = scmp.lt.s32.totalorder %s412, 3
      %s414 = scalar_select %p413, %s412, 3
      %s415 = smul.addr %s414, 8
      %s416 = scalar_lea.vmem %s2, %s415
      %p417 = pneg %p97
      %p418 = pneg %p94
      %p419 = pneg %p118
      %p420 = pneg %p115
      %p421 = pneg %p139
      %p422 = pneg %p136
      %p423 = pneg %p160
      %p424 = pneg %p157
      %p425 = pneg %p181
      %p426 = pneg %p178
      %p427 = pneg %p202
      %p428 = pneg %p199
      %p429 = pneg %p223
      %p430 = pneg %p220
      %p431 = pneg %p244
      %p432 = pneg %p241
      %p433 = pneg %p265
      %p434 = pneg %p262
      %p435 = pneg %p291
      %p436 = pneg %p288
      %p437 = scmp.lt.s32.totalorder %s24, 1
      %s438 = scalar_select %p437, %s24, 1
      %s439 = scalar_lea.vmem %s11, %s438
      %p440 = pneg %p317
      %p441 = pneg %p314
      %p442 = scmp.lt.s32.totalorder %s24, 1
      %s443 = scalar_select %p442, %s24, 1
      %s444 = scalar_lea.vmem %s12, %s443
      %s445 = smul.u32 16, %s24
      %p446 = scmp.lt.s32.totalorder %s445, 31
      %s447 = scalar_select %p446, %s445, 31
      %s448 = smul.addr %s447, 2
      %s449 = smul.addr %s448, 8
      %s450 = scalar_lea.vmem %s0, %s449
      %s451 = smul.u32 16, %s24
      %s452 = smul.u32 16, %s24
      %p453 = scmp.lt.s32.totalorder %s452, 31
      %s454 = scalar_select %p453, %s452, 31
      %s455 = smul.addr %s454, 2
      %s456 = smul.addr %s455, 8
      %s457 = scalar_lea.vmem %s1, %s456
      %s458 = smul.u32 16, %s24
      %s459 = smul.u32 2, %s24
      %p460 = scmp.lt.s32.totalorder %s459, 3
      %s461 = scalar_select %p460, %s459, 3
      %s462 = smul.addr %s461, 8
      %s463 = scalar_lea.vmem %s2, %s462
      %s464 = smul.u32 2, %s24
      %p465 = scmp.lt.s32.totalorder %s24, 1
      %s466 = scalar_select %p465, %s24, 1
      %s467 = scalar_lea.vmem %s11, %s466
      %p468 = scmp.lt.s32.totalorder %s24, 1
      %s469 = scalar_select %p468, %s24, 1
      %s470 = scalar_lea.vmem %s12, %s469
      %v471 = vld [vmem:[%s450] sm:$0xff]
      %v472 = vld [vmem:[%s450 + $0x8] sm:$0xff]
      %v473 = vld [vmem:[%s450 + $0x10] sm:$0xff]
      %v474 = vld [vmem:[%s450 + $0x18] sm:$0xff]
      %v475 = vld [vmem:[%s450 + $0x20] sm:$0xff]
      %v476 = vld [vmem:[%s450 + $0x28] sm:$0xff]
      %v477 = vld [vmem:[%s450 + $0x30] sm:$0xff]
      %v478 = vld [vmem:[%s450 + $0x38] sm:$0xff]
      %v479 = vld [vmem:[%s450 + $0x40] sm:$0xff]
      %v480 = vld [vmem:[%s450 + $0x48] sm:$0xff]
      %v481 = vld [vmem:[%s450 + $0x50] sm:$0xff]
      %v482 = vld [vmem:[%s450 + $0x58] sm:$0xff]
      %v483 = vld [vmem:[%s450 + $0x60] sm:$0xff]
      %v484 = vld [vmem:[%s450 + $0x68] sm:$0xff]
      %v485 = vld [vmem:[%s450 + $0x70] sm:$0xff]
      %v486 = vld [vmem:[%s450 + $0x78] sm:$0xff]
      %v487 = vld [vmem:[%s450 + $0x80] sm:$0xff]
      %v488 = vld [vmem:[%s450 + $0x88] sm:$0xff]
      %v489 = vld [vmem:[%s450 + $0x90] sm:$0xff]
      %v490 = vld [vmem:[%s450 + $0x98] sm:$0xff]
      %v491 = vld [vmem:[%s450 + $0xa0] sm:$0xff]
      %v492 = vld [vmem:[%s450 + $0xa8] sm:$0xff]
      %v493 = vld [vmem:[%s450 + $0xb0] sm:$0xff]
      %v494 = vld [vmem:[%s450 + $0xb8] sm:$0xff]
      %v495 = vld [vmem:[%s450 + $0xc0] sm:$0xff]
      %v496 = vld [vmem:[%s450 + $0xc8] sm:$0xff]
      %v497 = vld [vmem:[%s450 + $0xd0] sm:$0xff]
      %v498 = vld [vmem:[%s450 + $0xd8] sm:$0xff]
      %v499 = vld [vmem:[%s450 + $0xe0] sm:$0xff]
      %v500 = vld [vmem:[%s450 + $0xe8] sm:$0xff]
      %v501 = vld [vmem:[%s450 + $0xf0] sm:$0xff]
      %v502 = vld [vmem:[%s450 + $0xf8] sm:$0xff]
      %v503 = vld [vmem:[%s457] sm:$0xff]
      %v504 = vld [vmem:[%s457 + $0x8] sm:$0xff]
      %v505 = vld [vmem:[%s457 + $0x10] sm:$0xff]
      %v506 = vld [vmem:[%s457 + $0x18] sm:$0xff]
      %v507 = vld [vmem:[%s457 + $0x20] sm:$0xff]
      %v508 = vld [vmem:[%s457 + $0x28] sm:$0xff]
      %v509 = vld [vmem:[%s457 + $0x30] sm:$0xff]
      %v510 = vld [vmem:[%s457 + $0x38] sm:$0xff]
      %v511 = vld [vmem:[%s457 + $0x40] sm:$0xff]
      %v512 = vld [vmem:[%s457 + $0x48] sm:$0xff]
      %v513 = vld [vmem:[%s457 + $0x50] sm:$0xff]
      %v514 = vld [vmem:[%s457 + $0x58] sm:$0xff]
      %v515 = vld [vmem:[%s457 + $0x60] sm:$0xff]
      %v516 = vld [vmem:[%s457 + $0x68] sm:$0xff]
      %v517 = vld [vmem:[%s457 + $0x70] sm:$0xff]
      %v518 = vld [vmem:[%s457 + $0x78] sm:$0xff]
      %v519 = vld [vmem:[%s457 + $0x80] sm:$0xff]
      %v520 = vld [vmem:[%s457 + $0x88] sm:$0xff]
      %v521 = vld [vmem:[%s457 + $0x90] sm:$0xff]
      %v522 = vld [vmem:[%s457 + $0x98] sm:$0xff]
      %v523 = vld [vmem:[%s457 + $0xa0] sm:$0xff]
      %v524 = vld [vmem:[%s457 + $0xa8] sm:$0xff]
      %v525 = vld [vmem:[%s457 + $0xb0] sm:$0xff]
      %v526 = vld [vmem:[%s457 + $0xb8] sm:$0xff]
      %v527 = vld [vmem:[%s457 + $0xc0] sm:$0xff]
      %v528 = vld [vmem:[%s457 + $0xc8] sm:$0xff]
      %v529 = vld [vmem:[%s457 + $0xd0] sm:$0xff]
      %v530 = vld [vmem:[%s457 + $0xd8] sm:$0xff]
      %v531 = vld [vmem:[%s457 + $0xe0] sm:$0xff]
      %v532 = vld [vmem:[%s457 + $0xe8] sm:$0xff]
      %v533 = vld [vmem:[%s457 + $0xf0] sm:$0xff]
      %v534 = vld [vmem:[%s457 + $0xf8] sm:$0xff]
      %v535 = vld [vmem:[%s463] sm:$0xff]
      %v536 = vld [vmem:[%s463 + $0x8] sm:$0xff]
      %v537 = vld [vmem:[%s3] sm:$0xff]
      %vm538 = vcmask 64512
      %v540 = vsel %vm538, %v471, 0
      %v543 = vsel %vm538, %v472, 0
      %v546 = vsel %vm538, %v473, 0
      %v549 = vsel %vm538, %v474, 0
      %v552 = vsel %vm538, %v475, 0
      %v555 = vsel %vm538, %v476, 0
      %v558 = vsel %vm538, %v477, 0
      %v561 = vsel %vm538, %v478, 0
      %v564 = vsel %vm538, %v479, 0
      %v567 = vsel %vm538, %v480, 0
      %v570 = vsel %vm538, %v481, 0
      %v573 = vsel %vm538, %v482, 0
      %v576 = vsel %vm538, %v483, 0
      %v579 = vsel %vm538, %v484, 0
      %v582 = vsel %vm538, %v485, 0
      %v585 = vsel %vm538, %v486, 0
      %v588 = vsel %vm538, %v487, 0
      %v591 = vsel %vm538, %v488, 0
      %v594 = vsel %vm538, %v489, 0
      %v597 = vsel %vm538, %v490, 0
      %v600 = vsel %vm538, %v491, 0
      %v603 = vsel %vm538, %v492, 0
      %v606 = vsel %vm538, %v493, 0
      %v609 = vsel %vm538, %v494, 0
      %v612 = vsel %vm538, %v495, 0
      %v615 = vsel %vm538, %v496, 0
      %v618 = vsel %vm538, %v497, 0
      %v621 = vsel %vm538, %v498, 0
      %v624 = vsel %vm538, %v499, 0
      %v627 = vsel %vm538, %v500, 0
      %v630 = vsel %vm538, %v501, 0
      %v633 = vsel %vm538, %v502, 0
      %635 = vmatprep.subr.mxu0 0.0
      %636 = vmatpush1.msra.mxu0 %v537
      %637 = vmatprep.subr.mxu0 0.0
      %638 = vmatpush1.msra.mxu0 0.0
      %639 = vmatprep.subr.mxu0 0.0
      %640 = vmatpush1.msra.mxu0 0.0
      %641 = vmatprep.subr.mxu0 0.0
      %642 = vmatpush1.msra.mxu0 0.0
      %643 = vmatprep.subr.mxu0 0.0
      %644 = vmatpush1.msra.mxu0 0.0
      %645 = vmatprep.subr.mxu0 0.0
      %646 = vmatpush1.msra.mxu0 0.0
      %647 = vmatprep.subr.mxu0 0.0
      %648 = vmatpush1.msra.mxu0 0.0
      %649 = vmatprep.subr.mxu0 0.0
      %650 = vmatpush1.msra.mxu0 0.0
      %651 = vmatprep.subr.mxu0 0.0
      %652 = vmatpush1.msra.mxu0 0.0
      %653 = vmatprep.subr.mxu0 0.0
      %654 = vmatpush1.msra.mxu0 0.0
      %655 = vmatprep.subr.mxu0 0.0
      %656 = vmatpush1.msra.mxu0 0.0
      %657 = vmatprep.subr.mxu0 0.0
      %658 = vmatpush1.msra.mxu0 0.0
      %659 = vmatprep.subr.mxu0 0.0
      %660 = vmatpush1.msra.mxu0 0.0
      %661 = vmatprep.subr.mxu0 0.0
      %662 = vmatpush1.msra.mxu0 0.0
      %663 = vmatprep.subr.mxu0 0.0
      %664 = vmatpush1.msra.mxu0 0.0
      %665 = vmatprep.subr.mxu0 0.0
      %666 = vmatpush1.msra.mxu0 0.0
      %667 = vmatprep.subr.mxu0 0.0
      %668 = vmatpush1.msra.mxu0 0.0
      %669 = vmatprep.subr.mxu0 0.0
      %670 = vmatpush1.msra.mxu0 0.0
      %671 = vmatprep.subr.mxu0 0.0
      %672 = vmatpush1.msra.mxu0 0.0
      %673 = vmatprep.subr.mxu0 0.0
      %674 = vmatpush1.msra.mxu0 0.0
      %675 = vmatprep.subr.mxu0 0.0
      %676 = vmatpush1.msra.mxu0 0.0
      %677 = vmatprep.subr.mxu0 0.0
      %678 = vmatpush1.msra.mxu0 0.0
      %679 = vmatprep.subr.mxu0 0.0
      %680 = vmatpush1.msra.mxu0 0.0
      %681 = vmatprep.subr.mxu0 0.0
      %682 = vmatpush1.msra.mxu0 0.0
      %683 = vmatprep.subr.mxu0 0.0
      %684 = vmatpush1.msra.mxu0 0.0
      %685 = vmatprep.subr.mxu0 0.0
      %686 = vmatpush1.msra.mxu0 0.0
      %687 = vmatprep.subr.mxu0 0.0
      %688 = vmatpush1.msra.mxu0 0.0
      %689 = vmatprep.subr.mxu0 0.0
      %690 = vmatpush1.msra.mxu0 0.0
      %691 = vmatprep.subr.mxu0 0.0
      %692 = vmatpush1.msra.mxu0 0.0
      %693 = vmatprep.subr.mxu0 0.0
      %694 = vmatpush1.msra.mxu0 0.0
      %695 = vmatprep.subr.mxu0 0.0
      %696 = vmatpush1.msra.mxu0 0.0
      %697 = vmatprep.subr.mxu0 0.0
      %698 = vmatpush1.msra.mxu0 0.0
      %699 = vmatprep.mubr.f32.mxu0 0.0
      %700 = vmatmul.mubr.f32.gmra.mrb[0].mxu0 %v540
      %v701 = vpop.f32.mrb[0].mxu0
      %v702 = vadd.f32 0.0, %v701
      %v703 = vpop.f32.mrb[0].mxu0
      %704 = vmatprep.mubr.f32.mxu0 0.0
      %705 = vmatmul.mubr.f32.gmra.mrb[0].mxu0 %v543
      %v706 = vpop.f32.mrb[0].mxu0
      %v707 = vadd.f32 0.0, %v706
      %v708 = vpop.f32.mrb[0].mxu0
      %709 = vmatprep.mubr.f32.mxu0 0.0
      %710 = vmatmul.mubr.f32.gmra.mrb[0].mxu0 %v546
      %v711 = vpop.f32.mrb[0].mxu0
      %v712 = vadd.f32 0.0, %v711
      %v713 = vpop.f32.mrb[0].mxu0
      %714 = vmatprep.mubr.f32.mxu0 0.0
      %715 = vmatmul.mubr.f32.gmra.mrb[0].mxu0 %v549
      %v716 = vpop.f32.mrb[0].mxu0
      %v717 = vadd.f32 0.0, %v716
      %v718 = vpop.f32.mrb[0].mxu0
      %719 = vmatprep.mubr.f32.mxu0 0.0
      %720 = vmatmul.mubr.f32.gmra.mrb[0].mxu0 %v552
      %v721 = vpop.f32.mrb[0].mxu0
      %v722 = vadd.f32 0.0, %v721
      %v723 = vpop.f32.mrb[0].mxu0
      %724 = vmatprep.mubr.f32.mxu0 0.0
      %725 = vmatmul.mubr.f32.gmra.mrb[0].mxu0 %v555
      %v726 = vpop.f32.mrb[0].mxu0
      %v727 = vadd.f32 0.0, %v726
      %v728 = vpop.f32.mrb[0].mxu0
      %729 = vmatprep.mubr.f32.mxu0 0.0
      %730 = vmatmul.mubr.f32.gmra.mrb[0].mxu0 %v558
      %v731 = vpop.f32.mrb[0].mxu0
      %v732 = vadd.f32 0.0, %v731
      %v733 = vpop.f32.mrb[0].mxu0
      %734 = vmatprep.mubr.f32.mxu0 0.0
      %735 = vmatmul.mubr.f32.gmra.mrb[0].mxu0 %v561
      %v736 = vpop.f32.mrb[0].mxu0
      %v737 = vadd.f32 0.0, %v736
      %v738 = vpop.f32.mrb[0].mxu0
      %739 = vmatprep.mubr.f32.mxu0 0.0
      %740 = vmatmul.mubr.f32.gmra.mrb[0].mxu0 %v564
      %v741 = vpop.f32.mrb[0].mxu0
      %v742 = vadd.f32 0.0, %v741
      %v743 = vpop.f32.mrb[0].mxu0
      %744 = vmatprep.mubr.f32.mxu0 0.0
      %745 = vmatmul.mubr.f32.gmra.mrb[0].mxu0 %v567
      %v746 = vpop.f32.mrb[0].mxu0
      %v747 = vadd.f32 0.0, %v746
      %v748 = vpop.f32.mrb[0].mxu0
      %749 = vmatprep.mubr.f32.mxu0 0.0
      %750 = vmatmul.mubr.f32.gmra.mrb[0].mxu0 %v570
      %v751 = vpop.f32.mrb[0].mxu0
      %v752 = vadd.f32 0.0, %v751
      %v753 = vpop.f32.mrb[0].mxu0
      %754 = vmatprep.mubr.f32.mxu0 0.0
      %755 = vmatmul.mubr.f32.gmra.mrb[0].mxu0 %v573
      %v756 = vpop.f32.mrb[0].mxu0
      %v757 = vadd.f32 0.0, %v756
      %v758 = vpop.f32.mrb[0].mxu0
      %759 = vmatprep.mubr.f32.mxu0 0.0
      %760 = vmatmul.mubr.f32.gmra.mrb[0].mxu0 %v576
      %v761 = vpop.f32.mrb[0].mxu0
      %v762 = vadd.f32 0.0, %v761
      %v763 = vpop.f32.mrb[0].mxu0
      %764 = vmatprep.mubr.f32.mxu0 0.0
      %765 = vmatmul.mubr.f32.gmra.mrb[0].mxu0 %v579
      %v766 = vpop.f32.mrb[0].mxu0
      %v767 = vadd.f32 0.0, %v766
      %v768 = vpop.f32.mrb[0].mxu0
      %769 = vmatprep.mubr.f32.mxu0 0.0
      %770 = vmatmul.mubr.f32.gmra.mrb[0].mxu0 %v582
      %v771 = vpop.f32.mrb[0].mxu0
      %v772 = vadd.f32 0.0, %v771
      %v773 = vpop.f32.mrb[0].mxu0
      %774 = vmatprep.mubr.f32.mxu0 0.0
      %775 = vmatmul.mubr.f32.gmra.mrb[0].mxu0 %v585
      %v776 = vpop.f32.mrb[0].mxu0
      %v777 = vadd.f32 0.0, %v776
      %v778 = vpop.f32.mrb[0].mxu0
      %779 = vmatprep.mubr.f32.mxu0 0.0
      %780 = vmatmul.mubr.f32.gmra.mrb[0].mxu0 %v588
      %v781 = vpop.f32.mrb[0].mxu0
      %v782 = vadd.f32 0.0, %v781
      %v783 = vpop.f32.mrb[0].mxu0
      %784 = vmatprep.mubr.f32.mxu0 0.0
      %785 = vmatmul.mubr.f32.gmra.mrb[0].mxu0 %v591
      %v786 = vpop.f32.mrb[0].mxu0
      %v787 = vadd.f32 0.0, %v786
      %v788 = vpop.f32.mrb[0].mxu0
      %789 = vmatprep.mubr.f32.mxu0 0.0
      %790 = vmatmul.mubr.f32.gmra.mrb[0].mxu0 %v594
      %v791 = vpop.f32.mrb[0].mxu0
      %v792 = vadd.f32 0.0, %v791
      %v793 = vpop.f32.mrb[0].mxu0
      %794 = vmatprep.mubr.f32.mxu0 0.0
      %795 = vmatmul.mubr.f32.gmra.mrb[0].mxu0 %v597
      %v796 = vpop.f32.mrb[0].mxu0
      %v797 = vadd.f32 0.0, %v796
      %v798 = vpop.f32.mrb[0].mxu0
      %799 = vmatprep.mubr.f32.mxu0 0.0
      %800 = vmatmul.mubr.f32.gmra.mrb[0].mxu0 %v600
      %v801 = vpop.f32.mrb[0].mxu0
      %v802 = vadd.f32 0.0, %v801
      %v803 = vpop.f32.mrb[0].mxu0
      %804 = vmatprep.mubr.f32.mxu0 0.0
      %805 = vmatmul.mubr.f32.gmra.mrb[0].mxu0 %v603
      %v806 = vpop.f32.mrb[0].mxu0
      %v807 = vadd.f32 0.0, %v806
      %v808 = vpop.f32.mrb[0].mxu0
      %809 = vmatprep.mubr.f32.mxu0 0.0
      %810 = vmatmul.mubr.f32.gmra.mrb[0].mxu0 %v606
      %v811 = vpop.f32.mrb[0].mxu0
      %v812 = vadd.f32 0.0, %v811
      %v813 = vpop.f32.mrb[0].mxu0
      %814 = vmatprep.mubr.f32.mxu0 0.0
      %815 = vmatmul.mubr.f32.gmra.mrb[0].mxu0 %v609
      %v816 = vpop.f32.mrb[0].mxu0
      %v817 = vadd.f32 0.0, %v816
      %v818 = vpop.f32.mrb[0].mxu0
      %819 = vmatprep.mubr.f32.mxu0 0.0
      %820 = vmatmul.mubr.f32.gmra.mrb[0].mxu0 %v612
      %v821 = vpop.f32.mrb[0].mxu0
      %v822 = vadd.f32 0.0, %v821
      %v823 = vpop.f32.mrb[0].mxu0
      %824 = vmatprep.mubr.f32.mxu0 0.0
      %825 = vmatmul.mubr.f32.gmra.mrb[0].mxu0 %v615
      %v826 = vpop.f32.mrb[0].mxu0
      %v827 = vadd.f32 0.0, %v826
      %v828 = vpop.f32.mrb[0].mxu0
      %829 = vmatprep.mubr.f32.mxu0 0.0
      %830 = vmatmul.mubr.f32.gmra.mrb[0].mxu0 %v618
      %v831 = vpop.f32.mrb[0].mxu0
      %v832 = vadd.f32 0.0, %v831
      %v833 = vpop.f32.mrb[0].mxu0
      %834 = vmatprep.mubr.f32.mxu0 0.0
      %835 = vmatmul.mubr.f32.gmra.mrb[0].mxu0 %v621
      %v836 = vpop.f32.mrb[0].mxu0
      %v837 = vadd.f32 0.0, %v836
      %v838 = vpop.f32.mrb[0].mxu0
      %839 = vmatprep.mubr.f32.mxu0 0.0
      %840 = vmatmul.mubr.f32.gmra.mrb[0].mxu0 %v624
      %v841 = vpop.f32.mrb[0].mxu0
      %v842 = vadd.f32 0.0, %v841
      %v843 = vpop.f32.mrb[0].mxu0
      %844 = vmatprep.mubr.f32.mxu0 0.0
      %845 = vmatmul.mubr.f32.gmra.mrb[0].mxu0 %v627
      %v846 = vpop.f32.mrb[0].mxu0
      %v847 = vadd.f32 0.0, %v846
      %v848 = vpop.f32.mrb[0].mxu0
      %849 = vmatprep.mubr.f32.mxu0 0.0
      %850 = vmatmul.mubr.f32.gmra.mrb[0].mxu0 %v630
      %v851 = vpop.f32.mrb[0].mxu0
      %v852 = vadd.f32 0.0, %v851
      %v853 = vpop.f32.mrb[0].mxu0
      %854 = vmatprep.mubr.f32.mxu0 0.0
      %855 = vmatmul.mubr.f32.gmra.mrb[0].mxu0 %v633
      %v856 = vpop.f32.mrb[0].mxu0
      %v857 = vadd.f32 0.0, %v856
      %v858 = vpop.f32.mrb[0].mxu0
      %859 = vdwg.mxu0
      %vm860 = vcmask 130048
      %v862 = vsel %vm860, %v503, 0
      %v865 = vsel %vm860, %v504, 0
      %867 = vmatprep.subr.mxu0 0.0
      %868 = vmatpush1.msra.mxu0 %v702
      %869 = vmatprep.subr.mxu0 0.0
      %870 = vmatpush1.msra.mxu0 %v707
      %871 = vmatprep.subr.mxu0 0.0
      %872 = vmatpush1.msra.mxu0 0.0
      %873 = vmatprep.subr.mxu0 0.0
      %874 = vmatpush1.msra.mxu0 0.0
      %875 = vmatprep.subr.mxu0 0.0
      %876 = vmatpush1.msra.mxu0 0.0
      %877 = vmatprep.subr.mxu0 0.0
      %878 = vmatpush1.msra.mxu0 0.0
      %879 = vmatprep.subr.mxu0 0.0
      %880 = vmatpush1.msra.mxu0 0.0
      %881 = vmatprep.subr.mxu0 0.0
      %882 = vmatpush1.msra.mxu0 0.0
      %883 = vmatprep.subr.mxu0 0.0
      %884 = vmatpush1.msra.mxu0 0.0
      %885 = vmatprep.subr.mxu0 0.0
      %886 = vmatpush1.msra.mxu0 0.0
      %887 = vmatprep.subr.mxu0 0.0
      %888 = vmatpush1.msra.mxu0 0.0
      %889 = vmatprep.subr.mxu0 0.0
      %890 = vmatpush1.msra.mxu0 0.0
      %891 = vmatprep.subr.mxu0 0.0
      %892 = vmatpush1.msra.mxu0 0.0
      %893 = vmatprep.subr.mxu0 0.0
      %894 = vmatpush1.msra.mxu0 0.0
      %895 = vmatprep.subr.mxu0 0.0
      %896 = vmatpush1.msra.mxu0 0.0
      %897 = vmatprep.subr.mxu0 0.0
      %898 = vmatpush1.msra.mxu0 0.0
      %899 = vmatprep.subr.mxu0 0.0
      %900 = vmatpush1.msra.mxu0 0.0
      %901 = vmatprep.subr.mxu0 0.0
      %902 = vmatpush1.msra.mxu0 0.0
      %903 = vmatprep.subr.mxu0 0.0
      %904 = vmatpush1.msra.mxu0 0.0
      %905 = vmatprep.subr.mxu0 0.0
      %906 = vmatpush1.msra.mxu0 0.0
      %907 = vmatprep.subr.mxu0 0.0
      %908 = vmatpush1.msra.mxu0 0.0
      %909 = vmatprep.subr.mxu0 0.0
      %910 = vmatpush1.msra.mxu0 0.0
      %911 = vmatprep.subr.mxu0 0.0
      %912 = vmatpush1.msra.mxu0 0.0
      %913 = vmatprep.subr.mxu0 0.0
      %914 = vmatpush1.msra.mxu0 0.0
      %915 = vmatprep.subr.mxu0 0.0
      %916 = vmatpush1.msra.mxu0 0.0
      %917 = vmatprep.subr.mxu0 0.0
      %918 = vmatpush1.msra.mxu0 0.0
      %919 = vmatprep.subr.mxu0 0.0
      %920 = vmatpush1.msra.mxu0 0.0
      %921 = vmatprep.subr.mxu0 0.0
      %922 = vmatpush1.msra.mxu0 0.0
      %923 = vmatprep.subr.mxu0 0.0
      %924 = vmatpush1.msra.mxu0 0.0
      %925 = vmatprep.subr.mxu0 0.0
      %926 = vmatpush1.msra.mxu0 0.0
      %927 = vmatprep.subr.mxu0 0.0
      %928 = vmatpush1.msra.mxu0 0.0
      %929 = vmatprep.subr.mxu0 0.0
      %930 = vmatpush1.msra.mxu0 0.0
      %931 = vmatprep.mubr.f32.mxu0 0.0
      %932 = vmatmul.mubr.f32.gmra.mrb[0].mxu0 %v862
      %v933 = vpop.f32.mrb[0].mxu0
      %v934 = vadd.f32 %v702, %v933
      %v935 = vpop.f32.mrb[0].mxu0
      %936 = vmatprep.mubr.f32.mxu0 0.0
      %937 = vmatmul.mubr.f32.gmra.mrb[0].mxu0 %v865
      %v938 = vpop.f32.mrb[0].mxu0
      %v939 = vadd.f32 %v707, %v938
      %v940 = vpop.f32.mrb[0].mxu0
      %941 = vdwg.mxu0
      %v943 = vsel %vm860, %v505, 0
      %v946 = vsel %vm860, %v506, 0
      %948 = vmatprep.subr.mxu0 0.0
      %949 = vmatpush1.msra.mxu0 %v712
      %950 = vmatprep.subr.mxu0 0.0
      %951 = vmatpush1.msra.mxu0 %v717
      %952 = vmatprep.subr.mxu0 0.0
      %953 = vmatpush1.msra.mxu0 0.0
      %954 = vmatprep.subr.mxu0 0.0
      %955 = vmatpush1.msra.mxu0 0.0
      %956 = vmatprep.subr.mxu0 0.0
      %957 = vmatpush1.msra.mxu0 0.0
      %958 = vmatprep.subr.mxu0 0.0
      %959 = vmatpush1.msra.mxu0 0.0
      %960 = vmatprep.subr.mxu0 0.0
      %961 = vmatpush1.msra.mxu0 0.0
      %962 = vmatprep.subr.mxu0 0.0
      %963 = vmatpush1.msra.mxu0 0.0
      %964 = vmatprep.subr.mxu0 0.0
      %965 = vmatpush1.msra.mxu0 0.0
      %966 = vmatprep.subr.mxu0 0.0
      %967 = vmatpush1.msra.mxu0 0.0
      %968 = vmatprep.subr.mxu0 0.0
      %969 = vmatpush1.msra.mxu0 0.0
      %970 = vmatprep.subr.mxu0 0.0
      %971 = vmatpush1.msra.mxu0 0.0
      %972 = vmatprep.subr.mxu0 0.0
      %973 = vmatpush1.msra.mxu0 0.0
      %974 = vmatprep.subr.mxu0 0.0
      %975 = vmatpush1.msra.mxu0 0.0
      %976 = vmatprep.subr.mxu0 0.0
      %977 = vmatpush1.msra.mxu0 0.0
      %978 = vmatprep.subr.mxu0 0.0
      %979 = vmatpush1.msra.mxu0 0.0
      %980 = vmatprep.subr.mxu0 0.0
      %981 = vmatpush1.msra.mxu0 0.0
      %982 = vmatprep.subr.mxu0 0.0
      %983 = vmatpush1.msra.mxu0 0.0
      %984 = vmatprep.subr.mxu0 0.0
      %985 = vmatpush1.msra.mxu0 0.0
      %986 = vmatprep.subr.mxu0 0.0
      %987 = vmatpush1.msra.mxu0 0.0
      %988 = vmatprep.subr.mxu0 0.0
      %989 = vmatpush1.msra.mxu0 0.0
      %990 = vmatprep.subr.mxu0 0.0
      %991 = vmatpush1.msra.mxu0 0.0
      %992 = vmatprep.subr.mxu0 0.0
      %993 = vmatpush1.msra.mxu0 0.0
      %994 = vmatprep.subr.mxu0 0.0
      %995 = vmatpush1.msra.mxu0 0.0
      %996 = vmatprep.subr.mxu0 0.0
      %997 = vmatpush1.msra.mxu0 0.0
      %998 = vmatprep.subr.mxu0 0.0
      %999 = vmatpush1.msra.mxu0 0.0
      %1000 = vmatprep.subr.mxu0 0.0
      %1001 = vmatpush1.msra.mxu0 0.0
      %1002 = vmatprep.subr.mxu0 0.0
      %1003 = vmatpush1.msra.mxu0 0.0
      %1004 = vmatprep.subr.mxu0 0.0
      %1005 = vmatpush1.msra.mxu0 0.0
      %1006 = vmatprep.subr.mxu0 0.0
      %1007 = vmatpush1.msra.mxu0 0.0
      %1008 = vmatprep.subr.mxu0 0.0
      %1009 = vmatpush1.msra.mxu0 0.0
      %1010 = vmatprep.subr.mxu0 0.0
      %1011 = vmatpush1.msra.mxu0 0.0
      %1012 = vmatprep.mubr.f32.mxu0 0.0
      %1013 = vmatmul.mubr.f32.gmra.mrb[0].mxu0 %v943
      %v1014 = vpop.f32.mrb[0].mxu0
      %v1015 = vadd.f32 %v712, %v1014
      %v1016 = vpop.f32.mrb[0].mxu0
      %1017 = vmatprep.mubr.f32.mxu0 0.0
      %1018 = vmatmul.mubr.f32.gmra.mrb[0].mxu0 %v946
      %v1019 = vpop.f32.mrb[0].mxu0
      %v1020 = vadd.f32 %v717, %v1019
      %v1021 = vpop.f32.mrb[0].mxu0
      %1022 = vdwg.mxu0
      %v1024 = vsel %vm860, %v507, 0
      %v1027 = vsel %vm860, %v508, 0
      %1029 = vmatprep.subr.mxu0 0.0
      %1030 = vmatpush1.msra.mxu0 %v722
      %1031 = vmatprep.subr.mxu0 0.0
      %1032 = vmatpush1.msra.mxu0 %v727
      %1033 = vmatprep.subr.mxu0 0.0
      %1034 = vmatpush1.msra.mxu0 0.0
      %1035 = vmatprep.subr.mxu0 0.0
      %1036 = vmatpush1.msra.mxu0 0.0
      %1037 = vmatprep.subr.mxu0 0.0
      %1038 = vmatpush1.msra.mxu0 0.0
      %1039 = vmatprep.subr.mxu0 0.0
      %1040 = vmatpush1.msra.mxu0 0.0
      %1041 = vmatprep.subr.mxu0 0.0
      %1042 = vmatpush1.msra.mxu0 0.0
      %1043 = vmatprep.subr.mxu0 0.0
      %1044 = vmatpush1.msra.mxu0 0.0
      %1045 = vmatprep.subr.mxu0 0.0
      %1046 = vmatpush1.msra.mxu0 0.0
      %1047 = vmatprep.subr.mxu0 0.0
      %1048 = vmatpush1.msra.mxu0 0.0
      %1049 = vmatprep.subr.mxu0 0.0
      %1050 = vmatpush1.msra.mxu0 0.0
      %1051 = vmatprep.subr.mxu0 0.0
      %1052 = vmatpush1.msra.mxu0 0.0
      %1053 = vmatprep.subr.mxu0 0.0
      %1054 = vmatpush1.msra.mxu0 0.0
      %1055 = vmatprep.subr.mxu0 0.0
      %1056 = vmatpush1.msra.mxu0 0.0
      %1057 = vmatprep.subr.mxu0 0.0
      %1058 = vmatpush1.msra.mxu0 0.0
      %1059 = vmatprep.subr.mxu0 0.0
      %1060 = vmatpush1.msra.mxu0 0.0
      %1061 = vmatprep.subr.mxu0 0.0
      %1062 = vmatpush1.msra.mxu0 0.0
      %1063 = vmatprep.subr.mxu0 0.0
      %1064 = vmatpush1.msra.mxu0 0.0
      %1065 = vmatprep.subr.mxu0 0.0
      %1066 = vmatpush1.msra.mxu0 0.0
      %1067 = vmatprep.subr.mxu0 0.0
      %1068 = vmatpush1.msra.mxu0 0.0
      %1069 = vmatprep.subr.mxu0 0.0
      %1070 = vmatpush1.msra.mxu0 0.0
      %1071 = vmatprep.subr.mxu0 0.0
      %1072 = vmatpush1.msra.mxu0 0.0
      %1073 = vmatprep.subr.mxu0 0.0
      %1074 = vmatpush1.msra.mxu0 0.0
      %1075 = vmatprep.subr.mxu0 0.0
      %1076 = vmatpush1.msra.mxu0 0.0
      %1077 = vmatprep.subr.mxu0 0.0
      %1078 = vmatpush1.msra.mxu0 0.0
      %1079 = vmatprep.subr.mxu0 0.0
      %1080 = vmatpush1.msra.mxu0 0.0
      %1081 = vmatprep.subr.mxu0 0.0
      %1082 = vmatpush1.msra.mxu0 0.0
      %1083 = vmatprep.subr.mxu0 0.0
      %1084 = vmatpush1.msra.mxu0 0.0
      %1085 = vmatprep.subr.mxu0 0.0
      %1086 = vmatpush1.msra.mxu0 0.0
      %1087 = vmatprep.subr.mxu0 0.0
      %1088 = vmatpush1.msra.mxu0 0.0
      %1089 = vmatprep.subr.mxu0 0.0
      %1090 = vmatpush1.msra.mxu0 0.0
      %1091 = vmatprep.subr.mxu0 0.0
      %1092 = vmatpush1.msra.mxu0 0.0
      %1093 = vmatprep.mubr.f32.mxu0 0.0
      %1094 = vmatmul.mubr.f32.gmra.mrb[0].mxu0 %v1024
      %v1095 = vpop.f32.mrb[0].mxu0
      %v1096 = vadd.f32 %v722, %v1095
      %v1097 = vpop.f32.mrb[0].mxu0
      %1098 = vmatprep.mubr.f32.mxu0 0.0
      %1099 = vmatmul.mubr.f32.gmra.mrb[0].mxu0 %v1027
      %v1100 = vpop.f32.mrb[0].mxu0
      %v1101 = vadd.f32 %v727, %v1100
      %v1102 = vpop.f32.mrb[0].mxu0
      %1103 = vdwg.mxu0
      %v1105 = vsel %vm860, %v509, 0
      %v1108 = vsel %vm860, %v510, 0
      %1110 = vmatprep.subr.mxu0 0.0
      %1111 = vmatpush1.msra.mxu0 %v732
      %1112 = vmatprep.subr.mxu0 0.0
      %1113 = vmatpush1.msra.mxu0 %v737
      %1114 = vmatprep.subr.mxu0 0.0
      %1115 = vmatpush1.msra.mxu0 0.0
      %1116 = vmatprep.subr.mxu0 0.0
      %1117 = vmatpush1.msra.mxu0 0.0
      %1118 = vmatprep.subr.mxu0 0.0
      %1119 = vmatpush1.msra.mxu0 0.0
      %1120 = vmatprep.subr.mxu0 0.0
      %1121 = vmatpush1.msra.mxu0 0.0
      %1122 = vmatprep.subr.mxu0 0.0
      %1123 = vmatpush1.msra.mxu0 0.0
      %1124 = vmatprep.subr.mxu0 0.0
      %1125 = vmatpush1.msra.mxu0 0.0
      %1126 = vmatprep.subr.mxu0 0.0
      %1127 = vmatpush1.msra.mxu0 0.0
      %1128 = vmatprep.subr.mxu0 0.0
      %1129 = vmatpush1.msra.mxu0 0.0
      %1130 = vmatprep.subr.mxu0 0.0
      %1131 = vmatpush1.msra.mxu0 0.0
      %1132 = vmatprep.subr.mxu0 0.0
      %1133 = vmatpush1.msra.mxu0 0.0
      %1134 = vmatprep.subr.mxu0 0.0
      %1135 = vmatpush1.msra.mxu0 0.0
      %1136 = vmatprep.subr.mxu0 0.0
      %1137 = vmatpush1.msra.mxu0 0.0
      %1138 = vmatprep.subr.mxu0 0.0
      %1139 = vmatpush1.msra.mxu0 0.0
      %1140 = vmatprep.subr.mxu0 0.0
      %1141 = vmatpush1.msra.mxu0 0.0
      %1142 = vmatprep.subr.mxu0 0.0
      %1143 = vmatpush1.msra.mxu0 0.0
      %1144 = vmatprep.subr.mxu0 0.0
      %1145 = vmatpush1.msra.mxu0 0.0
      %1146 = vmatprep.subr.mxu0 0.0
      %1147 = vmatpush1.msra.mxu0 0.0
      %1148 = vmatprep.subr.mxu0 0.0
      %1149 = vmatpush1.msra.mxu0 0.0
      %1150 = vmatprep.subr.mxu0 0.0
      %1151 = vmatpush1.msra.mxu0 0.0
      %1152 = vmatprep.subr.mxu0 0.0
      %1153 = vmatpush1.msra.mxu0 0.0
      %1154 = vmatprep.subr.mxu0 0.0
      %1155 = vmatpush1.msra.mxu0 0.0
      %1156 = vmatprep.subr.mxu0 0.0
      %1157 = vmatpush1.msra.mxu0 0.0
      %1158 = vmatprep.subr.mxu0 0.0
      %1159 = vmatpush1.msra.mxu0 0.0
      %1160 = vmatprep.subr.mxu0 0.0
      %1161 = vmatpush1.msra.mxu0 0.0
      %1162 = vmatprep.subr.mxu0 0.0
      %1163 = vmatpush1.msra.mxu0 0.0
      %1164 = vmatprep.subr.mxu0 0.0
      %1165 = vmatpush1.msra.mxu0 0.0
      %1166 = vmatprep.subr.mxu0 0.0
      %1167 = vmatpush1.msra.mxu0 0.0
      %1168 = vmatprep.subr.mxu0 0.0
      %1169 = vmatpush1.msra.mxu0 0.0
      %1170 = vmatprep.subr.mxu0 0.0
      %1171 = vmatpush1.msra.mxu0 0.0
      %1172 = vmatprep.subr.mxu0 0.0
      %1173 = vmatpush1.msra.mxu0 0.0
      %1174 = vmatprep.mubr.f32.mxu0 0.0
      %1175 = vmatmul.mubr.f32.gmra.mrb[0].mxu0 %v1105
      %v1176 = vpop.f32.mrb[0].mxu0
      %v1177 = vadd.f32 %v732, %v1176
      %v1178 = vpop.f32.mrb[0].mxu0
      %1179 = vmatprep.mubr.f32.mxu0 0.0
      %1180 = vmatmul.mubr.f32.gmra.mrb[0].mxu0 %v1108
      %v1181 = vpop.f32.mrb[0].mxu0
      %v1182 = vadd.f32 %v737, %v1181
      %v1183 = vpop.f32.mrb[0].mxu0
      %1184 = vdwg.mxu0
      %v1186 = vsel %vm860, %v511, 0
      %v1189 = vsel %vm860, %v512, 0
      %1191 = vmatprep.subr.mxu0 0.0
      %1192 = vmatpush1.msra.mxu0 %v742
      %1193 = vmatprep.subr.mxu0 0.0
      %1194 = vmatpush1.msra.mxu0 %v747
      %1195 = vmatprep.subr.mxu0 0.0
      %1196 = vmatpush1.msra.mxu0 0.0
      %1197 = vmatprep.subr.mxu0 0.0
      %1198 = vmatpush1.msra.mxu0 0.0
      %1199 = vmatprep.subr.mxu0 0.0
      %1200 = vmatpush1.msra.mxu0 0.0
      %1201 = vmatprep.subr.mxu0 0.0
      %1202 = vmatpush1.msra.mxu0 0.0
      %1203 = vmatprep.subr.mxu0 0.0
      %1204 = vmatpush1.msra.mxu0 0.0
      %1205 = vmatprep.subr.mxu0 0.0
      %1206 = vmatpush1.msra.mxu0 0.0
      %1207 = vmatprep.subr.mxu0 0.0
      %1208 = vmatpush1.msra.mxu0 0.0
      %1209 = vmatprep.subr.mxu0 0.0
      %1210 = vmatpush1.msra.mxu0 0.0
      %1211 = vmatprep.subr.mxu0 0.0
      %1212 = vmatpush1.msra.mxu0 0.0
      %1213 = vmatprep.subr.mxu0 0.0
      %1214 = vmatpush1.msra.mxu0 0.0
      %1215 = vmatprep.subr.mxu0 0.0
      %1216 = vmatpush1.msra.mxu0 0.0
      %1217 = vmatprep.subr.mxu0 0.0
      %1218 = vmatpush1.msra.mxu0 0.0
      %1219 = vmatprep.subr.mxu0 0.0
      %1220 = vmatpush1.msra.mxu0 0.0
      %1221 = vmatprep.subr.mxu0 0.0
      %1222 = vmatpush1.msra.mxu0 0.0
      %1223 = vmatprep.subr.mxu0 0.0
      %1224 = vmatpush1.msra.mxu0 0.0
      %1225 = vmatprep.subr.mxu0 0.0
      %1226 = vmatpush1.msra.mxu0 0.0
      %1227 = vmatprep.subr.mxu0 0.0
      %1228 = vmatpush1.msra.mxu0 0.0
      %1229 = vmatprep.subr.mxu0 0.0
      %1230 = vmatpush1.msra.mxu0 0.0
      %1231 = vmatprep.subr.mxu0 0.0
      %1232 = vmatpush1.msra.mxu0 0.0
      %1233 = vmatprep.subr.mxu0 0.0
      %1234 = vmatpush1.msra.mxu0 0.0
      %1235 = vmatprep.subr.mxu0 0.0
      %1236 = vmatpush1.msra.mxu0 0.0
      %1237 = vmatprep.subr.mxu0 0.0
      %1238 = vmatpush1.msra.mxu0 0.0
      %1239 = vmatprep.subr.mxu0 0.0
      %1240 = vmatpush1.msra.mxu0 0.0
      %1241 = vmatprep.subr.mxu0 0.0
      %1242 = vmatpush1.msra.mxu0 0.0
      %1243 = vmatprep.subr.mxu0 0.0
      %1244 = vmatpush1.msra.mxu0 0.0
      %1245 = vmatprep.subr.mxu0 0.0
      %1246 = vmatpush1.msra.mxu0 0.0
      %1247 = vmatprep.subr.mxu0 0.0
      %1248 = vmatpush1.msra.mxu0 0.0
      %1249 = vmatprep.subr.mxu0 0.0
      %1250 = vmatpush1.msra.mxu0 0.0
      %1251 = vmatprep.subr.mxu0 0.0
      %1252 = vmatpush1.msra.mxu0 0.0
      %1253 = vmatprep.subr.mxu0 0.0
      %1254 = vmatpush1.msra.mxu0 0.0
      %1255 = vmatprep.mubr.f32.mxu0 0.0
      %1256 = vmatmul.mubr.f32.gmra.mrb[0].mxu0 %v1186
      %v1257 = vpop.f32.mrb[0].mxu0
      %v1258 = vadd.f32 %v742, %v1257
      %v1259 = vpop.f32.mrb[0].mxu0
      %1260 = vmatprep.mubr.f32.mxu0 0.0
      %1261 = vmatmul.mubr.f32.gmra.mrb[0].mxu0 %v1189
      %v1262 = vpop.f32.mrb[0].mxu0
      %v1263 = vadd.f32 %v747, %v1262
      %v1264 = vpop.f32.mrb[0].mxu0
      %1265 = vdwg.mxu0
      %v1267 = vsel %vm860, %v513, 0
      %v1270 = vsel %vm860, %v514, 0
      %1272 = vmatprep.subr.mxu0 0.0
      %1273 = vmatpush1.msra.mxu0 %v752
      %1274 = vmatprep.subr.mxu0 0.0
      %1275 = vmatpush1.msra.mxu0 %v757
      %1276 = vmatprep.subr.mxu0 0.0
      %1277 = vmatpush1.msra.mxu0 0.0
      %1278 = vmatprep.subr.mxu0 0.0
      %1279 = vmatpush1.msra.mxu0 0.0
      %1280 = vmatprep.subr.mxu0 0.0
      %1281 = vmatpush1.msra.mxu0 0.0
      %1282 = vmatprep.subr.mxu0 0.0
      %1283 = vmatpush1.msra.mxu0 0.0
      %1284 = vmatprep.subr.mxu0 0.0
      %1285 = vmatpush1.msra.mxu0 0.0
      %1286 = vmatprep.subr.mxu0 0.0
      %1287 = vmatpush1.msra.mxu0 0.0
      %1288 = vmatprep.subr.mxu0 0.0
      %1289 = vmatpush1.msra.mxu0 0.0
      %1290 = vmatprep.subr.mxu0 0.0
      %1291 = vmatpush1.msra.mxu0 0.0
      %1292 = vmatprep.subr.mxu0 0.0
      %1293 = vmatpush1.msra.mxu0 0.0
      %1294 = vmatprep.subr.mxu0 0.0
      %1295 = vmatpush1.msra.mxu0 0.0
      %1296 = vmatprep.subr.mxu0 0.0
      %1297 = vmatpush1.msra.mxu0 0.0
      %1298 = vmatprep.subr.mxu0 0.0
      %1299 = vmatpush1.msra.mxu0 0.0
      %1300 = vmatprep.subr.mxu0 0.0
      %1301 = vmatpush1.msra.mxu0 0.0
      %1302 = vmatprep.subr.mxu0 0.0
      %1303 = vmatpush1.msra.mxu0 0.0
      %1304 = vmatprep.subr.mxu0 0.0
      %1305 = vmatpush1.msra.mxu0 0.0
      %1306 = vmatprep.subr.mxu0 0.0
      %1307 = vmatpush1.msra.mxu0 0.0
      %1308 = vmatprep.subr.mxu0 0.0
      %1309 = vmatpush1.msra.mxu0 0.0
      %1310 = vmatprep.subr.mxu0 0.0
      %1311 = vmatpush1.msra.mxu0 0.0
      %1312 = vmatprep.subr.mxu0 0.0
      %1313 = vmatpush1.msra.mxu0 0.0
      %1314 = vmatprep.subr.mxu0 0.0
      %1315 = vmatpush1.msra.mxu0 0.0
      %1316 = vmatprep.subr.mxu0 0.0
      %1317 = vmatpush1.msra.mxu0 0.0
      %1318 = vmatprep.subr.mxu0 0.0
      %1319 = vmatpush1.msra.mxu0 0.0
      %1320 = vmatprep.subr.mxu0 0.0
      %1321 = vmatpush1.msra.mxu0 0.0
      %1322 = vmatprep.subr.mxu0 0.0
      %1323 = vmatpush1.msra.mxu0 0.0
      %1324 = vmatprep.subr.mxu0 0.0
      %1325 = vmatpush1.msra.mxu0 0.0
      %1326 = vmatprep.subr.mxu0 0.0
      %1327 = vmatpush1.msra.mxu0 0.0
      %1328 = vmatprep.subr.mxu0 0.0
      %1329 = vmatpush1.msra.mxu0 0.0
      %1330 = vmatprep.subr.mxu0 0.0
      %1331 = vmatpush1.msra.mxu0 0.0
      %1332 = vmatprep.subr.mxu0 0.0
      %1333 = vmatpush1.msra.mxu0 0.0
      %1334 = vmatprep.subr.mxu0 0.0
      %1335 = vmatpush1.msra.mxu0 0.0
      %1336 = vmatprep.mubr.f32.mxu0 0.0
      %1337 = vmatmul.mubr.f32.gmra.mrb[0].mxu0 %v1267
      %v1338 = vpop.f32.mrb[0].mxu0
      %v1339 = vadd.f32 %v752, %v1338
      %v1340 = vpop.f32.mrb[0].mxu0
      %1341 = vmatprep.mubr.f32.mxu0 0.0
      %1342 = vmatmul.mubr.f32.gmra.mrb[0].mxu0 %v1270
      %v1343 = vpop.f32.mrb[0].mxu0
      %v1344 = vadd.f32 %v757, %v1343
      %v1345 = vpop.f32.mrb[0].mxu0
      %1346 = vdwg.mxu0
      %v1348 = vsel %vm860, %v515, 0
      %v1351 = vsel %vm860, %v516, 0
      %1353 = vmatprep.subr.mxu0 0.0
      %1354 = vmatpush1.msra.mxu0 %v762
      %1355 = vmatprep.subr.mxu0 0.0
      %1356 = vmatpush1.msra.mxu0 %v767
      %1357 = vmatprep.subr.mxu0 0.0
      %1358 = vmatpush1.msra.mxu0 0.0
      %1359 = vmatprep.subr.mxu0 0.0
      %1360 = vmatpush1.msra.mxu0 0.0
      %1361 = vmatprep.subr.mxu0 0.0
      %1362 = vmatpush1.msra.mxu0 0.0
      %1363 = vmatprep.subr.mxu0 0.0
      %1364 = vmatpush1.msra.mxu0 0.0
      %1365 = vmatprep.subr.mxu0 0.0
      %1366 = vmatpush1.msra.mxu0 0.0
      %1367 = vmatprep.subr.mxu0 0.0
      %1368 = vmatpush1.msra.mxu0 0.0
      %1369 = vmatprep.subr.mxu0 0.0
      %1370 = vmatpush1.msra.mxu0 0.0
      %1371 = vmatprep.subr.mxu0 0.0
      %1372 = vmatpush1.msra.mxu0 0.0
      %1373 = vmatprep.subr.mxu0 0.0
      %1374 = vmatpush1.msra.mxu0 0.0
      %1375 = vmatprep.subr.mxu0 0.0
      %1376 = vmatpush1.msra.mxu0 0.0
      %1377 = vmatprep.subr.mxu0 0.0
      %1378 = vmatpush1.msra.mxu0 0.0
      %1379 = vmatprep.subr.mxu0 0.0
      %1380 = vmatpush1.msra.mxu0 0.0
      %1381 = vmatprep.subr.mxu0 0.0
      %1382 = vmatpush1.msra.mxu0 0.0
      %1383 = vmatprep.subr.mxu0 0.0
      %1384 = vmatpush1.msra.mxu0 0.0
      %1385 = vmatprep.subr.mxu0 0.0
      %1386 = vmatpush1.msra.mxu0 0.0
      %1387 = vmatprep.subr.mxu0 0.0
      %1388 = vmatpush1.msra.mxu0 0.0
      %1389 = vmatprep.subr.mxu0 0.0
      %1390 = vmatpush1.msra.mxu0 0.0
      %1391 = vmatprep.subr.mxu0 0.0
      %1392 = vmatpush1.msra.mxu0 0.0
      %1393 = vmatprep.subr.mxu0 0.0
      %1394 = vmatpush1.msra.mxu0 0.0
      %1395 = vmatprep.subr.mxu0 0.0
      %1396 = vmatpush1.msra.mxu0 0.0
      %1397 = vmatprep.subr.mxu0 0.0
      %1398 = vmatpush1.msra.mxu0 0.0
      %1399 = vmatprep.subr.mxu0 0.0
      %1400 = vmatpush1.msra.mxu0 0.0
      %1401 = vmatprep.subr.mxu0 0.0
      %1402 = vmatpush1.msra.mxu0 0.0
      %1403 = vmatprep.subr.mxu0 0.0
      %1404 = vmatpush1.msra.mxu0 0.0
      %1405 = vmatprep.subr.mxu0 0.0
      %1406 = vmatpush1.msra.mxu0 0.0
      %1407 = vmatprep.subr.mxu0 0.0
      %1408 = vmatpush1.msra.mxu0 0.0
      %1409 = vmatprep.subr.mxu0 0.0
      %1410 = vmatpush1.msra.mxu0 0.0
      %1411 = vmatprep.subr.mxu0 0.0
      %1412 = vmatpush1.msra.mxu0 0.0
      %1413 = vmatprep.subr.mxu0 0.0
      %1414 = vmatpush1.msra.mxu0 0.0
      %1415 = vmatprep.subr.mxu0 0.0
      %1416 = vmatpush1.msra.mxu0 0.0
      %1417 = vmatprep.mubr.f32.mxu0 0.0
      %1418 = vmatmul.mubr.f32.gmra.mrb[0].mxu0 %v1348
      %v1419 = vpop.f32.mrb[0].mxu0
      %v1420 = vadd.f32 %v762, %v1419
      %v1421 = vpop.f32.mrb[0].mxu0
      %1422 = vmatprep.mubr.f32.mxu0 0.0
      %1423 = vmatmul.mubr.f32.gmra.mrb[0].mxu0 %v1351
      %v1424 = vpop.f32.mrb[0].mxu0
      %v1425 = vadd.f32 %v767, %v1424
      %v1426 = vpop.f32.mrb[0].mxu0
      %1427 = vdwg.mxu0
      %v1429 = vsel %vm860, %v517, 0
      %v1432 = vsel %vm860, %v518, 0
      %1434 = vmatprep.subr.mxu0 0.0
      %1435 = vmatpush1.msra.mxu0 %v772
      %1436 = vmatprep.subr.mxu0 0.0
      %1437 = vmatpush1.msra.mxu0 %v777
      %1438 = vmatprep.subr.mxu0 0.0
      %1439 = vmatpush1.msra.mxu0 0.0
      %1440 = vmatprep.subr.mxu0 0.0
      %1441 = vmatpush1.msra.mxu0 0.0
      %1442 = vmatprep.subr.mxu0 0.0
      %1443 = vmatpush1.msra.mxu0 0.0
      %1444 = vmatprep.subr.mxu0 0.0
      %1445 = vmatpush1.msra.mxu0 0.0
      %1446 = vmatprep.subr.mxu0 0.0
      %1447 = vmatpush1.msra.mxu0 0.0
      %1448 = vmatprep.subr.mxu0 0.0
      %1449 = vmatpush1.msra.mxu0 0.0
      %1450 = vmatprep.subr.mxu0 0.0
      %1451 = vmatpush1.msra.mxu0 0.0
      %1452 = vmatprep.subr.mxu0 0.0
      %1453 = vmatpush1.msra.mxu0 0.0
      %1454 = vmatprep.subr.mxu0 0.0
      %1455 = vmatpush1.msra.mxu0 0.0
      %1456 = vmatprep.subr.mxu0 0.0
      %1457 = vmatpush1.msra.mxu0 0.0
      %1458 = vmatprep.subr.mxu0 0.0
      %1459 = vmatpush1.msra.mxu0 0.0
      %1460 = vmatprep.subr.mxu0 0.0
      %1461 = vmatpush1.msra.mxu0 0.0
      %1462 = vmatprep.subr.mxu0 0.0
      %1463 = vmatpush1.msra.mxu0 0.0
      %1464 = vmatprep.subr.mxu0 0.0
      %1465 = vmatpush1.msra.mxu0 0.0
      %1466 = vmatprep.subr.mxu0 0.0
      %1467 = vmatpush1.msra.mxu0 0.0
      %1468 = vmatprep.subr.mxu0 0.0
      %1469 = vmatpush1.msra.mxu0 0.0
      %1470 = vmatprep.subr.mxu0 0.0
      %1471 = vmatpush1.msra.mxu0 0.0
      %1472 = vmatprep.subr.mxu0 0.0
      %1473 = vmatpush1.msra.mxu0 0.0
      %1474 = vmatprep.subr.mxu0 0.0
      %1475 = vmatpush1.msra.mxu0 0.0
      %1476 = vmatprep.subr.mxu0 0.0
      %1477 = vmatpush1.msra.mxu0 0.0
      %1478 = vmatprep.subr.mxu0 0.0
      %1479 = vmatpush1.msra.mxu0 0.0
      %1480 = vmatprep.subr.mxu0 0.0
      %1481 = vmatpush1.msra.mxu0 0.0
      %1482 = vmatprep.subr.mxu0 0.0
      %1483 = vmatpush1.msra.mxu0 0.0
      %1484 = vmatprep.subr.mxu0 0.0
      %1485 = vmatpush1.msra.mxu0 0.0
      %1486 = vmatprep.subr.mxu0 0.0
      %1487 = vmatpush1.msra.mxu0 0.0
      %1488 = vmatprep.subr.mxu0 0.0
      %1489 = vmatpush1.msra.mxu0 0.0
      %1490 = vmatprep.subr.mxu0 0.0
      %1491 = vmatpush1.msra.mxu0 0.0
      %1492 = vmatprep.subr.mxu0 0.0
      %1493 = vmatpush1.msra.mxu0 0.0
      %1494 = vmatprep.subr.mxu0 0.0
      %1495 = vmatpush1.msra.mxu0 0.0
      %1496 = vmatprep.subr.mxu0 0.0
      %1497 = vmatpush1.msra.mxu0 0.0
      %1498 = vmatprep.mubr.f32.mxu0 0.0
      %1499 = vmatmul.mubr.f32.gmra.mrb[0].mxu0 %v1429
      %v1500 = vpop.f32.mrb[0].mxu0
      %v1501 = vadd.f32 %v772, %v1500
      %v1502 = vpop.f32.mrb[0].mxu0
      %1503 = vmatprep.mubr.f32.mxu0 0.0
      %1504 = vmatmul.mubr.f32.gmra.mrb[0].mxu0 %v1432
      %v1505 = vpop.f32.mrb[0].mxu0
      %v1506 = vadd.f32 %v777, %v1505
      %v1507 = vpop.f32.mrb[0].mxu0
      %1508 = vdwg.mxu0
      %v1510 = vsel %vm860, %v519, 0
      %v1513 = vsel %vm860, %v520, 0
      %1515 = vmatprep.subr.mxu0 0.0
      %1516 = vmatpush1.msra.mxu0 %v782
      %1517 = vmatprep.subr.mxu0 0.0
      %1518 = vmatpush1.msra.mxu0 %v787
      %1519 = vmatprep.subr.mxu0 0.0
      %1520 = vmatpush1.msra.mxu0 0.0
      %1521 = vmatprep.subr.mxu0 0.0
      %1522 = vmatpush1.msra.mxu0 0.0
      %1523 = vmatprep.subr.mxu0 0.0
      %1524 = vmatpush1.msra.mxu0 0.0
      %1525 = vmatprep.subr.mxu0 0.0
      %1526 = vmatpush1.msra.mxu0 0.0
      %1527 = vmatprep.subr.mxu0 0.0
      %1528 = vmatpush1.msra.mxu0 0.0
      %1529 = vmatprep.subr.mxu0 0.0
      %1530 = vmatpush1.msra.mxu0 0.0
      %1531 = vmatprep.subr.mxu0 0.0
      %1532 = vmatpush1.msra.mxu0 0.0
      %1533 = vmatprep.subr.mxu0 0.0
      %1534 = vmatpush1.msra.mxu0 0.0
      %1535 = vmatprep.subr.mxu0 0.0
      %1536 = vmatpush1.msra.mxu0 0.0
      %1537 = vmatprep.subr.mxu0 0.0
      %1538 = vmatpush1.msra.mxu0 0.0
      %1539 = vmatprep.subr.mxu0 0.0
      %1540 = vmatpush1.msra.mxu0 0.0
      %1541 = vmatprep.subr.mxu0 0.0
      %1542 = vmatpush1.msra.mxu0 0.0
      %1543 = vmatprep.subr.mxu0 0.0
      %1544 = vmatpush1.msra.mxu0 0.0
      %1545 = vmatprep.subr.mxu0 0.0
      %1546 = vmatpush1.msra.mxu0 0.0
      %1547 = vmatprep.subr.mxu0 0.0
      %1548 = vmatpush1.msra.mxu0 0.0
      %1549 = vmatprep.subr.mxu0 0.0
      %1550 = vmatpush1.msra.mxu0 0.0
      %1551 = vmatprep.subr.mxu0 0.0
      %1552 = vmatpush1.msra.mxu0 0.0
      %1553 = vmatprep.subr.mxu0 0.0
      %1554 = vmatpush1.msra.mxu0 0.0
      %1555 = vmatprep.subr.mxu0 0.0
      %1556 = vmatpush1.msra.mxu0 0.0
      %1557 = vmatprep.subr.mxu0 0.0
      %1558 = vmatpush1.msra.mxu0 0.0
      %1559 = vmatprep.subr.mxu0 0.0
      %1560 = vmatpush1.msra.mxu0 0.0
      %1561 = vmatprep.subr.mxu0 0.0
      %1562 = vmatpush1.msra.mxu0 0.0
      %1563 = vmatprep.subr.mxu0 0.0
      %1564 = vmatpush1.msra.mxu0 0.0
      %1565 = vmatprep.subr.mxu0 0.0
      %1566 = vmatpush1.msra.mxu0 0.0
      %1567 = vmatprep.subr.mxu0 0.0
      %1568 = vmatpush1.msra.mxu0 0.0
      %1569 = vmatprep.subr.mxu0 0.0
      %1570 = vmatpush1.msra.mxu0 0.0
      %1571 = vmatprep.subr.mxu0 0.0
      %1572 = vmatpush1.msra.mxu0 0.0
      %1573 = vmatprep.subr.mxu0 0.0
      %1574 = vmatpush1.msra.mxu0 0.0
      %1575 = vmatprep.subr.mxu0 0.0
      %1576 = vmatpush1.msra.mxu0 0.0
      %1577 = vmatprep.subr.mxu0 0.0
      %1578 = vmatpush1.msra.mxu0 0.0
      %1579 = vmatprep.mubr.f32.mxu0 0.0
      %1580 = vmatmul.mubr.f32.gmra.mrb[0].mxu0 %v1510
      %v1581 = vpop.f32.mrb[0].mxu0
      %v1582 = vadd.f32 %v782, %v1581
      %v1583 = vpop.f32.mrb[0].mxu0
      %1584 = vmatprep.mubr.f32.mxu0 0.0
      %1585 = vmatmul.mubr.f32.gmra.mrb[0].mxu0 %v1513
      %v1586 = vpop.f32.mrb[0].mxu0
      %v1587 = vadd.f32 %v787, %v1586
      %v1588 = vpop.f32.mrb[0].mxu0
      %1589 = vdwg.mxu0
      %v1591 = vsel %vm860, %v521, 0
      %v1594 = vsel %vm860, %v522, 0
      %1596 = vmatprep.subr.mxu0 0.0
      %1597 = vmatpush1.msra.mxu0 %v792
      %1598 = vmatprep.subr.mxu0 0.0
      %1599 = vmatpush1.msra.mxu0 %v797
      %1600 = vmatprep.subr.mxu0 0.0
      %1601 = vmatpush1.msra.mxu0 0.0
      %1602 = vmatprep.subr.mxu0 0.0
      %1603 = vmatpush1.msra.mxu0 0.0
      %1604 = vmatprep.subr.mxu0 0.0
      %1605 = vmatpush1.msra.mxu0 0.0
      %1606 = vmatprep.subr.mxu0 0.0
      %1607 = vmatpush1.msra.mxu0 0.0
      %1608 = vmatprep.subr.mxu0 0.0
      %1609 = vmatpush1.msra.mxu0 0.0
      %1610 = vmatprep.subr.mxu0 0.0
      %1611 = vmatpush1.msra.mxu0 0.0
      %1612 = vmatprep.subr.mxu0 0.0
      %1613 = vmatpush1.msra.mxu0 0.0
      %1614 = vmatprep.subr.mxu0 0.0
      %1615 = vmatpush1.msra.mxu0 0.0
      %1616 = vmatprep.subr.mxu0 0.0
      %1617 = vmatpush1.msra.mxu0 0.0
      %1618 = vmatprep.subr.mxu0 0.0
      %1619 = vmatpush1.msra.mxu0 0.0
      %1620 = vmatprep.subr.mxu0 0.0
      %1621 = vmatpush1.msra.mxu0 0.0
      %1622 = vmatprep.subr.mxu0 0.0
      %1623 = vmatpush1.msra.mxu0 0.0
      %1624 = vmatprep.subr.mxu0 0.0
      %1625 = vmatpush1.msra.mxu0 0.0
      %1626 = vmatprep.subr.mxu0 0.0
      %1627 = vmatpush1.msra.mxu0 0.0
      %1628 = vmatprep.subr.mxu0 0.0
      %1629 = vmatpush1.msra.mxu0 0.0
      %1630 = vmatprep.subr.mxu0 0.0
      %1631 = vmatpush1.msra.mxu0 0.0
      %1632 = vmatprep.subr.mxu0 0.0
      %1633 = vmatpush1.msra.mxu0 0.0
      %1634 = vmatprep.subr.mxu0 0.0
      %1635 = vmatpush1.msra.mxu0 0.0
      %1636 = vmatprep.subr.mxu0 0.0
      %1637 = vmatpush1.msra.mxu0 0.0
      %1638 = vmatprep.subr.mxu0 0.0
      %1639 = vmatpush1.msra.mxu0 0.0
      %1640 = vmatprep.subr.mxu0 0.0
      %1641 = vmatpush1.msra.mxu0 0.0
      %1642 = vmatprep.subr.mxu0 0.0
      %1643 = vmatpush1.msra.mxu0 0.0
      %1644 = vmatprep.subr.mxu0 0.0
      %1645 = vmatpush1.msra.mxu0 0.0
      %1646 = vmatprep.subr.mxu0 0.0
      %1647 = vmatpush1.msra.mxu0 0.0
      %1648 = vmatprep.subr.mxu0 0.0
      %1649 = vmatpush1.msra.mxu0 0.0
      %1650 = vmatprep.subr.mxu0 0.0
      %1651 = vmatpush1.msra.mxu0 0.0
      %1652 = vmatprep.subr.mxu0 0.0
      %1653 = vmatpush1.msra.mxu0 0.0
      %1654 = vmatprep.subr.mxu0 0.0
      %1655 = vmatpush1.msra.mxu0 0.0
      %1656 = vmatprep.subr.mxu0 0.0
      %1657 = vmatpush1.msra.mxu0 0.0
      %1658 = vmatprep.subr.mxu0 0.0
      %1659 = vmatpush1.msra.mxu0 0.0
      %1660 = vmatprep.mubr.f32.mxu0 0.0
      %1661 = vmatmul.mubr.f32.gmra.mrb[0].mxu0 %v1591
      %v1662 = vpop.f32.mrb[0].mxu0
      %v1663 = vadd.f32 %v792, %v1662
      %v1664 = vpop.f32.mrb[0].mxu0
      %1665 = vmatprep.mubr.f32.mxu0 0.0
      %1666 = vmatmul.mubr.f32.gmra.mrb[0].mxu0 %v1594
      %v1667 = vpop.f32.mrb[0].mxu0
      %v1668 = vadd.f32 %v797, %v1667
      %v1669 = vpop.f32.mrb[0].mxu0
      %1670 = vdwg.mxu0
      %v1672 = vsel %vm860, %v523, 0
      %v1675 = vsel %vm860, %v524, 0
      %1677 = vmatprep.subr.mxu0 0.0
      %1678 = vmatpush1.msra.mxu0 %v802
      %1679 = vmatprep.subr.mxu0 0.0
      %1680 = vmatpush1.msra.mxu0 %v807
      %1681 = vmatprep.subr.mxu0 0.0
      %1682 = vmatpush1.msra.mxu0 0.0
      %1683 = vmatprep.subr.mxu0 0.0
      %1684 = vmatpush1.msra.mxu0 0.0
      %1685 = vmatprep.subr.mxu0 0.0
      %1686 = vmatpush1.msra.mxu0 0.0
      %1687 = vmatprep.subr.mxu0 0.0
      %1688 = vmatpush1.msra.mxu0 0.0
      %1689 = vmatprep.subr.mxu0 0.0
      %1690 = vmatpush1.msra.mxu0 0.0
      %1691 = vmatprep.subr.mxu0 0.0
      %1692 = vmatpush1.msra.mxu0 0.0
      %1693 = vmatprep.subr.mxu0 0.0
      %1694 = vmatpush1.msra.mxu0 0.0
      %1695 = vmatprep.subr.mxu0 0.0
      %1696 = vmatpush1.msra.mxu0 0.0
      %1697 = vmatprep.subr.mxu0 0.0
      %1698 = vmatpush1.msra.mxu0 0.0
      %1699 = vmatprep.subr.mxu0 0.0
      %1700 = vmatpush1.msra.mxu0 0.0
      %1701 = vmatprep.subr.mxu0 0.0
      %1702 = vmatpush1.msra.mxu0 0.0
      %1703 = vmatprep.subr.mxu0 0.0
      %1704 = vmatpush1.msra.mxu0 0.0
      %1705 = vmatprep.subr.mxu0 0.0
      %1706 = vmatpush1.msra.mxu0 0.0
      %1707 = vmatprep.subr.mxu0 0.0
      %1708 = vmatpush1.msra.mxu0 0.0
      %1709 = vmatprep.subr.mxu0 0.0
      %1710 = vmatpush1.msra.mxu0 0.0
      %1711 = vmatprep.subr.mxu0 0.0
      %1712 = vmatpush1.msra.mxu0 0.0
      %1713 = vmatprep.subr.mxu0 0.0
      %1714 = vmatpush1.msra.mxu0 0.0
      %1715 = vmatprep.subr.mxu0 0.0
      %1716 = vmatpush1.msra.mxu0 0.0
      %1717 = vmatprep.subr.mxu0 0.0
      %1718 = vmatpush1.msra.mxu0 0.0
      %1719 = vmatprep.subr.mxu0 0.0
      %1720 = vmatpush1.msra.mxu0 0.0
      %1721 = vmatprep.subr.mxu0 0.0
      %1722 = vmatpush1.msra.mxu0 0.0
      %1723 = vmatprep.subr.mxu0 0.0
      %1724 = vmatpush1.msra.mxu0 0.0
      %1725 = vmatprep.subr.mxu0 0.0
      %1726 = vmatpush1.msra.mxu0 0.0
      %1727 = vmatprep.subr.mxu0 0.0
      %1728 = vmatpush1.msra.mxu0 0.0
      %1729 = vmatprep.subr.mxu0 0.0
      %1730 = vmatpush1.msra.mxu0 0.0
      %1731 = vmatprep.subr.mxu0 0.0
      %1732 = vmatpush1.msra.mxu0 0.0
      %1733 = vmatprep.subr.mxu0 0.0
      %1734 = vmatpush1.msra.mxu0 0.0
      %1735 = vmatprep.subr.mxu0 0.0
      %1736 = vmatpush1.msra.mxu0 0.0
      %1737 = vmatprep.subr.mxu0 0.0
      %1738 = vmatpush1.msra.mxu0 0.0
      %1739 = vmatprep.subr.mxu0 0.0
      %1740 = vmatpush1.msra.mxu0 0.0
      %1741 = vmatprep.mubr.f32.mxu0 0.0
      %1742 = vmatmul.mubr.f32.gmra.mrb[0].mxu0 %v1672
      %v1743 = vpop.f32.mrb[0].mxu0
      %v1744 = vadd.f32 %v802, %v1743
      %v1745 = vpop.f32.mrb[0].mxu0
      %1746 = vmatprep.mubr.f32.mxu0 0.0
      %1747 = vmatmul.mubr.f32.gmra.mrb[0].mxu0 %v1675
      %v1748 = vpop.f32.mrb[0].mxu0
      %v1749 = vadd.f32 %v807, %v1748
      %v1750 = vpop.f32.mrb[0].mxu0
      %1751 = vdwg.mxu0
      %v1753 = vsel %vm860, %v525, 0
      %v1756 = vsel %vm860, %v526, 0
      %1758 = vmatprep.subr.mxu0 0.0
      %1759 = vmatpush1.msra.mxu0 %v812
      %1760 = vmatprep.subr.mxu0 0.0
      %1761 = vmatpush1.msra.mxu0 %v817
      %1762 = vmatprep.subr.mxu0 0.0
      %1763 = vmatpush1.msra.mxu0 0.0
      %1764 = vmatprep.subr.mxu0 0.0
      %1765 = vmatpush1.msra.mxu0 0.0
      %1766 = vmatprep.subr.mxu0 0.0
      %1767 = vmatpush1.msra.mxu0 0.0
      %1768 = vmatprep.subr.mxu0 0.0
      %1769 = vmatpush1.msra.mxu0 0.0
      %1770 = vmatprep.subr.mxu0 0.0
      %1771 = vmatpush1.msra.mxu0 0.0
      %1772 = vmatprep.subr.mxu0 0.0
      %1773 = vmatpush1.msra.mxu0 0.0
      %1774 = vmatprep.subr.mxu0 0.0
      %1775 = vmatpush1.msra.mxu0 0.0
      %1776 = vmatprep.subr.mxu0 0.0
      %1777 = vmatpush1.msra.mxu0 0.0
      %1778 = vmatprep.subr.mxu0 0.0
      %1779 = vmatpush1.msra.mxu0 0.0
      %1780 = vmatprep.subr.mxu0 0.0
      %1781 = vmatpush1.msra.mxu0 0.0
      %1782 = vmatprep.subr.mxu0 0.0
      %1783 = vmatpush1.msra.mxu0 0.0
      %1784 = vmatprep.subr.mxu0 0.0
      %1785 = vmatpush1.msra.mxu0 0.0
      %1786 = vmatprep.subr.mxu0 0.0
      %1787 = vmatpush1.msra.mxu0 0.0
      %1788 = vmatprep.subr.mxu0 0.0
      %1789 = vmatpush1.msra.mxu0 0.0
      %1790 = vmatprep.subr.mxu0 0.0
      %1791 = vmatpush1.msra.mxu0 0.0
      %1792 = vmatprep.subr.mxu0 0.0
      %1793 = vmatpush1.msra.mxu0 0.0
      %1794 = vmatprep.subr.mxu0 0.0
      %1795 = vmatpush1.msra.mxu0 0.0
      %1796 = vmatprep.subr.mxu0 0.0
      %1797 = vmatpush1.msra.mxu0 0.0
      %1798 = vmatprep.subr.mxu0 0.0
      %1799 = vmatpush1.msra.mxu0 0.0
      %1800 = vmatprep.subr.mxu0 0.0
      %1801 = vmatpush1.msra.mxu0 0.0
      %1802 = vmatprep.subr.mxu0 0.0
      %1803 = vmatpush1.msra.mxu0 0.0
      %1804 = vmatprep.subr.mxu0 0.0
      %1805 = vmatpush1.msra.mxu0 0.0
      %1806 = vmatprep.subr.mxu0 0.0
      %1807 = vmatpush1.msra.mxu0 0.0
      %1808 = vmatprep.subr.mxu0 0.0
      %1809 = vmatpush1.msra.mxu0 0.0
      %1810 = vmatprep.subr.mxu0 0.0
      %1811 = vmatpush1.msra.mxu0 0.0
      %1812 = vmatprep.subr.mxu0 0.0
      %1813 = vmatpush1.msra.mxu0 0.0
      %1814 = vmatprep.subr.mxu0 0.0
      %1815 = vmatpush1.msra.mxu0 0.0
      %1816 = vmatprep.subr.mxu0 0.0
      %1817 = vmatpush1.msra.mxu0 0.0
      %1818 = vmatprep.subr.mxu0 0.0
      %1819 = vmatpush1.msra.mxu0 0.0
      %1820 = vmatprep.subr.mxu0 0.0
      %1821 = vmatpush1.msra.mxu0 0.0
      %1822 = vmatprep.mubr.f32.mxu0 0.0
      %1823 = vmatmul.mubr.f32.gmra.mrb[0].mxu0 %v1753
      %v1824 = vpop.f32.mrb[0].mxu0
      %v1825 = vadd.f32 %v812, %v1824
      %v1826 = vpop.f32.mrb[0].mxu0
      %1827 = vmatprep.mubr.f32.mxu0 0.0
      %1828 = vmatmul.mubr.f32.gmra.mrb[0].mxu0 %v1756
      %v1829 = vpop.f32.mrb[0].mxu0
      %v1830 = vadd.f32 %v817, %v1829
      %v1831 = vpop.f32.mrb[0].mxu0
      %1832 = vdwg.mxu0
      %v1834 = vsel %vm860, %v527, 0
      %v1837 = vsel %vm860, %v528, 0
      %1839 = vmatprep.subr.mxu0 0.0
      %1840 = vmatpush1.msra.mxu0 %v822
      %1841 = vmatprep.subr.mxu0 0.0
      %1842 = vmatpush1.msra.mxu0 %v827
      %1843 = vmatprep.subr.mxu0 0.0
      %1844 = vmatpush1.msra.mxu0 0.0
      %1845 = vmatprep.subr.mxu0 0.0
      %1846 = vmatpush1.msra.mxu0 0.0
      %1847 = vmatprep.subr.mxu0 0.0
      %1848 = vmatpush1.msra.mxu0 0.0
      %1849 = vmatprep.subr.mxu0 0.0
      %1850 = vmatpush1.msra.mxu0 0.0
      %1851 = vmatprep.subr.mxu0 0.0
      %1852 = vmatpush1.msra.mxu0 0.0
      %1853 = vmatprep.subr.mxu0 0.0
      %1854 = vmatpush1.msra.mxu0 0.0
      %1855 = vmatprep.subr.mxu0 0.0
      %1856 = vmatpush1.msra.mxu0 0.0
      %1857 = vmatprep.subr.mxu0 0.0
      %1858 = vmatpush1.msra.mxu0 0.0
      %1859 = vmatprep.subr.mxu0 0.0
      %1860 = vmatpush1.msra.mxu0 0.0
      %1861 = vmatprep.subr.mxu0 0.0
      %1862 = vmatpush1.msra.mxu0 0.0
      %1863 = vmatprep.subr.mxu0 0.0
      %1864 = vmatpush1.msra.mxu0 0.0
      %1865 = vmatprep.subr.mxu0 0.0
      %1866 = vmatpush1.msra.mxu0 0.0
      %1867 = vmatprep.subr.mxu0 0.0
      %1868 = vmatpush1.msra.mxu0 0.0
      %1869 = vmatprep.subr.mxu0 0.0
      %1870 = vmatpush1.msra.mxu0 0.0
      %1871 = vmatprep.subr.mxu0 0.0
      %1872 = vmatpush1.msra.mxu0 0.0
      %1873 = vmatprep.subr.mxu0 0.0
      %1874 = vmatpush1.msra.mxu0 0.0
      %1875 = vmatprep.subr.mxu0 0.0
      %1876 = vmatpush1.msra.mxu0 0.0
      %1877 = vmatprep.subr.mxu0 0.0
      %1878 = vmatpush1.msra.mxu0 0.0
      %1879 = vmatprep.subr.mxu0 0.0
      %1880 = vmatpush1.msra.mxu0 0.0
      %1881 = vmatprep.subr.mxu0 0.0
      %1882 = vmatpush1.msra.mxu0 0.0
      %1883 = vmatprep.subr.mxu0 0.0
      %1884 = vmatpush1.msra.mxu0 0.0
      %1885 = vmatprep.subr.mxu0 0.0
      %1886 = vmatpush1.msra.mxu0 0.0
      %1887 = vmatprep.subr.mxu0 0.0
      %1888 = vmatpush1.msra.mxu0 0.0
      %1889 = vmatprep.subr.mxu0 0.0
      %1890 = vmatpush1.msra.mxu0 0.0
      %1891 = vmatprep.subr.mxu0 0.0
      %1892 = vmatpush1.msra.mxu0 0.0
      %1893 = vmatprep.subr.mxu0 0.0
      %1894 = vmatpush1.msra.mxu0 0.0
      %1895 = vmatprep.subr.mxu0 0.0
      %1896 = vmatpush1.msra.mxu0 0.0
      %1897 = vmatprep.subr.mxu0 0.0
      %1898 = vmatpush1.msra.mxu0 0.0
      %1899 = vmatprep.subr.mxu0 0.0
      %1900 = vmatpush1.msra.mxu0 0.0
      %1901 = vmatprep.subr.mxu0 0.0
      %1902 = vmatpush1.msra.mxu0 0.0
      %1903 = vmatprep.mubr.f32.mxu0 0.0
      %1904 = vmatmul.mubr.f32.gmra.mrb[0].mxu0 %v1834
      %v1905 = vpop.f32.mrb[0].mxu0
      %v1906 = vadd.f32 %v822, %v1905
      %v1907 = vpop.f32.mrb[0].mxu0
      %1908 = vmatprep.mubr.f32.mxu0 0.0
      %1909 = vmatmul.mubr.f32.gmra.mrb[0].mxu0 %v1837
      %v1910 = vpop.f32.mrb[0].mxu0
      %v1911 = vadd.f32 %v827, %v1910
      %v1912 = vpop.f32.mrb[0].mxu0
      %1913 = vdwg.mxu0
      %v1915 = vsel %vm860, %v529, 0
      %v1918 = vsel %vm860, %v530, 0
      %1920 = vmatprep.subr.mxu0 0.0
      %1921 = vmatpush1.msra.mxu0 %v832
      %1922 = vmatprep.subr.mxu0 0.0
      %1923 = vmatpush1.msra.mxu0 %v837
      %1924 = vmatprep.subr.mxu0 0.0
      %1925 = vmatpush1.msra.mxu0 0.0
      %1926 = vmatprep.subr.mxu0 0.0
      %1927 = vmatpush1.msra.mxu0 0.0
      %1928 = vmatprep.subr.mxu0 0.0
      %1929 = vmatpush1.msra.mxu0 0.0
      %1930 = vmatprep.subr.mxu0 0.0
      %1931 = vmatpush1.msra.mxu0 0.0
      %1932 = vmatprep.subr.mxu0 0.0
      %1933 = vmatpush1.msra.mxu0 0.0
      %1934 = vmatprep.subr.mxu0 0.0
      %1935 = vmatpush1.msra.mxu0 0.0
      %1936 = vmatprep.subr.mxu0 0.0
      %1937 = vmatpush1.msra.mxu0 0.0
      %1938 = vmatprep.subr.mxu0 0.0
      %1939 = vmatpush1.msra.mxu0 0.0
      %1940 = vmatprep.subr.mxu0 0.0
      %1941 = vmatpush1.msra.mxu0 0.0
      %1942 = vmatprep.subr.mxu0 0.0
      %1943 = vmatpush1.msra.mxu0 0.0
      %1944 = vmatprep.subr.mxu0 0.0
      %1945 = vmatpush1.msra.mxu0 0.0
      %1946 = vmatprep.subr.mxu0 0.0
      %1947 = vmatpush1.msra.mxu0 0.0
      %1948 = vmatprep.subr.mxu0 0.0
      %1949 = vmatpush1.msra.mxu0 0.0
      %1950 = vmatprep.subr.mxu0 0.0
      %1951 = vmatpush1.msra.mxu0 0.0
      %1952 = vmatprep.subr.mxu0 0.0
      %1953 = vmatpush1.msra.mxu0 0.0
      %1954 = vmatprep.subr.mxu0 0.0
      %1955 = vmatpush1.msra.mxu0 0.0
      %1956 = vmatprep.subr.mxu0 0.0
      %1957 = vmatpush1.msra.mxu0 0.0
      %1958 = vmatprep.subr.mxu0 0.0
      %1959 = vmatpush1.msra.mxu0 0.0
      %1960 = vmatprep.subr.mxu0 0.0
      %1961 = vmatpush1.msra.mxu0 0.0
      %1962 = vmatprep.subr.mxu0 0.0
      %1963 = vmatpush1.msra.mxu0 0.0
      %1964 = vmatprep.subr.mxu0 0.0
      %1965 = vmatpush1.msra.mxu0 0.0
      %1966 = vmatprep.subr.mxu0 0.0
      %1967 = vmatpush1.msra.mxu0 0.0
      %1968 = vmatprep.subr.mxu0 0.0
      %1969 = vmatpush1.msra.mxu0 0.0
      %1970 = vmatprep.subr.mxu0 0.0
      %1971 = vmatpush1.msra.mxu0 0.0
      %1972 = vmatprep.subr.mxu0 0.0
      %1973 = vmatpush1.msra.mxu0 0.0
      %1974 = vmatprep.subr.mxu0 0.0
      %1975 = vmatpush1.msra.mxu0 0.0
      %1976 = vmatprep.subr.mxu0 0.0
      %1977 = vmatpush1.msra.mxu0 0.0
      %1978 = vmatprep.subr.mxu0 0.0
      %1979 = vmatpush1.msra.mxu0 0.0
      %1980 = vmatprep.subr.mxu0 0.0
      %1981 = vmatpush1.msra.mxu0 0.0
      %1982 = vmatprep.subr.mxu0 0.0
      %1983 = vmatpush1.msra.mxu0 0.0
      %1984 = vmatprep.mubr.f32.mxu0 0.0
      %1985 = vmatmul.mubr.f32.gmra.mrb[0].mxu0 %v1915
      %v1986 = vpop.f32.mrb[0].mxu0
      %v1987 = vadd.f32 %v832, %v1986
      %v1988 = vpop.f32.mrb[0].mxu0
      %1989 = vmatprep.mubr.f32.mxu0 0.0
      %1990 = vmatmul.mubr.f32.gmra.mrb[0].mxu0 %v1918
      %v1991 = vpop.f32.mrb[0].mxu0
      %v1992 = vadd.f32 %v837, %v1991
      %v1993 = vpop.f32.mrb[0].mxu0
      %1994 = vdwg.mxu0
      %v1996 = vsel %vm860, %v531, 0
      %v1999 = vsel %vm860, %v532, 0
      %2001 = vmatprep.subr.mxu0 0.0
      %2002 = vmatpush1.msra.mxu0 %v842
      %2003 = vmatprep.subr.mxu0 0.0
      %2004 = vmatpush1.msra.mxu0 %v847
      %2005 = vmatprep.subr.mxu0 0.0
      %2006 = vmatpush1.msra.mxu0 0.0
      %2007 = vmatprep.subr.mxu0 0.0
      %2008 = vmatpush1.msra.mxu0 0.0
      %2009 = vmatprep.subr.mxu0 0.0
      %2010 = vmatpush1.msra.mxu0 0.0
      %2011 = vmatprep.subr.mxu0 0.0
      %2012 = vmatpush1.msra.mxu0 0.0
      %2013 = vmatprep.subr.mxu0 0.0
      %2014 = vmatpush1.msra.mxu0 0.0
      %2015 = vmatprep.subr.mxu0 0.0
      %2016 = vmatpush1.msra.mxu0 0.0
      %2017 = vmatprep.subr.mxu0 0.0
      %2018 = vmatpush1.msra.mxu0 0.0
      %2019 = vmatprep.subr.mxu0 0.0
      %2020 = vmatpush1.msra.mxu0 0.0
      %2021 = vmatprep.subr.mxu0 0.0
      %2022 = vmatpush1.msra.mxu0 0.0
      %2023 = vmatprep.subr.mxu0 0.0
      %2024 = vmatpush1.msra.mxu0 0.0
      %2025 = vmatprep.subr.mxu0 0.0
      %2026 = vmatpush1.msra.mxu0 0.0
      %2027 = vmatprep.subr.mxu0 0.0
      %2028 = vmatpush1.msra.mxu0 0.0
      %2029 = vmatprep.subr.mxu0 0.0
      %2030 = vmatpush1.msra.mxu0 0.0
      %2031 = vmatprep.subr.mxu0 0.0
      %2032 = vmatpush1.msra.mxu0 0.0
      %2033 = vmatprep.subr.mxu0 0.0
      %2034 = vmatpush1.msra.mxu0 0.0
      %2035 = vmatprep.subr.mxu0 0.0
      %2036 = vmatpush1.msra.mxu0 0.0
      %2037 = vmatprep.subr.mxu0 0.0
      %2038 = vmatpush1.msra.mxu0 0.0
      %2039 = vmatprep.subr.mxu0 0.0
      %2040 = vmatpush1.msra.mxu0 0.0
      %2041 = vmatprep.subr.mxu0 0.0
      %2042 = vmatpush1.msra.mxu0 0.0
      %2043 = vmatprep.subr.mxu0 0.0
      %2044 = vmatpush1.msra.mxu0 0.0
      %2045 = vmatprep.subr.mxu0 0.0
      %2046 = vmatpush1.msra.mxu0 0.0
      %2047 = vmatprep.subr.mxu0 0.0
      %2048 = vmatpush1.msra.mxu0 0.0
      %2049 = vmatprep.subr.mxu0 0.0
      %2050 = vmatpush1.msra.mxu0 0.0
      %2051 = vmatprep.subr.mxu0 0.0
      %2052 = vmatpush1.msra.mxu0 0.0
      %2053 = vmatprep.subr.mxu0 0.0
      %2054 = vmatpush1.msra.mxu0 0.0
      %2055 = vmatprep.subr.mxu0 0.0
      %2056 = vmatpush1.msra.mxu0 0.0
      %2057 = vmatprep.subr.mxu0 0.0
      %2058 = vmatpush1.msra.mxu0 0.0
      %2059 = vmatprep.subr.mxu0 0.0
      %2060 = vmatpush1.msra.mxu0 0.0
      %2061 = vmatprep.subr.mxu0 0.0
      %2062 = vmatpush1.msra.mxu0 0.0
      %2063 = vmatprep.subr.mxu0 0.0
      %2064 = vmatpush1.msra.mxu0 0.0
      %2065 = vmatprep.mubr.f32.mxu0 0.0
      %2066 = vmatmul.mubr.f32.gmra.mrb[0].mxu0 %v1996
      %v2067 = vpop.f32.mrb[0].mxu0
      %v2068 = vadd.f32 %v842, %v2067
      %v2069 = vpop.f32.mrb[0].mxu0
      %2070 = vmatprep.mubr.f32.mxu0 0.0
      %2071 = vmatmul.mubr.f32.gmra.mrb[0].mxu0 %v1999
      %v2072 = vpop.f32.mrb[0].mxu0
      %v2073 = vadd.f32 %v847, %v2072
      %v2074 = vpop.f32.mrb[0].mxu0
      %2075 = vdwg.mxu0
      %v2077 = vsel %vm860, %v533, 0
      %v2080 = vsel %vm860, %v534, 0
      %2082 = vmatprep.subr.mxu0 0.0
      %2083 = vmatpush1.msra.mxu0 %v852
      %2084 = vmatprep.subr.mxu0 0.0
      %2085 = vmatpush1.msra.mxu0 %v857
      %2086 = vmatprep.subr.mxu0 0.0
      %2087 = vmatpush1.msra.mxu0 0.0
      %2088 = vmatprep.subr.mxu0 0.0
      %2089 = vmatpush1.msra.mxu0 0.0
      %2090 = vmatprep.subr.mxu0 0.0
      %2091 = vmatpush1.msra.mxu0 0.0
      %2092 = vmatprep.subr.mxu0 0.0
      %2093 = vmatpush1.msra.mxu0 0.0
      %2094 = vmatprep.subr.mxu0 0.0
      %2095 = vmatpush1.msra.mxu0 0.0
      %2096 = vmatprep.subr.mxu0 0.0
      %2097 = vmatpush1.msra.mxu0 0.0
      %2098 = vmatprep.subr.mxu0 0.0
      %2099 = vmatpush1.msra.mxu0 0.0
      %2100 = vmatprep.subr.mxu0 0.0
      %2101 = vmatpush1.msra.mxu0 0.0
      %2102 = vmatprep.subr.mxu0 0.0
      %2103 = vmatpush1.msra.mxu0 0.0
      %2104 = vmatprep.subr.mxu0 0.0
      %2105 = vmatpush1.msra.mxu0 0.0
      %2106 = vmatprep.subr.mxu0 0.0
      %2107 = vmatpush1.msra.mxu0 0.0
      %2108 = vmatprep.subr.mxu0 0.0
      %2109 = vmatpush1.msra.mxu0 0.0
      %2110 = vmatprep.subr.mxu0 0.0
      %2111 = vmatpush1.msra.mxu0 0.0
      %2112 = vmatprep.subr.mxu0 0.0
      %2113 = vmatpush1.msra.mxu0 0.0
      %2114 = vmatprep.subr.mxu0 0.0
      %2115 = vmatpush1.msra.mxu0 0.0
      %2116 = vmatprep.subr.mxu0 0.0
      %2117 = vmatpush1.msra.mxu0 0.0
      %2118 = vmatprep.subr.mxu0 0.0
      %2119 = vmatpush1.msra.mxu0 0.0
      %2120 = vmatprep.subr.mxu0 0.0
      %2121 = vmatpush1.msra.mxu0 0.0
      %2122 = vmatprep.subr.mxu0 0.0
      %2123 = vmatpush1.msra.mxu0 0.0
      %2124 = vmatprep.subr.mxu0 0.0
      %2125 = vmatpush1.msra.mxu0 0.0
      %2126 = vmatprep.subr.mxu0 0.0
      %2127 = vmatpush1.msra.mxu0 0.0
      %2128 = vmatprep.subr.mxu0 0.0
      %2129 = vmatpush1.msra.mxu0 0.0
      %2130 = vmatprep.subr.mxu0 0.0
      %2131 = vmatpush1.msra.mxu0 0.0
      %2132 = vmatprep.subr.mxu0 0.0
      %2133 = vmatpush1.msra.mxu0 0.0
      %2134 = vmatprep.subr.mxu0 0.0
      %2135 = vmatpush1.msra.mxu0 0.0
      %2136 = vmatprep.subr.mxu0 0.0
      %2137 = vmatpush1.msra.mxu0 0.0
      %2138 = vmatprep.subr.mxu0 0.0
      %2139 = vmatpush1.msra.mxu0 0.0
      %2140 = vmatprep.subr.mxu0 0.0
      %2141 = vmatpush1.msra.mxu0 0.0
      %2142 = vmatprep.subr.mxu0 0.0
      %2143 = vmatpush1.msra.mxu0 0.0
      %2144 = vmatprep.subr.mxu0 0.0
      %2145 = vmatpush1.msra.mxu0 0.0
      %2146 = vmatprep.mubr.f32.mxu0 0.0
      %2147 = vmatmul.mubr.f32.gmra.mrb[0].mxu0 %v2077
      %v2148 = vpop.f32.mrb[0].mxu0
      %v2149 = vadd.f32 %v852, %v2148
      %v2150 = vpop.f32.mrb[0].mxu0
      %2151 = vmatprep.mubr.f32.mxu0 0.0
      %2152 = vmatmul.mubr.f32.gmra.mrb[0].mxu0 %v2080
      %v2153 = vpop.f32.mrb[0].mxu0
      %v2154 = vadd.f32 %v857, %v2153
      %v2155 = vpop.f32.mrb[0].mxu0
      %2156 = vdwg.mxu0
      %v2157 = vld [vmem:[%s4] sm:$0x1]
      %v2159 = vlaneseq
      %v2160 = vshrl.u32 %v2159, 7
      %v2161 = vsub.s32 0, %v2160
      %v2162 = vrot.slane %v2157, %v2161
      %v2164 = vadd.f32 %v934, %v2162
      %v2165 = vadd.f32 %v939, %v2162
      %v2166 = vadd.f32 %v1015, %v2162
      %v2167 = vadd.f32 %v1020, %v2162
      %v2168 = vadd.f32 %v1096, %v2162
      %v2169 = vadd.f32 %v1101, %v2162
      %v2170 = vadd.f32 %v1177, %v2162
      %v2171 = vadd.f32 %v1182, %v2162
      %v2172 = vadd.f32 %v1258, %v2162
      %v2173 = vadd.f32 %v1263, %v2162
      %v2174 = vadd.f32 %v1339, %v2162
      %v2175 = vadd.f32 %v1344, %v2162
      %v2176 = vadd.f32 %v1420, %v2162
      %v2177 = vadd.f32 %v1425, %v2162
      %v2178 = vadd.f32 %v1501, %v2162
      %v2179 = vadd.f32 %v1506, %v2162
      %v2180 = vadd.f32 %v1582, %v2162
      %v2181 = vadd.f32 %v1587, %v2162
      %v2182 = vadd.f32 %v1663, %v2162
      %v2183 = vadd.f32 %v1668, %v2162
      %v2184 = vadd.f32 %v1744, %v2162
      %v2185 = vadd.f32 %v1749, %v2162
      %v2186 = vadd.f32 %v1825, %v2162
      %v2187 = vadd.f32 %v1830, %v2162
      %v2188 = vadd.f32 %v1906, %v2162
      %v2189 = vadd.f32 %v1911, %v2162
      %v2190 = vadd.f32 %v1987, %v2162
      %v2191 = vadd.f32 %v1992, %v2162
      %v2192 = vadd.f32 %v2068, %v2162
      %v2193 = vadd.f32 %v2073, %v2162
      %v2194 = vadd.f32 %v2149, %v2162
      %v2195 = vadd.f32 %v2154, %v2162
      %v2196 = vmax.f32 %v2164, 0.0
      %v2197 = vmax.f32 %v2165, 0.0
      %v2198 = vmax.f32 %v2166, 0.0
      %v2199 = vmax.f32 %v2167, 0.0
      %v2200 = vmax.f32 %v2168, 0.0
      %v2201 = vmax.f32 %v2169, 0.0
      %v2202 = vmax.f32 %v2170, 0.0
      %v2203 = vmax.f32 %v2171, 0.0
      %v2204 = vmax.f32 %v2172, 0.0
      %v2205 = vmax.f32 %v2173, 0.0
      %v2206 = vmax.f32 %v2174, 0.0
      %v2207 = vmax.f32 %v2175, 0.0
      %v2208 = vmax.f32 %v2176, 0.0
      %v2209 = vmax.f32 %v2177, 0.0
      %v2210 = vmax.f32 %v2178, 0.0
      %v2211 = vmax.f32 %v2179, 0.0
      %v2212 = vmax.f32 %v2180, 0.0
      %v2213 = vmax.f32 %v2181, 0.0
      %v2214 = vmax.f32 %v2182, 0.0
      %v2215 = vmax.f32 %v2183, 0.0
      %v2216 = vmax.f32 %v2184, 0.0
      %v2217 = vmax.f32 %v2185, 0.0
      %v2218 = vmax.f32 %v2186, 0.0
      %v2219 = vmax.f32 %v2187, 0.0
      %v2220 = vmax.f32 %v2188, 0.0
      %v2221 = vmax.f32 %v2189, 0.0
      %v2222 = vmax.f32 %v2190, 0.0
      %v2223 = vmax.f32 %v2191, 0.0
      %v2224 = vmax.f32 %v2192, 0.0
      %v2225 = vmax.f32 %v2193, 0.0
      %v2226 = vmax.f32 %v2194, 0.0
      %v2227 = vmax.f32 %v2195, 0.0
      %vm2228 = vcmask 261120
      %v2229 = vsel %vm2228, %v2196, 0.0
      %v2230 = vsel %vm2228, %v2197, 0.0
      %v2231 = vadd.f32 %v2229, %v2230
      %v2232 = vrot.slane %v2231, 4
      %v2233 = vadd.f32 %v2231, %v2232
      %v2234 = vrot.slane %v2233, 2
      %v2235 = vadd.f32 %v2233, %v2234
      %v2236 = vrot.slane %v2235, 1
      %v2237 = vadd.f32 %v2235, %v2236
      %v2238 = vsel %vm2228, %v2198, 0.0
      %v2239 = vsel %vm2228, %v2199, 0.0
      %v2240 = vadd.f32 %v2238, %v2239
      %v2241 = vrot.slane %v2240, 4
      %v2242 = vadd.f32 %v2240, %v2241
      %v2243 = vrot.slane %v2242, 2
      %v2244 = vadd.f32 %v2242, %v2243
      %v2245 = vrot.slane %v2244, 1
      %v2246 = vadd.f32 %v2244, %v2245
      %v2247 = vsel %vm2228, %v2200, 0.0
      %v2248 = vsel %vm2228, %v2201, 0.0
      %v2249 = vadd.f32 %v2247, %v2248
      %v2250 = vrot.slane %v2249, 4
      %v2251 = vadd.f32 %v2249, %v2250
      %v2252 = vrot.slane %v2251, 2
      %v2253 = vadd.f32 %v2251, %v2252
      %v2254 = vrot.slane %v2253, 1
      %v2255 = vadd.f32 %v2253, %v2254
      %v2256 = vsel %vm2228, %v2202, 0.0
      %v2257 = vsel %vm2228, %v2203, 0.0
      %v2258 = vadd.f32 %v2256, %v2257
      %v2259 = vrot.slane %v2258, 4
      %v2260 = vadd.f32 %v2258, %v2259
      %v2261 = vrot.slane %v2260, 2
      %v2262 = vadd.f32 %v2260, %v2261
      %v2263 = vrot.slane %v2262, 1
      %v2264 = vadd.f32 %v2262, %v2263
      %v2265 = vsel %vm2228, %v2204, 0.0
      %v2266 = vsel %vm2228, %v2205, 0.0
      %v2267 = vadd.f32 %v2265, %v2266
      %v2268 = vrot.slane %v2267, 4
      %v2269 = vadd.f32 %v2267, %v2268
      %v2270 = vrot.slane %v2269, 2
      %v2271 = vadd.f32 %v2269, %v2270
      %v2272 = vrot.slane %v2271, 1
      %v2273 = vadd.f32 %v2271, %v2272
      %v2274 = vsel %vm2228, %v2206, 0.0
      %v2275 = vsel %vm2228, %v2207, 0.0
      %v2276 = vadd.f32 %v2274, %v2275
      %v2277 = vrot.slane %v2276, 4
      %v2278 = vadd.f32 %v2276, %v2277
      %v2279 = vrot.slane %v2278, 2
      %v2280 = vadd.f32 %v2278, %v2279
      %v2281 = vrot.slane %v2280, 1
      %v2282 = vadd.f32 %v2280, %v2281
      %v2283 = vsel %vm2228, %v2208, 0.0
      %v2284 = vsel %vm2228, %v2209, 0.0
      %v2285 = vadd.f32 %v2283, %v2284
      %v2286 = vrot.slane %v2285, 4
      %v2287 = vadd.f32 %v2285, %v2286
      %v2288 = vrot.slane %v2287, 2
      %v2289 = vadd.f32 %v2287, %v2288
      %v2290 = vrot.slane %v2289, 1
      %v2291 = vadd.f32 %v2289, %v2290
      %v2292 = vsel %vm2228, %v2210, 0.0
      %v2293 = vsel %vm2228, %v2211, 0.0
      %v2294 = vadd.f32 %v2292, %v2293
      %v2295 = vrot.slane %v2294, 4
      %v2296 = vadd.f32 %v2294, %v2295
      %v2297 = vrot.slane %v2296, 2
      %v2298 = vadd.f32 %v2296, %v2297
      %v2299 = vrot.slane %v2298, 1
      %v2300 = vadd.f32 %v2298, %v2299
      %v2301 = vsel %vm2228, %v2212, 0.0
      %v2302 = vsel %vm2228, %v2213, 0.0
      %v2303 = vadd.f32 %v2301, %v2302
      %v2304 = vrot.slane %v2303, 4
      %v2305 = vadd.f32 %v2303, %v2304
      %v2306 = vrot.slane %v2305, 2
      %v2307 = vadd.f32 %v2305, %v2306
      %v2308 = vrot.slane %v2307, 1
      %v2309 = vadd.f32 %v2307, %v2308
      %v2310 = vsel %vm2228, %v2214, 0.0
      %v2311 = vsel %vm2228, %v2215, 0.0
      %v2312 = vadd.f32 %v2310, %v2311
      %v2313 = vrot.slane %v2312, 4
      %v2314 = vadd.f32 %v2312, %v2313
      %v2315 = vrot.slane %v2314, 2
      %v2316 = vadd.f32 %v2314, %v2315
      %v2317 = vrot.slane %v2316, 1
      %v2318 = vadd.f32 %v2316, %v2317
      %v2319 = vsel %vm2228, %v2216, 0.0
      %v2320 = vsel %vm2228, %v2217, 0.0
      %v2321 = vadd.f32 %v2319, %v2320
      %v2322 = vrot.slane %v2321, 4
      %v2323 = vadd.f32 %v2321, %v2322
      %v2324 = vrot.slane %v2323, 2
      %v2325 = vadd.f32 %v2323, %v2324
      %v2326 = vrot.slane %v2325, 1
      %v2327 = vadd.f32 %v2325, %v2326
      %v2328 = vsel %vm2228, %v2218, 0.0
      %v2329 = vsel %vm2228, %v2219, 0.0
      %v2330 = vadd.f32 %v2328, %v2329
      %v2331 = vrot.slane %v2330, 4
      %v2332 = vadd.f32 %v2330, %v2331
      %v2333 = vrot.slane %v2332, 2
      %v2334 = vadd.f32 %v2332, %v2333
      %v2335 = vrot.slane %v2334, 1
      %v2336 = vadd.f32 %v2334, %v2335
      %v2337 = vsel %vm2228, %v2220, 0.0
      %v2338 = vsel %vm2228, %v2221, 0.0
      %v2339 = vadd.f32 %v2337, %v2338
      %v2340 = vrot.slane %v2339, 4
      %v2341 = vadd.f32 %v2339, %v2340
      %v2342 = vrot.slane %v2341, 2
      %v2343 = vadd.f32 %v2341, %v2342
      %v2344 = vrot.slane %v2343, 1
      %v2345 = vadd.f32 %v2343, %v2344
      %v2346 = vsel %vm2228, %v2222, 0.0
      %v2347 = vsel %vm2228, %v2223, 0.0
      %v2348 = vadd.f32 %v2346, %v2347
      %v2349 = vrot.slane %v2348, 4
      %v2350 = vadd.f32 %v2348, %v2349
      %v2351 = vrot.slane %v2350, 2
      %v2352 = vadd.f32 %v2350, %v2351
      %v2353 = vrot.slane %v2352, 1
      %v2354 = vadd.f32 %v2352, %v2353
      %v2355 = vsel %vm2228, %v2224, 0.0
      %v2356 = vsel %vm2228, %v2225, 0.0
      %v2357 = vadd.f32 %v2355, %v2356
      %v2358 = vrot.slane %v2357, 4
      %v2359 = vadd.f32 %v2357, %v2358
      %v2360 = vrot.slane %v2359, 2
      %v2361 = vadd.f32 %v2359, %v2360
      %v2362 = vrot.slane %v2361, 1
      %v2363 = vadd.f32 %v2361, %v2362
      %v2364 = vsel %vm2228, %v2226, 0.0
      %v2365 = vsel %vm2228, %v2227, 0.0
      %v2366 = vadd.f32 %v2364, %v2365
      %v2367 = vrot.slane %v2366, 4
      %v2368 = vadd.f32 %v2366, %v2367
      %v2369 = vrot.slane %v2368, 2
      %v2370 = vadd.f32 %v2368, %v2369
      %v2371 = vrot.slane %v2370, 1
      %v2372 = vadd.f32 %v2370, %v2371
      %v2373 = vrcp.pop 16.0
      %v2374 = vmul.f32 %v2237, %v2373
      %v2375 = vmul.f32 %v2246, %v2373
      %v2376 = vmul.f32 %v2255, %v2373
      %v2377 = vmul.f32 %v2264, %v2373
      %v2378 = vmul.f32 %v2273, %v2373
      %v2379 = vmul.f32 %v2282, %v2373
      %v2380 = vmul.f32 %v2291, %v2373
      %v2381 = vmul.f32 %v2300, %v2373
      %v2382 = vmul.f32 %v2309, %v2373
      %v2383 = vmul.f32 %v2318, %v2373
      %v2384 = vmul.f32 %v2327, %v2373
      %v2385 = vmul.f32 %v2336, %v2373
      %v2386 = vmul.f32 %v2345, %v2373
      %v2387 = vmul.f32 %v2354, %v2373
      %v2388 = vmul.f32 %v2363, %v2373
      %v2389 = vmul.f32 %v2372, %v2373
      %v2390 = vld [vmem:[%s5] sm:$0xff]
      %v2391 = vld [vmem:[%s5 + $0x8] sm:$0xff]
      %v2392 = vld [vmem:[%s5 + $0x10] sm:$0xff]
      %v2393 = vld [vmem:[%s5 + $0x18] sm:$0xff]
      %v2394 = vld [vmem:[%s6] sm:$0x1]
      %v2396 = vlaneseq
      %v2397 = vshrl.u32 %v2396, 7
      %v2398 = vsub.s32 0, %v2397
      %v2399 = vrot.slane %v2394, %v2398
      %vm2417 = vcmask 1041409
      %v2418 = vsel %vm2417, %v2375, %v2374
      %vm2419 = vcmask 1042434
      %v2420 = vsel %vm2419, %v2376, %v2418
      %vm2421 = vcmask 1043459
      %v2422 = vsel %vm2421, %v2377, %v2420
      %vm2423 = vcmask 1044484
      %v2424 = vsel %vm2423, %v2378, %v2422
      %vm2425 = vcmask 1045509
      %v2426 = vsel %vm2425, %v2379, %v2424
      %vm2427 = vcmask 1046534
      %v2428 = vsel %vm2427, %v2380, %v2426
      %vm2429 = vcmask 1047559
      %v2430 = vsel %vm2429, %v2381, %v2428
      %v2431 = vsel %vm2417, %v2383, %v2382
      %v2432 = vsel %vm2419, %v2384, %v2431
      %v2433 = vsel %vm2421, %v2385, %v2432
      %v2434 = vsel %vm2423, %v2386, %v2433
      %v2435 = vsel %vm2425, %v2387, %v2434
      %v2436 = vsel %vm2427, %v2388, %v2435
      %v2437 = vsel %vm2429, %v2389, %v2436
      %v2438 = vsel %vm2228, %v2430, 0
      %v2440 = vsel %vm2228, %v2437, 0
      %2442 = vmatprep.subr.mxu0 0.0
      %2443 = vmatpush1.msra.mxu0 %v2390
      %2444 = vmatprep.subr.mxu0 0.0
      %2445 = vmatpush1.msra.mxu0 %v2391
      %2446 = vmatprep.subr.mxu0 0.0
      %2447 = vmatpush1.msra.mxu0 %v2392
      %2448 = vmatprep.subr.mxu0 0.0
      %2449 = vmatpush1.msra.mxu0 %v2393
      %2450 = vmatprep.subr.mxu0 0.0
      %2451 = vmatpush1.msra.mxu0 0.0
      %2452 = vmatprep.subr.mxu0 0.0
      %2453 = vmatpush1.msra.mxu0 0.0
      %2454 = vmatprep.subr.mxu0 0.0
      %2455 = vmatpush1.msra.mxu0 0.0
      %2456 = vmatprep.subr.mxu0 0.0
      %2457 = vmatpush1.msra.mxu0 0.0
      %2458 = vmatprep.subr.mxu0 0.0
      %2459 = vmatpush1.msra.mxu0 0.0
      %2460 = vmatprep.subr.mxu0 0.0
      %2461 = vmatpush1.msra.mxu0 0.0
      %2462 = vmatprep.subr.mxu0 0.0
      %2463 = vmatpush1.msra.mxu0 0.0
      %2464 = vmatprep.subr.mxu0 0.0
      %2465 = vmatpush1.msra.mxu0 0.0
      %2466 = vmatprep.subr.mxu0 0.0
      %2467 = vmatpush1.msra.mxu0 0.0
      %2468 = vmatprep.subr.mxu0 0.0
      %2469 = vmatpush1.msra.mxu0 0.0
      %2470 = vmatprep.subr.mxu0 0.0
      %2471 = vmatpush1.msra.mxu0 0.0
      %2472 = vmatprep.subr.mxu0 0.0
      %2473 = vmatpush1.msra.mxu0 0.0
      %2474 = vmatprep.subr.mxu0 0.0
      %2475 = vmatpush1.msra.mxu0 0.0
      %2476 = vmatprep.subr.mxu0 0.0
      %2477 = vmatpush1.msra.mxu0 0.0
      %2478 = vmatprep.subr.mxu0 0.0
      %2479 = vmatpush1.msra.mxu0 0.0
      %2480 = vmatprep.subr.mxu0 0.0
      %2481 = vmatpush1.msra.mxu0 0.0
      %2482 = vmatprep.subr.mxu0 0.0
      %2483 = vmatpush1.msra.mxu0 0.0
      %2484 = vmatprep.subr.mxu0 0.0
      %2485 = vmatpush1.msra.mxu0 0.0
      %2486 = vmatprep.subr.mxu0 0.0
      %2487 = vmatpush1.msra.mxu0 0.0
      %2488 = vmatprep.subr.mxu0 0.0
      %2489 = vmatpush1.msra.mxu0 0.0
      %2490 = vmatprep.subr.mxu0 0.0
      %2491 = vmatpush1.msra.mxu0 0.0
      %2492 = vmatprep.subr.mxu0 0.0
      %2493 = vmatpush1.msra.mxu0 0.0
      %2494 = vmatprep.subr.mxu0 0.0
      %2495 = vmatpush1.msra.mxu0 0.0
      %2496 = vmatprep.subr.mxu0 0.0
      %2497 = vmatpush1.msra.mxu0 0.0
      %2498 = vmatprep.subr.mxu0 0.0
      %2499 = vmatpush1.msra.mxu0 0.0
      %2500 = vmatprep.subr.mxu0 0.0
      %2501 = vmatpush1.msra.mxu0 0.0
      %2502 = vmatprep.subr.mxu0 0.0
      %2503 = vmatpush1.msra.mxu0 0.0
      %2504 = vmatprep.subr.mxu0 0.0
      %2505 = vmatpush1.msra.mxu0 0.0
      %2506 = vmatprep.mubr.f32.mxu0 0.0
      %2507 = vmatmul.mubr.f32.gmra.mrb[0].mxu0 %v2438
      %v2508 = vpop.f32.mrb[0].mxu0
      %v2509 = vadd.f32 %v2399, %v2508
      %v2510 = vpop.f32.mrb[0].mxu0
      %2511 = vmatprep.mubr.f32.mxu0 0.0
      %2512 = vmatmul.mubr.f32.gmra.mrb[0].mxu0 %v2440
      %v2513 = vpop.f32.mrb[0].mxu0
      %v2514 = vadd.f32 %v2399, %v2513
      %v2515 = vpop.f32.mrb[0].mxu0
      %2516 = vdwg.mxu0
      %v2517 = vmul.f32 %v2509, 1.442695
      %v2518 = vpow.pop %v2517
      %v2519 = vmul.f32 %v2514, 1.442695
      %v2520 = vpow.pop %v2519
      %2523 = vrot.lane.b32.xlu0 %v535, 8
      %v2524 = vpop.permute.xlu0 %2523
      %2525 = vrot.lane.b32.xlu0 %v536, 8
      %v2526 = vpop.permute.xlu0 %2525
      %v2529 = vmul.f32 %v2518, %v2524
      %v2530 = vmul.f32 %v2520, %v2526
      %2533 = vrot.lane.b32.xlu0 %v2529, 120
      %v2534 = vpop.permute.xlu0 %2533
      %2535 = vrot.lane.b32.xlu0 %v2530, 120
      %v2536 = vpop.permute.xlu0 %2535
      %v2539 = vadd.f32 %v2509, %v2534
      %v2540 = vadd.f32 %v2514, %v2536
      %v2541 = vmul.f32 %v2539, %v2539
      %v2542 = vmul.f32 %v2540, %v2540
      %v2543 = vmul.f32 %v535, %v535
      %v2544 = vmul.f32 %v536, %v536
      %v2545 = vsub.f32 %v2541, %v2543
      %v2546 = vsub.f32 %v2542, %v2544
      %v2547 = vmul.f32 %v2545, 0.5
      %v2548 = vmul.f32 %v2546, 0.5
      %2551 = vrot.lane.b32.xlu0 %v2509, 120
      %v2552 = vpop.permute.xlu0 %2551
      %2553 = vrot.lane.b32.xlu0 %v2514, 120
      %v2554 = vpop.permute.xlu0 %2553
      %v2557 = vsub.f32 %v2547, %v2552
      %v2558 = vsub.f32 %v2548, %v2554
      %v2559 = vsel %vm538, %v2557, 0.0
      %2560 = vadd.xlane.f32.xlu0 %v2559
      %v2561 = vpop.xlane.xlu0 %2560
      %v2562 = vsel %vm538, %v2558, 0.0
      %2563 = vadd.xlane.f32.xlu0 %v2562
      %v2564 = vpop.xlane.xlu0 %2563
      %v2565 = vld [vmem:[%s7] sm:$0xff]
      %v2566 = vld [vmem:[%s8] sm:$0x1]
      %v2568 = vlaneseq
      %v2569 = vshrl.u32 %v2568, 7
      %v2570 = vsub.s32 0, %v2569
      %v2571 = vrot.slane %v2566, %v2570
      %v2574 = vsel %vm538, %v2539, 0
      %v2577 = vsel %vm538, %v2540, 0
      %2579 = vmatprep.subr.mxu0 0.0
      %2580 = vmatpush1.msra.mxu0 %v2565
      %2581 = vmatprep.subr.mxu0 0.0
      %2582 = vmatpush1.msra.mxu0 0.0
      %2583 = vmatprep.subr.mxu0 0.0
      %2584 = vmatpush1.msra.mxu0 0.0
      %2585 = vmatprep.subr.mxu0 0.0
      %2586 = vmatpush1.msra.mxu0 0.0
      %2587 = vmatprep.subr.mxu0 0.0
      %2588 = vmatpush1.msra.mxu0 0.0
      %2589 = vmatprep.subr.mxu0 0.0
      %2590 = vmatpush1.msra.mxu0 0.0
      %2591 = vmatprep.subr.mxu0 0.0
      %2592 = vmatpush1.msra.mxu0 0.0
      %2593 = vmatprep.subr.mxu0 0.0
      %2594 = vmatpush1.msra.mxu0 0.0
      %2595 = vmatprep.subr.mxu0 0.0
      %2596 = vmatpush1.msra.mxu0 0.0
      %2597 = vmatprep.subr.mxu0 0.0
      %2598 = vmatpush1.msra.mxu0 0.0
      %2599 = vmatprep.subr.mxu0 0.0
      %2600 = vmatpush1.msra.mxu0 0.0
      %2601 = vmatprep.subr.mxu0 0.0
      %2602 = vmatpush1.msra.mxu0 0.0
      %2603 = vmatprep.subr.mxu0 0.0
      %2604 = vmatpush1.msra.mxu0 0.0
      %2605 = vmatprep.subr.mxu0 0.0
      %2606 = vmatpush1.msra.mxu0 0.0
      %2607 = vmatprep.subr.mxu0 0.0
      %2608 = vmatpush1.msra.mxu0 0.0
      %2609 = vmatprep.subr.mxu0 0.0
      %2610 = vmatpush1.msra.mxu0 0.0
      %2611 = vmatprep.subr.mxu0 0.0
      %2612 = vmatpush1.msra.mxu0 0.0
      %2613 = vmatprep.subr.mxu0 0.0
      %2614 = vmatpush1.msra.mxu0 0.0
      %2615 = vmatprep.subr.mxu0 0.0
      %2616 = vmatpush1.msra.mxu0 0.0
      %2617 = vmatprep.subr.mxu0 0.0
      %2618 = vmatpush1.msra.mxu0 0.0
      %2619 = vmatprep.subr.mxu0 0.0
      %2620 = vmatpush1.msra.mxu0 0.0
      %2621 = vmatprep.subr.mxu0 0.0
      %2622 = vmatpush1.msra.mxu0 0.0
      %2623 = vmatprep.subr.mxu0 0.0
      %2624 = vmatpush1.msra.mxu0 0.0
      %2625 = vmatprep.subr.mxu0 0.0
      %2626 = vmatpush1.msra.mxu0 0.0
      %2627 = vmatprep.subr.mxu0 0.0
      %2628 = vmatpush1.msra.mxu0 0.0
      %2629 = vmatprep.subr.mxu0 0.0
      %2630 = vmatpush1.msra.mxu0 0.0
      %2631 = vmatprep.subr.mxu0 0.0
      %2632 = vmatpush1.msra.mxu0 0.0
      %2633 = vmatprep.subr.mxu0 0.0
      %2634 = vmatpush1.msra.mxu0 0.0
      %2635 = vmatprep.subr.mxu0 0.0
      %2636 = vmatpush1.msra.mxu0 0.0
      %2637 = vmatprep.subr.mxu0 0.0
      %2638 = vmatpush1.msra.mxu0 0.0
      %2639 = vmatprep.subr.mxu0 0.0
      %2640 = vmatpush1.msra.mxu0 0.0
      %2641 = vmatprep.subr.mxu0 0.0
      %2642 = vmatpush1.msra.mxu0 0.0
      %2643 = vmatprep.mubr.f32.mxu0 0.0
      %2644 = vmatmul.mubr.f32.gmra.mrb[0].mxu0 %v2574
      %v2645 = vpop.f32.mrb[0].mxu0
      %v2646 = vadd.f32 %v2571, %v2645
      %v2647 = vpop.f32.mrb[0].mxu0
      %2648 = vmatprep.mubr.f32.mxu0 0.0
      %2649 = vmatmul.mubr.f32.gmra.mrb[0].mxu0 %v2577
      %v2650 = vpop.f32.mrb[0].mxu0
      %v2651 = vadd.f32 %v2571, %v2650
      %v2652 = vpop.f32.mrb[0].mxu0
      %2653 = vdwg.mxu0
      %v2654 = vmax.f32 %v2646, 0.0
      %v2655 = vmax.f32 %v2651, 0.0
      %v2656 = vld [vmem:[%s9] sm:$0xff]
      %v2657 = vld [vmem:[%s9 + $0x8] sm:$0xff]
      %v2658 = vld [vmem:[%s9 + $0x10] sm:$0xff]
      %v2659 = vld [vmem:[%s9 + $0x18] sm:$0xff]
      %v2660 = vld [vmem:[%s9 + $0x20] sm:$0xff]
      %v2661 = vld [vmem:[%s9 + $0x28] sm:$0xff]
      %v2662 = vld [vmem:[%s9 + $0x30] sm:$0xff]
      %v2663 = vld [vmem:[%s9 + $0x38] sm:$0xff]
      %v2664 = vld [vmem:[%s10] sm:$0x3]
      %v2666 = vlaneseq
      %v2667 = vshrl.u32 %v2666, 7
      %v2668 = vsub.s32 0, %v2667
      %v2669 = vrot.slane %v2664, %v2668
      %v2670 = vlaneseq
      %v2671 = vshrl.u32 %v2670, 7
      %v2672 = vsub.s32 1, %v2671
      %v2673 = vrot.slane %v2664, %v2672
      %v2677 = vsel %vm2228, %v2654, 0
      %v2680 = vsel %vm2228, %v2655, 0
      %2682 = vmatprep.subr.mxu0 %v2657
      %2683 = vmatpush1.msra.mxu0 %v2656
      %2684 = vmatprep.subr.mxu0 %v2659
      %2685 = vmatpush1.msra.mxu0 %v2658
      %2686 = vmatprep.subr.mxu0 %v2661
      %2687 = vmatpush1.msra.mxu0 %v2660
      %2688 = vmatprep.subr.mxu0 %v2663
      %2689 = vmatpush1.msra.mxu0 %v2662
      %2690 = vmatprep.subr.mxu0 0.0
      %2691 = vmatpush1.msra.mxu0 0.0
      %2692 = vmatprep.subr.mxu0 0.0
      %2693 = vmatpush1.msra.mxu0 0.0
      %2694 = vmatprep.subr.mxu0 0.0
      %2695 = vmatpush1.msra.mxu0 0.0
      %2696 = vmatprep.subr.mxu0 0.0
      %2697 = vmatpush1.msra.mxu0 0.0
      %2698 = vmatprep.subr.mxu0 0.0
      %2699 = vmatpush1.msra.mxu0 0.0
      %2700 = vmatprep.subr.mxu0 0.0
      %2701 = vmatpush1.msra.mxu0 0.0
      %2702 = vmatprep.subr.mxu0 0.0
      %2703 = vmatpush1.msra.mxu0 0.0
      %2704 = vmatprep.subr.mxu0 0.0
      %2705 = vmatpush1.msra.mxu0 0.0
      %2706 = vmatprep.subr.mxu0 0.0
      %2707 = vmatpush1.msra.mxu0 0.0
      %2708 = vmatprep.subr.mxu0 0.0
      %2709 = vmatpush1.msra.mxu0 0.0
      %2710 = vmatprep.subr.mxu0 0.0
      %2711 = vmatpush1.msra.mxu0 0.0
      %2712 = vmatprep.subr.mxu0 0.0
      %2713 = vmatpush1.msra.mxu0 0.0
      %2714 = vmatprep.subr.mxu0 0.0
      %2715 = vmatpush1.msra.mxu0 0.0
      %2716 = vmatprep.subr.mxu0 0.0
      %2717 = vmatpush1.msra.mxu0 0.0
      %2718 = vmatprep.subr.mxu0 0.0
      %2719 = vmatpush1.msra.mxu0 0.0
      %2720 = vmatprep.subr.mxu0 0.0
      %2721 = vmatpush1.msra.mxu0 0.0
      %2722 = vmatprep.subr.mxu0 0.0
      %2723 = vmatpush1.msra.mxu0 0.0
      %2724 = vmatprep.subr.mxu0 0.0
      %2725 = vmatpush1.msra.mxu0 0.0
      %2726 = vmatprep.subr.mxu0 0.0
      %2727 = vmatpush1.msra.mxu0 0.0
      %2728 = vmatprep.subr.mxu0 0.0
      %2729 = vmatpush1.msra.mxu0 0.0
      %2730 = vmatprep.subr.mxu0 0.0
      %2731 = vmatpush1.msra.mxu0 0.0
      %2732 = vmatprep.subr.mxu0 0.0
      %2733 = vmatpush1.msra.mxu0 0.0
      %2734 = vmatprep.subr.mxu0 0.0
      %2735 = vmatpush1.msra.mxu0 0.0
      %2736 = vmatprep.subr.mxu0 0.0
      %2737 = vmatpush1.msra.mxu0 0.0
      %2738 = vmatprep.subr.mxu0 0.0
      %2739 = vmatpush1.msra.mxu0 0.0
      %2740 = vmatprep.subr.mxu0 0.0
      %2741 = vmatpush1.msra.mxu0 0.0
      %2742 = vmatprep.subr.mxu0 0.0
      %2743 = vmatpush1.msra.mxu0 0.0
      %2744 = vmatprep.subr.mxu0 0.0
      %2745 = vmatpush1.msra.mxu0 0.0
      %2746 = vmatprep.mubr.f32.mxu0 0.0
      %2747 = vmatmul.mubr.f32.gmra.mrb[0].mxu0 %v2677
      %v2748 = vpop.f32.mrb[0].mxu0
      %v2749 = vadd.f32 %v2669, %v2748
      %v2750 = vpop.f32.mrb[0].mxu0
      %v2751 = vadd.f32 %v2673, %v2750
      %2752 = vmatprep.mubr.f32.mxu0 0.0
      %2753 = vmatmul.mubr.f32.gmra.mrb[0].mxu0 %v2680
      %v2754 = vpop.f32.mrb[0].mxu0
      %v2755 = vadd.f32 %v2669, %v2754
      %v2756 = vpop.f32.mrb[0].mxu0
      %v2757 = vadd.f32 %v2673, %v2756
      %2758 = vdwg.mxu0
      %v2759 = vcombine.low %v503, %v507
      %v2760 = vcombine.high %v503, %v507
      %v2762 = vunpack.c.l.s4 1983009808
      %v2763 = vunpack.c.0.s8 %v2762
      %v2764 = vlaneseq
      %v2765 = vshrl.u32 %v2764, 7
      %v2766 = vsub.s32 %v2763, %v2765
      %v2767 = vrot.slane %v2759, %v2766
      %v2769 = vunpack.c.l.s4 1983009808
      %v2770 = vunpack.c.0.s8 %v2769
      %v2771 = vlaneseq
      %v2772 = vshrl.u32 %v2771, 7
      %v2773 = vsub.s32 %v2770, %v2772
      %v2774 = vrot.slane %v2760, %v2773
      %v2775 = vcombine.low %v505, %v509
      %v2776 = vcombine.high %v505, %v509
      %v2778 = vunpack.c.l.s4 1983009808
      %v2779 = vunpack.c.0.s8 %v2778
      %v2780 = vlaneseq
      %v2781 = vshrl.u32 %v2780, 7
      %v2782 = vsub.s32 %v2779, %v2781
      %v2783 = vrot.slane %v2775, %v2782
      %v2785 = vunpack.c.l.s4 1983009808
      %v2786 = vunpack.c.0.s8 %v2785
      %v2787 = vlaneseq
      %v2788 = vshrl.u32 %v2787, 7
      %v2789 = vsub.s32 %v2786, %v2788
      %v2790 = vrot.slane %v2776, %v2789
      %v2791 = vcombine.low %v511, %v515
      %v2792 = vcombine.high %v511, %v515
      %v2794 = vunpack.c.l.s4 1983009808
      %v2795 = vunpack.c.0.s8 %v2794
      %v2796 = vlaneseq
      %v2797 = vshrl.u32 %v2796, 7
      %v2798 = vsub.s32 %v2795, %v2797
      %v2799 = vrot.slane %v2791, %v2798
      %v2801 = vunpack.c.l.s4 1983009808
      %v2802 = vunpack.c.0.s8 %v2801
      %v2803 = vlaneseq
      %v2804 = vshrl.u32 %v2803, 7
      %v2805 = vsub.s32 %v2802, %v2804
      %v2806 = vrot.slane %v2792, %v2805
      %v2807 = vcombine.low %v513, %v517
      %v2808 = vcombine.high %v513, %v517
      %v2810 = vunpack.c.l.s4 1983009808
      %v2811 = vunpack.c.0.s8 %v2810
      %v2812 = vlaneseq
      %v2813 = vshrl.u32 %v2812, 7
      %v2814 = vsub.s32 %v2811, %v2813
      %v2815 = vrot.slane %v2807, %v2814
      %v2817 = vunpack.c.l.s4 1983009808
      %v2818 = vunpack.c.0.s8 %v2817
      %v2819 = vlaneseq
      %v2820 = vshrl.u32 %v2819, 7
      %v2821 = vsub.s32 %v2818, %v2820
      %v2822 = vrot.slane %v2808, %v2821
      %v2823 = vcombine.low %v2767, %v2783
      %v2824 = vcombine.high %v2767, %v2783
      %v2826 = vunpack.c.l.s4 1934713408
      %v2827 = vunpack.c.0.s8 %v2826
      %v2828 = vlaneseq
      %v2829 = vshrl.u32 %v2828, 7
      %v2830 = vsub.s32 %v2827, %v2829
      %v2831 = vrot.slane %v2823, %v2830
      %v2833 = vunpack.c.l.s4 1934713408
      %v2834 = vunpack.c.0.s8 %v2833
      %v2835 = vlaneseq
      %v2836 = vshrl.u32 %v2835, 7
      %v2837 = vsub.s32 %v2834, %v2836
      %v2838 = vrot.slane %v2824, %v2837
      %v2839 = vcombine.low %v2774, %v2790
      %v2840 = vcombine.high %v2774, %v2790
      %v2842 = vunpack.c.l.s4 1934713408
      %v2843 = vunpack.c.0.s8 %v2842
      %v2844 = vlaneseq
      %v2845 = vshrl.u32 %v2844, 7
      %v2846 = vsub.s32 %v2843, %v2845
      %v2847 = vrot.slane %v2839, %v2846
      %v2849 = vunpack.c.l.s4 1934713408
      %v2850 = vunpack.c.0.s8 %v2849
      %v2851 = vlaneseq
      %v2852 = vshrl.u32 %v2851, 7
      %v2853 = vsub.s32 %v2850, %v2852
      %v2854 = vrot.slane %v2840, %v2853
      %v2855 = vcombine.low %v2799, %v2815
      %v2856 = vcombine.high %v2799, %v2815
      %v2858 = vunpack.c.l.s4 1934713408
      %v2859 = vunpack.c.0.s8 %v2858
      %v2860 = vlaneseq
      %v2861 = vshrl.u32 %v2860, 7
      %v2862 = vsub.s32 %v2859, %v2861
      %v2863 = vrot.slane %v2855, %v2862
      %v2865 = vunpack.c.l.s4 1934713408
      %v2866 = vunpack.c.0.s8 %v2865
      %v2867 = vlaneseq
      %v2868 = vshrl.u32 %v2867, 7
      %v2869 = vsub.s32 %v2866, %v2868
      %v2870 = vrot.slane %v2856, %v2869
      %v2871 = vcombine.low %v2806, %v2822
      %v2872 = vcombine.high %v2806, %v2822
      %v2874 = vunpack.c.l.s4 1934713408
      %v2875 = vunpack.c.0.s8 %v2874
      %v2876 = vlaneseq
      %v2877 = vshrl.u32 %v2876, 7
      %v2878 = vsub.s32 %v2875, %v2877
      %v2879 = vrot.slane %v2871, %v2878
      %v2881 = vunpack.c.l.s4 1934713408
      %v2882 = vunpack.c.0.s8 %v2881
      %v2883 = vlaneseq
      %v2884 = vshrl.u32 %v2883, 7
      %v2885 = vsub.s32 %v2882, %v2884
      %v2886 = vrot.slane %v2872, %v2885
      %v2887 = vcombine.low %v2831, %v2863
      %v2888 = vcombine.high %v2831, %v2863
      %v2889 = vcombine.low %v2838, %v2870
      %v2890 = vcombine.high %v2838, %v2870
      %v2891 = vcombine.low %v2847, %v2879
      %v2892 = vcombine.high %v2847, %v2879
      %v2893 = vcombine.low %v2854, %v2886
      %v2894 = vcombine.high %v2854, %v2886
      %v2895 = vcombine.low %v519, %v523
      %v2896 = vcombine.high %v519, %v523
      %v2898 = vunpack.c.l.s4 1983009808
      %v2899 = vunpack.c.0.s8 %v2898
      %v2900 = vlaneseq
      %v2901 = vshrl.u32 %v2900, 7
      %v2902 = vsub.s32 %v2899, %v2901
      %v2903 = vrot.slane %v2895, %v2902
      %v2905 = vunpack.c.l.s4 1983009808
      %v2906 = vunpack.c.0.s8 %v2905
      %v2907 = vlaneseq
      %v2908 = vshrl.u32 %v2907, 7
      %v2909 = vsub.s32 %v2906, %v2908
      %v2910 = vrot.slane %v2896, %v2909
      %v2911 = vcombine.low %v521, %v525
      %v2912 = vcombine.high %v521, %v525
      %v2914 = vunpack.c.l.s4 1983009808
      %v2915 = vunpack.c.0.s8 %v2914
      %v2916 = vlaneseq
      %v2917 = vshrl.u32 %v2916, 7
      %v2918 = vsub.s32 %v2915, %v2917
      %v2919 = vrot.slane %v2911, %v2918
      %v2921 = vunpack.c.l.s4 1983009808
      %v2922 = vunpack.c.0.s8 %v2921
      %v2923 = vlaneseq
      %v2924 = vshrl.u32 %v2923, 7
      %v2925 = vsub.s32 %v2922, %v2924
      %v2926 = vrot.slane %v2912, %v2925
      %v2927 = vcombine.low %v527, %v531
      %v2928 = vcombine.high %v527, %v531
      %v2930 = vunpack.c.l.s4 1983009808
      %v2931 = vunpack.c.0.s8 %v2930
      %v2932 = vlaneseq
      %v2933 = vshrl.u32 %v2932, 7
      %v2934 = vsub.s32 %v2931, %v2933
      %v2935 = vrot.slane %v2927, %v2934
      %v2937 = vunpack.c.l.s4 1983009808
      %v2938 = vunpack.c.0.s8 %v2937
      %v2939 = vlaneseq
      %v2940 = vshrl.u32 %v2939, 7
      %v2941 = vsub.s32 %v2938, %v2940
      %v2942 = vrot.slane %v2928, %v2941
      %v2943 = vcombine.low %v529, %v533
      %v2944 = vcombine.high %v529, %v533
      %v2946 = vunpack.c.l.s4 1983009808
      %v2947 = vunpack.c.0.s8 %v2946
      %v2948 = vlaneseq
      %v2949 = vshrl.u32 %v2948, 7
      %v2950 = vsub.s32 %v2947, %v2949
      %v2951 = vrot.slane %v2943, %v2950
      %v2953 = vunpack.c.l.s4 1983009808
      %v2954 = vunpack.c.0.s8 %v2953
      %v2955 = vlaneseq
      %v2956 = vshrl.u32 %v2955, 7
      %v2957 = vsub.s32 %v2954, %v2956
      %v2958 = vrot.slane %v2944, %v2957
      %v2959 = vcombine.low %v2903, %v2919
      %v2960 = vcombine.high %v2903, %v2919
      %v2962 = vunpack.c.l.s4 1934713408
      %v2963 = vunpack.c.0.s8 %v2962
      %v2964 = vlaneseq
      %v2965 = vshrl.u32 %v2964, 7
      %v2966 = vsub.s32 %v2963, %v2965
      %v2967 = vrot.slane %v2959, %v2966
      %v2969 = vunpack.c.l.s4 1934713408
      %v2970 = vunpack.c.0.s8 %v2969
      %v2971 = vlaneseq
      %v2972 = vshrl.u32 %v2971, 7
      %v2973 = vsub.s32 %v2970, %v2972
      %v2974 = vrot.slane %v2960, %v2973
      %v2975 = vcombine.low %v2910, %v2926
      %v2976 = vcombine.high %v2910, %v2926
      %v2978 = vunpack.c.l.s4 1934713408
      %v2979 = vunpack.c.0.s8 %v2978
      %v2980 = vlaneseq
      %v2981 = vshrl.u32 %v2980, 7
      %v2982 = vsub.s32 %v2979, %v2981
      %v2983 = vrot.slane %v2975, %v2982
      %v2985 = vunpack.c.l.s4 1934713408
      %v2986 = vunpack.c.0.s8 %v2985
      %v2987 = vlaneseq
      %v2988 = vshrl.u32 %v2987, 7
      %v2989 = vsub.s32 %v2986, %v2988
      %v2990 = vrot.slane %v2976, %v2989
      %v2991 = vcombine.low %v2935, %v2951
      %v2992 = vcombine.high %v2935, %v2951
      %v2994 = vunpack.c.l.s4 1934713408
      %v2995 = vunpack.c.0.s8 %v2994
      %v2996 = vlaneseq
      %v2997 = vshrl.u32 %v2996, 7
      %v2998 = vsub.s32 %v2995, %v2997
      %v2999 = vrot.slane %v2991, %v2998
      %v3001 = vunpack.c.l.s4 1934713408
      %v3002 = vunpack.c.0.s8 %v3001
      %v3003 = vlaneseq
      %v3004 = vshrl.u32 %v3003, 7
      %v3005 = vsub.s32 %v3002, %v3004
      %v3006 = vrot.slane %v2992, %v3005
      %v3007 = vcombine.low %v2942, %v2958
      %v3008 = vcombine.high %v2942, %v2958
      %v3010 = vunpack.c.l.s4 1934713408
      %v3011 = vunpack.c.0.s8 %v3010
      %v3012 = vlaneseq
      %v3013 = vshrl.u32 %v3012, 7
      %v3014 = vsub.s32 %v3011, %v3013
      %v3015 = vrot.slane %v3007, %v3014
      %v3017 = vunpack.c.l.s4 1934713408
      %v3018 = vunpack.c.0.s8 %v3017
      %v3019 = vlaneseq
      %v3020 = vshrl.u32 %v3019, 7
      %v3021 = vsub.s32 %v3018, %v3020
      %v3022 = vrot.slane %v3008, %v3021
      %v3023 = vcombine.low %v2967, %v2999
      %v3024 = vcombine.high %v2967, %v2999
      %v3025 = vcombine.low %v2974, %v3006
      %v3026 = vcombine.high %v2974, %v3006
      %v3027 = vcombine.low %v2983, %v3015
      %v3028 = vcombine.high %v2983, %v3015
      %v3029 = vcombine.low %v2990, %v3022
      %v3030 = vcombine.high %v2990, %v3022
      %v3031 = vcombine.low %v504, %v508
      %v3032 = vcombine.high %v504, %v508
      %v3034 = vunpack.c.l.s4 1983009808
      %v3035 = vunpack.c.0.s8 %v3034
      %v3036 = vlaneseq
      %v3037 = vshrl.u32 %v3036, 7
      %v3038 = vsub.s32 %v3035, %v3037
      %v3039 = vrot.slane %v3031, %v3038
      %v3041 = vunpack.c.l.s4 1983009808
      %v3042 = vunpack.c.0.s8 %v3041
      %v3043 = vlaneseq
      %v3044 = vshrl.u32 %v3043, 7
      %v3045 = vsub.s32 %v3042, %v3044
      %v3046 = vrot.slane %v3032, %v3045
      %v3047 = vcombine.low %v506, %v510
      %v3048 = vcombine.high %v506, %v510
      %v3050 = vunpack.c.l.s4 1983009808
      %v3051 = vunpack.c.0.s8 %v3050
      %v3052 = vlaneseq
      %v3053 = vshrl.u32 %v3052, 7
      %v3054 = vsub.s32 %v3051, %v3053
      %v3055 = vrot.slane %v3047, %v3054
      %v3057 = vunpack.c.l.s4 1983009808
      %v3058 = vunpack.c.0.s8 %v3057
      %v3059 = vlaneseq
      %v3060 = vshrl.u32 %v3059, 7
      %v3061 = vsub.s32 %v3058, %v3060
      %v3062 = vrot.slane %v3048, %v3061
      %v3063 = vcombine.low %v512, %v516
      %v3064 = vcombine.high %v512, %v516
      %v3066 = vunpack.c.l.s4 1983009808
      %v3067 = vunpack.c.0.s8 %v3066
      %v3068 = vlaneseq
      %v3069 = vshrl.u32 %v3068, 7
      %v3070 = vsub.s32 %v3067, %v3069
      %v3071 = vrot.slane %v3063, %v3070
      %v3073 = vunpack.c.l.s4 1983009808
      %v3074 = vunpack.c.0.s8 %v3073
      %v3075 = vlaneseq
      %v3076 = vshrl.u32 %v3075, 7
      %v3077 = vsub.s32 %v3074, %v3076
      %v3078 = vrot.slane %v3064, %v3077
      %v3079 = vcombine.low %v514, %v518
      %v3080 = vcombine.high %v514, %v518
      %v3082 = vunpack.c.l.s4 1983009808
      %v3083 = vunpack.c.0.s8 %v3082
      %v3084 = vlaneseq
      %v3085 = vshrl.u32 %v3084, 7
      %v3086 = vsub.s32 %v3083, %v3085
      %v3087 = vrot.slane %v3079, %v3086
      %v3089 = vunpack.c.l.s4 1983009808
      %v3090 = vunpack.c.0.s8 %v3089
      %v3091 = vlaneseq
      %v3092 = vshrl.u32 %v3091, 7
      %v3093 = vsub.s32 %v3090, %v3092
      %v3094 = vrot.slane %v3080, %v3093
      %v3095 = vcombine.low %v3039, %v3055
      %v3096 = vcombine.high %v3039, %v3055
      %v3098 = vunpack.c.l.s4 1934713408
      %v3099 = vunpack.c.0.s8 %v3098
      %v3100 = vlaneseq
      %v3101 = vshrl.u32 %v3100, 7
      %v3102 = vsub.s32 %v3099, %v3101
      %v3103 = vrot.slane %v3095, %v3102
      %v3105 = vunpack.c.l.s4 1934713408
      %v3106 = vunpack.c.0.s8 %v3105
      %v3107 = vlaneseq
      %v3108 = vshrl.u32 %v3107, 7
      %v3109 = vsub.s32 %v3106, %v3108
      %v3110 = vrot.slane %v3096, %v3109
      %v3111 = vcombine.low %v3046, %v3062
      %v3112 = vcombine.high %v3046, %v3062
      %v3114 = vunpack.c.l.s4 1934713408
      %v3115 = vunpack.c.0.s8 %v3114
      %v3116 = vlaneseq
      %v3117 = vshrl.u32 %v3116, 7
      %v3118 = vsub.s32 %v3115, %v3117
      %v3119 = vrot.slane %v3111, %v3118
      %v3121 = vunpack.c.l.s4 1934713408
      %v3122 = vunpack.c.0.s8 %v3121
      %v3123 = vlaneseq
      %v3124 = vshrl.u32 %v3123, 7
      %v3125 = vsub.s32 %v3122, %v3124
      %v3126 = vrot.slane %v3112, %v3125
      %v3127 = vcombine.low %v3071, %v3087
      %v3128 = vcombine.high %v3071, %v3087
      %v3130 = vunpack.c.l.s4 1934713408
      %v3131 = vunpack.c.0.s8 %v3130
      %v3132 = vlaneseq
      %v3133 = vshrl.u32 %v3132, 7
      %v3134 = vsub.s32 %v3131, %v3133
      %v3135 = vrot.slane %v3127, %v3134
      %v3137 = vunpack.c.l.s4 1934713408
      %v3138 = vunpack.c.0.s8 %v3137
      %v3139 = vlaneseq
      %v3140 = vshrl.u32 %v3139, 7
      %v3141 = vsub.s32 %v3138, %v3140
      %v3142 = vrot.slane %v3128, %v3141
      %v3143 = vcombine.low %v3078, %v3094
      %v3144 = vcombine.high %v3078, %v3094
      %v3146 = vunpack.c.l.s4 1934713408
      %v3147 = vunpack.c.0.s8 %v3146
      %v3148 = vlaneseq
      %v3149 = vshrl.u32 %v3148, 7
      %v3150 = vsub.s32 %v3147, %v3149
      %v3151 = vrot.slane %v3143, %v3150
      %v3153 = vunpack.c.l.s4 1934713408
      %v3154 = vunpack.c.0.s8 %v3153
      %v3155 = vlaneseq
      %v3156 = vshrl.u32 %v3155, 7
      %v3157 = vsub.s32 %v3154, %v3156
      %v3158 = vrot.slane %v3144, %v3157
      %v3159 = vcombine.low %v3103, %v3135
      %v3160 = vcombine.high %v3103, %v3135
      %v3161 = vcombine.low %v3110, %v3142
      %v3162 = vcombine.high %v3110, %v3142
      %v3163 = vcombine.low %v3119, %v3151
      %v3164 = vcombine.high %v3119, %v3151
      %v3165 = vcombine.low %v3126, %v3158
      %v3166 = vcombine.high %v3126, %v3158
      %v3167 = vcombine.low %v520, %v524
      %v3168 = vcombine.high %v520, %v524
      %v3170 = vunpack.c.l.s4 1983009808
      %v3171 = vunpack.c.0.s8 %v3170
      %v3172 = vlaneseq
      %v3173 = vshrl.u32 %v3172, 7
      %v3174 = vsub.s32 %v3171, %v3173
      %v3175 = vrot.slane %v3167, %v3174
      %v3177 = vunpack.c.l.s4 1983009808
      %v3178 = vunpack.c.0.s8 %v3177
      %v3179 = vlaneseq
      %v3180 = vshrl.u32 %v3179, 7
      %v3181 = vsub.s32 %v3178, %v3180
      %v3182 = vrot.slane %v3168, %v3181
      %v3183 = vcombine.low %v522, %v526
      %v3184 = vcombine.high %v522, %v526
      %v3186 = vunpack.c.l.s4 1983009808
      %v3187 = vunpack.c.0.s8 %v3186
      %v3188 = vlaneseq
      %v3189 = vshrl.u32 %v3188, 7
      %v3190 = vsub.s32 %v3187, %v3189
      %v3191 = vrot.slane %v3183, %v3190
      %v3193 = vunpack.c.l.s4 1983009808
      %v3194 = vunpack.c.0.s8 %v3193
      %v3195 = vlaneseq
      %v3196 = vshrl.u32 %v3195, 7
      %v3197 = vsub.s32 %v3194, %v3196
      %v3198 = vrot.slane %v3184, %v3197
      %v3199 = vcombine.low %v528, %v532
      %v3200 = vcombine.high %v528, %v532
      %v3202 = vunpack.c.l.s4 1983009808
      %v3203 = vunpack.c.0.s8 %v3202
      %v3204 = vlaneseq
      %v3205 = vshrl.u32 %v3204, 7
      %v3206 = vsub.s32 %v3203, %v3205
      %v3207 = vrot.slane %v3199, %v3206
      %v3209 = vunpack.c.l.s4 1983009808
      %v3210 = vunpack.c.0.s8 %v3209
      %v3211 = vlaneseq
      %v3212 = vshrl.u32 %v3211, 7
      %v3213 = vsub.s32 %v3210, %v3212
      %v3214 = vrot.slane %v3200, %v3213
      %v3215 = vcombine.low %v530, %v534
      %v3216 = vcombine.high %v530, %v534
      %v3218 = vunpack.c.l.s4 1983009808
      %v3219 = vunpack.c.0.s8 %v3218
      %v3220 = vlaneseq
      %v3221 = vshrl.u32 %v3220, 7
      %v3222 = vsub.s32 %v3219, %v3221
      %v3223 = vrot.slane %v3215, %v3222
      %v3225 = vunpack.c.l.s4 1983009808
      %v3226 = vunpack.c.0.s8 %v3225
      %v3227 = vlaneseq
      %v3228 = vshrl.u32 %v3227, 7
      %v3229 = vsub.s32 %v3226, %v3228
      %v3230 = vrot.slane %v3216, %v3229
      %v3231 = vcombine.low %v3175, %v3191
      %v3232 = vcombine.high %v3175, %v3191
      %v3234 = vunpack.c.l.s4 1934713408
      %v3235 = vunpack.c.0.s8 %v3234
      %v3236 = vlaneseq
      %v3237 = vshrl.u32 %v3236, 7
      %v3238 = vsub.s32 %v3235, %v3237
      %v3239 = vrot.slane %v3231, %v3238
      %v3241 = vunpack.c.l.s4 1934713408
      %v3242 = vunpack.c.0.s8 %v3241
      %v3243 = vlaneseq
      %v3244 = vshrl.u32 %v3243, 7
      %v3245 = vsub.s32 %v3242, %v3244
      %v3246 = vrot.slane %v3232, %v3245
      %v3247 = vcombine.low %v3182, %v3198
      %v3248 = vcombine.high %v3182, %v3198
      %v3250 = vunpack.c.l.s4 1934713408
      %v3251 = vunpack.c.0.s8 %v3250
      %v3252 = vlaneseq
      %v3253 = vshrl.u32 %v3252, 7
      %v3254 = vsub.s32 %v3251, %v3253
      %v3255 = vrot.slane %v3247, %v3254
      %v3257 = vunpack.c.l.s4 1934713408
      %v3258 = vunpack.c.0.s8 %v3257
      %v3259 = vlaneseq
      %v3260 = vshrl.u32 %v3259, 7
      %v3261 = vsub.s32 %v3258, %v3260
      %v3262 = vrot.slane %v3248, %v3261
      %v3263 = vcombine.low %v3207, %v3223
      %v3264 = vcombine.high %v3207, %v3223
      %v3266 = vunpack.c.l.s4 1934713408
      %v3267 = vunpack.c.0.s8 %v3266
      %v3268 = vlaneseq
      %v3269 = vshrl.u32 %v3268, 7
      %v3270 = vsub.s32 %v3267, %v3269
      %v3271 = vrot.slane %v3263, %v3270
      %v3273 = vunpack.c.l.s4 1934713408
      %v3274 = vunpack.c.0.s8 %v3273
      %v3275 = vlaneseq
      %v3276 = vshrl.u32 %v3275, 7
      %v3277 = vsub.s32 %v3274, %v3276
      %v3278 = vrot.slane %v3264, %v3277
      %v3279 = vcombine.low %v3214, %v3230
      %v3280 = vcombine.high %v3214, %v3230
      %v3282 = vunpack.c.l.s4 1934713408
      %v3283 = vunpack.c.0.s8 %v3282
      %v3284 = vlaneseq
      %v3285 = vshrl.u32 %v3284, 7
      %v3286 = vsub.s32 %v3283, %v3285
      %v3287 = vrot.slane %v3279, %v3286
      %v3289 = vunpack.c.l.s4 1934713408
      %v3290 = vunpack.c.0.s8 %v3289
      %v3291 = vlaneseq
      %v3292 = vshrl.u32 %v3291, 7
      %v3293 = vsub.s32 %v3290, %v3292
      %v3294 = vrot.slane %v3280, %v3293
      %v3295 = vcombine.low %v3239, %v3271
      %v3296 = vcombine.high %v3239, %v3271
      %v3297 = vcombine.low %v3246, %v3278
      %v3298 = vcombine.high %v3246, %v3278
      %v3299 = vcombine.low %v3255, %v3287
      %v3300 = vcombine.high %v3255, %v3287
      %v3301 = vcombine.low %v3262, %v3294
      %v3302 = vcombine.high %v3262, %v3294
      %3305 = vrot.lane.b32.xlu0 %v2888, 16
      %v3306 = vpop.permute.xlu0 %3305
      %3307 = vrot.lane.b32.xlu0 %v3024, 16
      %v3308 = vpop.permute.xlu0 %3307
      %3313 = vrot.lane.b32.xlu0 %v2889, 32
      %v3314 = vpop.permute.xlu0 %3313
      %3315 = vrot.lane.b32.xlu0 %v3025, 32
      %v3316 = vpop.permute.xlu0 %3315
      %3321 = vrot.lane.b32.xlu0 %v2890, 48
      %v3322 = vpop.permute.xlu0 %3321
      %3323 = vrot.lane.b32.xlu0 %v3026, 48
      %v3324 = vpop.permute.xlu0 %3323
      %3329 = vrot.lane.b32.xlu0 %v2891, 64
      %v3330 = vpop.permute.xlu0 %3329
      %3331 = vrot.lane.b32.xlu0 %v3027, 64
      %v3332 = vpop.permute.xlu0 %3331
      %3337 = vrot.lane.b32.xlu0 %v2892, 80
      %v3338 = vpop.permute.xlu0 %3337
      %3339 = vrot.lane.b32.xlu0 %v3028, 80
      %v3340 = vpop.permute.xlu0 %3339
      %3345 = vrot.lane.b32.xlu0 %v2893, 96
      %v3346 = vpop.permute.xlu0 %3345
      %3347 = vrot.lane.b32.xlu0 %v3029, 96
      %v3348 = vpop.permute.xlu0 %3347
      %3353 = vrot.lane.b32.xlu0 %v2894, 112
      %v3354 = vpop.permute.xlu0 %3353
      %3355 = vrot.lane.b32.xlu0 %v3030, 112
      %v3356 = vpop.permute.xlu0 %3355
      %3361 = vrot.lane.b32.xlu0 %v3160, 16
      %v3362 = vpop.permute.xlu0 %3361
      %3363 = vrot.lane.b32.xlu0 %v3296, 16
      %v3364 = vpop.permute.xlu0 %3363
      %3369 = vrot.lane.b32.xlu0 %v3161, 32
      %v3370 = vpop.permute.xlu0 %3369
      %3371 = vrot.lane.b32.xlu0 %v3297, 32
      %v3372 = vpop.permute.xlu0 %3371
      %3377 = vrot.lane.b32.xlu0 %v3162, 48
      %v3378 = vpop.permute.xlu0 %3377
      %3379 = vrot.lane.b32.xlu0 %v3298, 48
      %v3380 = vpop.permute.xlu0 %3379
      %3385 = vrot.lane.b32.xlu0 %v3163, 64
      %v3386 = vpop.permute.xlu0 %3385
      %3387 = vrot.lane.b32.xlu0 %v3299, 64
      %v3388 = vpop.permute.xlu0 %3387
      %3393 = vrot.lane.b32.xlu0 %v3164, 80
      %v3394 = vpop.permute.xlu0 %3393
      %3395 = vrot.lane.b32.xlu0 %v3300, 80
      %v3396 = vpop.permute.xlu0 %3395
      %3401 = vrot.lane.b32.xlu0 %v3165, 96
      %v3402 = vpop.permute.xlu0 %3401
      %3403 = vrot.lane.b32.xlu0 %v3301, 96
      %v3404 = vpop.permute.xlu0 %3403
      %3409 = vrot.lane.b32.xlu0 %v3166, 112
      %v3410 = vpop.permute.xlu0 %3409
      %3411 = vrot.lane.b32.xlu0 %v3302, 112
      %v3412 = vpop.permute.xlu0 %3411
      %v3415 = vsel %vm860, %v2887, %v3306
      %v3416 = vsel %vm860, %v3023, %v3308
      %v3417 = vsel %vm2228, %v3415, %v3314
      %v3418 = vsel %vm2228, %v3416, %v3316
      %vm3419 = vcmask 392192
      %v3420 = vsel %vm3419, %v3417, %v3322
      %v3421 = vsel %vm3419, %v3418, %v3324
      %vm3422 = vcmask 523264
      %v3423 = vsel %vm3422, %v3420, %v3330
      %v3424 = vsel %vm3422, %v3421, %v3332
      %vm3425 = vcmask 654336
      %v3426 = vsel %vm3425, %v3423, %v3338
      %v3427 = vsel %vm3425, %v3424, %v3340
      %vm3428 = vcmask 785408
      %v3429 = vsel %vm3428, %v3426, %v3346
      %v3430 = vsel %vm3428, %v3427, %v3348
      %vm3431 = vcmask 916480
      %v3432 = vsel %vm3431, %v3429, %v3354
      %v3433 = vsel %vm3431, %v3430, %v3356
      %v3434 = vsel %vm860, %v3159, %v3362
      %v3435 = vsel %vm860, %v3295, %v3364
      %v3436 = vsel %vm2228, %v3434, %v3370
      %v3437 = vsel %vm2228, %v3435, %v3372
      %v3438 = vsel %vm3419, %v3436, %v3378
      %v3439 = vsel %vm3419, %v3437, %v3380
      %v3440 = vsel %vm3422, %v3438, %v3386
      %v3441 = vsel %vm3422, %v3439, %v3388
      %v3442 = vsel %vm3425, %v3440, %v3394
      %v3443 = vsel %vm3425, %v3441, %v3396
      %v3444 = vsel %vm3428, %v3442, %v3402
      %v3445 = vsel %vm3428, %v3443, %v3404
      %v3446 = vsel %vm3431, %v3444, %v3410
      %v3447 = vsel %vm3431, %v3445, %v3412
      %v3448 = vmul.f32 %v3432, %v2749
      %v3449 = vmul.f32 %v3446, %v2751
      %v3450 = vmul.f32 %v3433, %v2755
      %v3451 = vmul.f32 %v3447, %v2757
      %v3452 = vmax.f32 %v2749, 0.0
      %v3453 = vmax.f32 %v2751, 0.0
      %v3454 = vmax.f32 %v2755, 0.0
      %v3455 = vmax.f32 %v2757, 0.0
      %v3456 = vand.u32 2147483647, %v2749
      %v3457 = vand.u32 2147483647, %v2751
      %v3458 = vand.u32 2147483647, %v2755
      %v3459 = vand.u32 2147483647, %v2757
      %v3460 = vsub.f32 0.0, %v3456
      %v3461 = vsub.f32 0.0, %v3457
      %v3462 = vsub.f32 0.0, %v3458
      %v3463 = vsub.f32 0.0, %v3459
      %v3464 = vmul.f32 %v3460, 1.442695
      %v3465 = vpow.pop %v3464
      %v3466 = vmul.f32 %v3461, 1.442695
      %v3467 = vpow.pop %v3466
      %v3468 = vmul.f32 %v3462, 1.442695
      %v3469 = vpow.pop %v3468
      %v3470 = vmul.f32 %v3463, 1.442695
      %v3471 = vpow.pop %v3470
      %v3472 = vadd.f32 %v3465, 1.0
      %v3473 = vlog2.pop %v3472
      %v3474 = vmul.f32 %v3473, 0.6931472
      %v3475 = vmul.f32 -0.5, %v3465
      %v3476 = vadd.f32 %v3475, 1.0
      %v3477 = vmul.f32 %v3476, %v3465
      %v3478 = vand.u32 2147483647, %v3465
      %vm3479 = vcmp.lt.f32.partialorder %v3478, 0.0004427343
      %v3480 = vsel %vm3479, %v3477, %v3474
      %v3481 = vadd.f32 %v3467, 1.0
      %v3482 = vlog2.pop %v3481
      %v3483 = vmul.f32 %v3482, 0.6931472
      %v3484 = vmul.f32 -0.5, %v3467
      %v3485 = vadd.f32 %v3484, 1.0
      %v3486 = vmul.f32 %v3485, %v3467
      %v3487 = vand.u32 2147483647, %v3467
      %vm3488 = vcmp.lt.f32.partialorder %v3487, 0.0004427343
      %v3489 = vsel %vm3488, %v3486, %v3483
      %v3490 = vadd.f32 %v3469, 1.0
      %v3491 = vlog2.pop %v3490
      %v3492 = vmul.f32 %v3491, 0.6931472
      %v3493 = vmul.f32 -0.5, %v3469
      %v3494 = vadd.f32 %v3493, 1.0
      %v3495 = vmul.f32 %v3494, %v3469
      %v3496 = vand.u32 2147483647, %v3469
      %vm3497 = vcmp.lt.f32.partialorder %v3496, 0.0004427343
      %v3498 = vsel %vm3497, %v3495, %v3492
      %v3499 = vadd.f32 %v3471, 1.0
      %v3500 = vlog2.pop %v3499
      %v3501 = vmul.f32 %v3500, 0.6931472
      %v3502 = vmul.f32 -0.5, %v3471
      %v3503 = vadd.f32 %v3502, 1.0
      %v3504 = vmul.f32 %v3503, %v3471
      %v3505 = vand.u32 2147483647, %v3471
      %vm3506 = vcmp.lt.f32.partialorder %v3505, 0.0004427343
      %v3507 = vsel %vm3506, %v3504, %v3501
      %v3508 = vadd.f32 %v3452, %v3480
      %v3509 = vadd.f32 %v3453, %v3489
      %v3510 = vadd.f32 %v3454, %v3498
      %v3511 = vadd.f32 %v3455, %v3507
      %v3512 = vsub.f32 %v3448, %v3508
      %v3513 = vsub.f32 %v3449, %v3509
      %v3514 = vsub.f32 %v3450, %v3510
      %v3515 = vsub.f32 %v3451, %v3511
      %v3516 = vadd.f32 %v3512, %v3513
      %3517 = vadd.xlane.f32.xlu0 %v3516
      %v3518 = vpop.xlane.xlu0 %3517
      %v3519 = vadd.f32 %v3514, %v3515
      %3520 = vadd.xlane.f32.xlu0 %v3519
      %v3521 = vpop.xlane.xlu0 %3520
      %v3524 = vlaneseq
      %v3525 = vand.u32 %v3524, 127
      %v3526 = vlaneseq
      %v3527 = vshrl.u32 %v3526, 7
      %v3528 = vsub.s32 %v3525, %v3527
      %v3529 = vrot.slane %v3518, %v3528
      %v3530 = vadd.s32 %v3525, 4294967288
      %v3531 = vlaneseq
      %v3532 = vshrl.u32 %v3531, 7
      %v3533 = vsub.s32 %v3530, %v3532
      %v3534 = vrot.slane %v3521, %v3533
      %vm3535 = vcmask 130112
      %v3536 = vsel %vm3535, %v3534, %v3529
      %vm3538 = vcmask 122880
      %3539 = vst.msk [vmem:[%s467] sm:$0x1] %vm3538, %v3536
      %v3542 = vlaneseq
      %v3543 = vshrl.u32 %v3542, 7
      %v3544 = vsub.s32 %v3525, %v3543
      %v3545 = vrot.slane %v2561, %v3544
      %v3546 = vlaneseq
      %v3547 = vshrl.u32 %v3546, 7
      %v3548 = vsub.s32 %v3530, %v3547
      %v3549 = vrot.slane %v2564, %v3548
      %v3550 = vsel %vm3535, %v3549, %v3545
      %3552 = vst.msk [vmem:[%s470] sm:$0x1] %vm3538, %v3550
      %p3553 = scmp.lt.s32.totalorder %s24, 1
      %s3554 = scalar_select %p3553, %s24, 1
      %s3555 = scalar_lea.vmem %s11, %s3554
      %p3556 = scmp.lt.s32.totalorder %s24, 1
      %s3557 = scalar_select %p3556, %s24, 1
      %s3558 = scalar_lea.vmem %s12, %s3557
      // Predicated region
      $region65: #{naive_vae_neg_elbo.1} parent=63 // pred_check
        %p3559 = pneg %p288
      $region66: #{naive_vae_neg_elbo.1} parent=63 // pred_check_branch
        %3561 = sbr.rel (%p3559) target = $region68
      $region67: #{naive_vae_neg_elbo.1} parent=63 // pred_region
        _
      $region68: #{naive_vae_neg_elbo.1} parent=63 // pred_fallthru
        _
      // Predicated region
      $region69: #{naive_vae_neg_elbo.1} parent=63 // pred_check
        %p3562 = pneg %p314
      $region70: #{naive_vae_neg_elbo.1} parent=63 // pred_check_branch
        %3564 = sbr.rel (%p3562) target = $region72
      $region71: #{naive_vae_neg_elbo.1} parent=63 // pred_region
        _
      $region72: #{naive_vae_neg_elbo.1} parent=63 // pred_fallthru
        _
    $region64: #{naive_vae_neg_elbo.1} parent=5 // pred_fallthru
      _
    %p3565 = scmp.le.s32.totalorder 2, %s19
    // Predicated region
    $region73: #{naive_vae_neg_elbo.1} parent=5 // pred_check
      %p3566 = pneg %p3565
    $region74: #{naive_vae_neg_elbo.1} parent=5 // pred_check_branch
      %3568 = sbr.rel (%p3566) target = $region76
    $region75: #{naive_vae_neg_elbo.1} parent=5 // pred_region
      %s3569 = ssub.s32 %s19, 2
      // Predicated region
      $region77: #{naive_vae_neg_elbo.1} parent=75 // pred_check
        %p3570 = pneg %p294
      $region78: #{naive_vae_neg_elbo.1} parent=75 // pred_check_branch
        %3572 = sbr.rel (%p3570) target = $region80
      $region79: #{naive_vae_neg_elbo.1} parent=75 // pred_region
        %p3573 = scmp.lt.s32.totalorder %s25, 1
        %s3574 = scalar_select %p3573, %s25, 1
        %s3575 = scalar_lea.vmem %s11, %s3574
      $region80: #{naive_vae_neg_elbo.1} parent=75 // pred_fallthru
        _
      // Predicated region
      $region81: #{naive_vae_neg_elbo.1} parent=75 // pred_check
        %p3576 = pneg %p320
      $region82: #{naive_vae_neg_elbo.1} parent=75 // pred_check_branch
        %3578 = sbr.rel (%p3576) target = $region84
      $region83: #{naive_vae_neg_elbo.1} parent=75 // pred_region
        %p3579 = scmp.lt.s32.totalorder %s25, 1
        %s3580 = scalar_select %p3579, %s25, 1
        %s3581 = scalar_lea.vmem %s12, %s3580
      $region84: #{naive_vae_neg_elbo.1} parent=75 // pred_fallthru
        _
    $region76: #{naive_vae_neg_elbo.1} parent=5 // pred_fallthru
      _
  $region6: #{naive_vae_neg_elbo.1} parent=0 // loop_footer
    %s23 = sadd.s32 1, %s19
  $region7: #{naive_vae_neg_elbo.1} parent=0 // loop_footer_branch
    %18 = sbr.rel target = $region3
  $region8: #{naive_vae_neg_elbo.1} parent=0 // loop_exit
    _

</llo_original>
